<compile_context>
chip_gen: v6e
topology: v6e:2x2x1
jax: 0.10.0
libtpu: 0.0.40
codegen_flags: <defaults>
</compile_context>

<pallas_src>
import functools

import numpy as np
import jax
import jax.numpy as jnp
from jax import lax
from jax.experimental import pallas as pl
from jax.experimental.pallas import tpu as pltpu


# Tap enumeration shared by the kernel (weight layout) and the wrapper (masks).
_TAPS = tuple((dy, dx) for dy in (-1, 0, 1) for dx in (-1, 0, 1))


def _tree_sum(xs):
    xs = list(xs)
    while len(xs) > 1:
        nxt = [xs[i] + xs[i + 1] for i in range(0, len(xs) - 1, 2)]
        if len(xs) % 2:
            nxt.append(xs[-1])
        xs = nxt
    return xs[0]


def _dif_resblock_kernel(x_ref, m_ref, wp_ref, out_ref, *, leaky, C, W, L):
    """One NB-image chunk per grid step; batch is folded into the lane axis.

    x_ref:   (C, L)         activations, L = NB*H*W (lane dense, mult. of 128)
    m_ref:   (9, L)         per-tap border masks (1 inside, 0 at borders and
                            image seams) -- kills roll wrap-around + zero pad
    wp_ref:  (C, 18*C + 6)  cols [0,9C): conv1 w, [9C,18C): conv2 w
                            (col = conv_off + tap*C + cin, rows = cout);
                            cols 18C+{0..5} = s1, t1, b1, s2, t2, b2
    out_ref: (C, L)
    """
    p_base = 18 * C
    wp = wp_ref[...]                                  # (C, 18C+6), loaded once

    def bn_lrelu(a, col):
        s = wp[:, col:col + 1]                        # folded BN scale (C,1)
        t = wp[:, col + 1:col + 2]                    # folded BN shift (C,1)
        a = a * s + t
        return jnp.where(a >= 0, a, leaky * a)

    def conv3x3(a, w_off, b_col):
        # Hoist the shifted+masked taps: the pltpu.roll XLU pushes only depend
        # on `a`, so they can overlap the VPU FMA work below.
        taps = []
        for t, (dy, dx) in enumerate(_TAPS):
            off = dy * W + dx
            sh = a if off == 0 else pltpu.roll(a, shift=(-off) % L, axis=1)
            if (dy, dx) != (0, 0):
                sh = sh * m_ref[t:t + 1, :]           # zero-pad + seam guard
            taps.append(sh)
        # C independent accumulator chains (one per input channel) break the
        # single 36-FMA latency chain; pairwise-summed at the end.
        accs = []
        for i in range(C):
            acc = jnp.zeros((C, L), jnp.float32)
            for t in range(9):
                col = w_off + t * C + i
                w_col = wp[:, col:col + 1]            # (C,1): cout weights
                acc = acc + taps[t][i:i + 1, :] * w_col
            accs.append(acc)
        return _tree_sum(accs) + wp[:, b_col:b_col + 1]

    x = x_ref[...]
    a = bn_lrelu(x, p_base + 0)                       # BatchNorm1 + LeakyReLU
    y = conv3x3(a, 0, p_base + 2)                     # Conv1 (3x3, pad 1)
    # Dropout2d -> identity in inference mode.
    a = bn_lrelu(y, p_base + 3)                       # BatchNorm2 + LeakyReLU
    out_ref[...] = conv3x3(a, 9 * C, p_base + 5)      # Conv2 (3x3, pad 1)


def dif_residual_block(x_nchw, params, *, leaky=0.01, eps=1e-5):
    """Pallas forward of Dif_ResidualBlock. Input/output are NCHW float32."""
    N, C, H, W = x_nchw.shape
    HW = H * W
    assert HW % 128 == 0, "H*W must be a multiple of 128 for lane-dense tiling"

    # Images per grid step: amortize ~0.35us/step pipeline overhead while
    # keeping the lane axis a multiple of 128 and vreg pressure bounded.
    nb = max(1, min(N, max(1, 4096 // HW)))
    while N % nb:
        nb -= 1
    L = nb * HW
    steps = N // nb

    # (N,C,H,W) -> (C, N*HW): tiny host-side relayout so the kernel lane axis
    # is the (image, pixel) product -> every load/store is unmasked lane-dense.
    x = jnp.transpose(x_nchw.reshape(N, C, HW).astype(jnp.float32),
                      (1, 0, 2)).reshape(C, N * HW)

    # Folded BatchNorm affine (inference): s = g/sqrt(v+eps), t = b - m*s.
    def bn_affine(g, b, m, v):
        s = g / jnp.sqrt(v + eps)
        return s, b - m * s

    s1, t1 = bn_affine(params['bn1_gamma'], params['bn1_beta'],
                       params['bn1_mean'], params['bn1_var'])
    s2, t2 = bn_affine(params['bn2_gamma'], params['bn2_beta'],
                       params['bn2_mean'], params['bn2_var'])

    # PyTorch OIHW -> (C, 9*C): column = tap*C + cin, rows = cout (sublanes).
    def pack_w(w_oihw):
        return jnp.transpose(w_oihw, (2, 3, 1, 0)).reshape(9 * C, C).T

    wp = jnp.concatenate(
        [pack_w(params['conv1_w']), pack_w(params['conv2_w'])] +
        [v.reshape(C, 1) for v in (s1, t1, params['conv1_b'],
                                   s2, t2, params['conv2_b'])],
        axis=1).astype(jnp.float32)                       # (C, 18C + 6)

    # Static per-tap border masks, tiled per image of the NB-chunk so the
    # circular roll over the concatenated lane axis never leaks across images.
    hh = np.arange(H)[:, None]
    ww = np.arange(W)[None, :]
    m = np.stack([((hh + dy >= 0) & (hh + dy < H) &
                   (ww + dx >= 0) & (ww + dx < W)).reshape(HW)
                  for dy, dx in _TAPS]).astype(np.float32)  # (9, HW)
    masks = jnp.asarray(np.tile(m, (1, nb)))                # (9, L)

    kernel = functools.partial(_dif_resblock_kernel,
                               leaky=leaky, C=C, W=W, L=L)

    # Derived VMEM budget: double-buffered in/out blocks + operand slabs +
    # headroom for in-kernel temporaries (taps + accumulators); well inside
    # v7x's 64 MiB physical VMEM.
    def padded(r, c):
        return (-(-r // 8) * 8) * (-(-c // 128) * 128) * 4
    x_blk = padded(C, L)
    m_blk = padded(9, L)
    w_blk = padded(C, 18 * C + 6)
    vmem_limit = 4 * (x_blk + m_blk + w_blk) + 32 * x_blk
    vmem_limit = int(min(max(vmem_limit, 2 * 1024 * 1024), 64 * 1024 * 1024))

    flops = 2 * (2 * N * HW * C * C * 9) + 6 * N * HW * C    # convs + BN/LReLU
    bytes_accessed = (2 * N * C * HW                          # acts in/out
                      + steps * 9 * L                         # masks
                      + steps * C * (18 * C + 6)) * 4         # weights/BN/bias

    out = pl.pallas_call(
        kernel,
        out_shape=jax.ShapeDtypeStruct((C, N * HW), jnp.float32),
        grid=(steps,),
        in_specs=[
            pl.BlockSpec((C, L), lambda g: (0, g)),           # activations
            pl.BlockSpec((9, L), lambda g: (0, 0)),           # tap masks
            pl.BlockSpec((C, 18 * C + 6), lambda g: (0, 0)),  # weights+BN+bias
        ],
        out_specs=pl.BlockSpec((C, L), lambda g: (0, g)),
        compiler_params=pltpu.CompilerParams(
            dimension_semantics=("parallel",),
            vmem_limit_bytes=vmem_limit),
        cost_estimate=pl.CostEstimate(
            flops=flops, transcendentals=0, bytes_accessed=bytes_accessed),
    )(x, masks, wp)

    return jnp.transpose(out.reshape(C, N, HW), (1, 0, 2)).reshape(N, C, H, W)


def ref_forward(x, params, leaky=0.01, eps=1e-5):
    """Pure-JAX (XLA) reference in NCHW, mirroring the PyTorch module."""
    def bn(a, g, b, m, v):
        g, b = g[None, :, None, None], b[None, :, None, None]
        m, v = m[None, :, None, None], v[None, :, None, None]
        return (a - m) / jnp.sqrt(v + eps) * g + b

    def lrelu(a):
        return jnp.where(a >= 0, a, leaky * a)

    def conv(a, w, bias):
        y = lax.conv_general_dilated(a, w, window_strides=(1, 1),
                                     padding=((1, 1), (1, 1)),
                                     dimension_numbers=('NCHW', 'OIHW', 'NCHW'))
        return y + bias[None, :, None, None]

    a = lrelu(bn(x, params['bn1_gamma'], params['bn1_beta'],
                 params['bn1_mean'], params['bn1_var']))
    y = conv(a, params['conv1_w'], params['conv1_b'])
    a = lrelu(bn(y, params['bn2_gamma'], params['bn2_beta'],
                 params['bn2_mean'], params['bn2_var']))
    return conv(a, params['conv2_w'], params['conv2_b'])


def make_params(key, channels):
    ks = jax.random.split(key, 12)
    C = channels
    return {
        'bn1_gamma': jax.random.uniform(ks[0], (C,), jnp.float32, 0.5, 1.5),
        'bn1_beta':  0.1 * jax.random.normal(ks[1], (C,), jnp.float32),
        'bn1_mean':  0.1 * jax.random.normal(ks[2], (C,), jnp.float32),
        'bn1_var':   jax.random.uniform(ks[3], (C,), jnp.float32, 0.5, 1.5),
        'conv1_w':   0.1 * jax.random.normal(ks[4], (C, C, 3, 3), jnp.float32),
        'conv1_b':   0.05 * jax.random.normal(ks[5], (C,), jnp.float32),
        'bn2_gamma': jax.random.uniform(ks[6], (C,), jnp.float32, 0.5, 1.5),
        'bn2_beta':  0.1 * jax.random.normal(ks[7], (C,), jnp.float32),
        'bn2_mean':  0.1 * jax.random.normal(ks[8], (C,), jnp.float32),
        'bn2_var':   jax.random.uniform(ks[9], (C,), jnp.float32, 0.5, 1.5),
        'conv2_w':   0.1 * jax.random.normal(ks[10], (C, C, 3, 3), jnp.float32),
        'conv2_b':   0.05 * jax.random.normal(ks[11], (C,), jnp.float32),
    }


if __name__ == "__main__":
    N, C, H, W = 2, 4, 16, 16
    key = jax.random.PRNGKey(0)
    kx, kp = jax.random.split(key)
    x = jax.random.normal(kx, (N, C, H, W), jnp.float32)
    params = make_params(kp, C)

    out = dif_residual_block(x, params)
    out = jax.block_until_ready(out)

    ref = jax.block_until_ready(ref_forward(x, params))
    assert out.shape == (N, C, H, W)
    assert jnp.allclose(out, ref, atol=1e-4, rtol=1e-4), (
        f"max abs err {jnp.max(jnp.abs(out - ref))}")
    print("KERNEL_OK")
</pallas_src>

<mosaic_0001>
module attributes {stable_mosaic.version = 11 : i64} {
  func.func @_dif_resblock_kernel(%arg0: i32, %arg1: memref<4x512xf32, #tpu.memory_space<vmem>>, %arg2: memref<9x512xf32, #tpu.memory_space<vmem>>, %arg3: memref<4x78xf32, #tpu.memory_space<vmem>>, %arg4: memref<4x512xf32, #tpu.memory_space<vmem>>) attributes {dimension_semantics = [#tpu.dimension_semantics<parallel>], iteration_bounds = array<i64: 1>, scalar_prefetch = 0 : i64, scratch_operands = 0 : i64, tpu.core_type = #tpu.core_type<tc>, window_params = [{transform_indices = @transform_0, window_bounds = array<i64: 4, 512>}, {pipeline_mode = #tpu.pipeline_mode<synchronous>, transform_indices = @transform_1, window_bounds = array<i64: 9, 512>}, {pipeline_mode = #tpu.pipeline_mode<synchronous>, transform_indices = @transform_2, window_bounds = array<i64: 4, 78>}, {transform_indices = @transform_3, window_bounds = array<i64: 4, 512>}]} {
    %c0 = arith.constant 0 : index
    %c0_0 = arith.constant 0 : index
    %0 = vector.load %arg3[%c0, %c0_0] : memref<4x78xf32, #tpu.memory_space<vmem>>, vector<4x78xf32>
    %c0_1 = arith.constant 0 : index
    %c0_2 = arith.constant 0 : index
    %1 = vector.load %arg1[%c0_1, %c0_2] : memref<4x512xf32, #tpu.memory_space<vmem>>, vector<4x512xf32>
    %2 = vector.extract_strided_slice %0 {offsets = [0, 72], sizes = [4, 1], strides = [1, 1]} : vector<4x78xf32> to vector<4x1xf32>
    %3 = vector.extract_strided_slice %0 {offsets = [0, 73], sizes = [4, 1], strides = [1, 1]} : vector<4x78xf32> to vector<4x1xf32>
    %4 = vector.broadcast %2 : vector<4x1xf32> to vector<4x512xf32>
    %5 = arith.mulf %1, %4 : vector<4x512xf32>
    %6 = vector.broadcast %3 : vector<4x1xf32> to vector<4x512xf32>
    %7 = arith.addf %5, %6 : vector<4x512xf32>
    %cst = arith.constant 0.000000e+00 : f32
    %8 = vector.broadcast %cst : f32 to vector<4x512xf32>
    %9 = arith.cmpf oge, %7, %8 : vector<4x512xf32>
    %cst_3 = arith.constant 0.00999999977 : f32
    %10 = vector.broadcast %cst_3 : f32 to vector<4x512xf32>
    %11 = arith.mulf %10, %7 : vector<4x512xf32>
    %12 = arith.select %9, %7, %11 : vector<4x512xi1>, vector<4x512xf32>
    %c17_i32 = arith.constant 17 : i32
    %13 = tpu.dynamic_rotate %12 by %c17_i32 dim 1 : vector<4x512xf32>, i32 -> vector<4x512xf32>
    %c0_4 = arith.constant 0 : index
    %c0_5 = arith.constant 0 : index
    %14 = vector.load %arg2[%c0_4, %c0_5] : memref<9x512xf32, #tpu.memory_space<vmem>>, vector<1x512xf32>
    %15 = vector.broadcast %14 : vector<1x512xf32> to vector<4x512xf32>
    %16 = arith.mulf %13, %15 : vector<4x512xf32>
    %c16_i32 = arith.constant 16 : i32
    %17 = tpu.dynamic_rotate %12 by %c16_i32 dim 1 : vector<4x512xf32>, i32 -> vector<4x512xf32>
    %c1 = arith.constant 1 : index
    %c0_6 = arith.constant 0 : index
    %18 = vector.load %arg2[%c1, %c0_6] : memref<9x512xf32, #tpu.memory_space<vmem>>, vector<1x512xf32>
    %19 = vector.broadcast %18 : vector<1x512xf32> to vector<4x512xf32>
    %20 = arith.mulf %17, %19 : vector<4x512xf32>
    %c15_i32 = arith.constant 15 : i32
    %21 = tpu.dynamic_rotate %12 by %c15_i32 dim 1 : vector<4x512xf32>, i32 -> vector<4x512xf32>
    %c2 = arith.constant 2 : index
    %c0_7 = arith.constant 0 : index
    %22 = vector.load %arg2[%c2, %c0_7] : memref<9x512xf32, #tpu.memory_space<vmem>>, vector<1x512xf32>
    %23 = vector.broadcast %22 : vector<1x512xf32> to vector<4x512xf32>
    %24 = arith.mulf %21, %23 : vector<4x512xf32>
    %c1_i32 = arith.constant 1 : i32
    %25 = tpu.dynamic_rotate %12 by %c1_i32 dim 1 : vector<4x512xf32>, i32 -> vector<4x512xf32>
    %c3 = arith.constant 3 : index
    %c0_8 = arith.constant 0 : index
    %26 = vector.load %arg2[%c3, %c0_8] : memref<9x512xf32, #tpu.memory_space<vmem>>, vector<1x512xf32>
    %27 = vector.broadcast %26 : vector<1x512xf32> to vector<4x512xf32>
    %28 = arith.mulf %25, %27 : vector<4x512xf32>
    %c511_i32 = arith.constant 511 : i32
    %29 = tpu.dynamic_rotate %12 by %c511_i32 dim 1 : vector<4x512xf32>, i32 -> vector<4x512xf32>
    %c5 = arith.constant 5 : index
    %c0_9 = arith.constant 0 : index
    %30 = vector.load %arg2[%c5, %c0_9] : memref<9x512xf32, #tpu.memory_space<vmem>>, vector<1x512xf32>
    %31 = vector.broadcast %30 : vector<1x512xf32> to vector<4x512xf32>
    %32 = arith.mulf %29, %31 : vector<4x512xf32>
    %c497_i32 = arith.constant 497 : i32
    %33 = tpu.dynamic_rotate %12 by %c497_i32 dim 1 : vector<4x512xf32>, i32 -> vector<4x512xf32>
    %c6 = arith.constant 6 : index
    %c0_10 = arith.constant 0 : index
    %34 = vector.load %arg2[%c6, %c0_10] : memref<9x512xf32, #tpu.memory_space<vmem>>, vector<1x512xf32>
    %35 = vector.broadcast %34 : vector<1x512xf32> to vector<4x512xf32>
    %36 = arith.mulf %33, %35 : vector<4x512xf32>
    %c496_i32 = arith.constant 496 : i32
    %37 = tpu.dynamic_rotate %12 by %c496_i32 dim 1 : vector<4x512xf32>, i32 -> vector<4x512xf32>
    %c7 = arith.constant 7 : index
    %c0_11 = arith.constant 0 : index
    %38 = vector.load %arg2[%c7, %c0_11] : memref<9x512xf32, #tpu.memory_space<vmem>>, vector<1x512xf32>
    %39 = vector.broadcast %38 : vector<1x512xf32> to vector<4x512xf32>
    %40 = arith.mulf %37, %39 : vector<4x512xf32>
    %c495_i32 = arith.constant 495 : i32
    %41 = tpu.dynamic_rotate %12 by %c495_i32 dim 1 : vector<4x512xf32>, i32 -> vector<4x512xf32>
    %c8 = arith.constant 8 : index
    %c0_12 = arith.constant 0 : index
    %42 = vector.load %arg2[%c8, %c0_12] : memref<9x512xf32, #tpu.memory_space<vmem>>, vector<1x512xf32>
    %43 = vector.broadcast %42 : vector<1x512xf32> to vector<4x512xf32>
    %44 = arith.mulf %41, %43 : vector<4x512xf32>
    %cst_13 = arith.constant 0.000000e+00 : f32
    %45 = vector.broadcast %cst_13 : f32 to vector<4x512xf32>
    %46 = vector.extract_strided_slice %0 {offsets = [0, 0], sizes = [4, 1], strides = [1, 1]} : vector<4x78xf32> to vector<4x1xf32>
    %47 = vector.extract_strided_slice %16 {offsets = [0, 0], sizes = [1, 512], strides = [1, 1]} : vector<4x512xf32> to vector<1x512xf32>
    %48 = vector.broadcast %47 : vector<1x512xf32> to vector<4x512xf32>
    %49 = vector.broadcast %46 : vector<4x1xf32> to vector<4x512xf32>
    %50 = arith.mulf %48, %49 : vector<4x512xf32>
    %51 = arith.addf %45, %50 : vector<4x512xf32>
    %52 = vector.extract_strided_slice %0 {offsets = [0, 4], sizes = [4, 1], strides = [1, 1]} : vector<4x78xf32> to vector<4x1xf32>
    %53 = vector.extract_strided_slice %20 {offsets = [0, 0], sizes = [1, 512], strides = [1, 1]} : vector<4x512xf32> to vector<1x512xf32>
    %54 = vector.broadcast %53 : vector<1x512xf32> to vector<4x512xf32>
    %55 = vector.broadcast %52 : vector<4x1xf32> to vector<4x512xf32>
    %56 = arith.mulf %54, %55 : vector<4x512xf32>
    %57 = arith.addf %51, %56 : vector<4x512xf32>
    %58 = vector.extract_strided_slice %0 {offsets = [0, 8], sizes = [4, 1], strides = [1, 1]} : vector<4x78xf32> to vector<4x1xf32>
    %59 = vector.extract_strided_slice %24 {offsets = [0, 0], sizes = [1, 512], strides = [1, 1]} : vector<4x512xf32> to vector<1x512xf32>
    %60 = vector.broadcast %59 : vector<1x512xf32> to vector<4x512xf32>
    %61 = vector.broadcast %58 : vector<4x1xf32> to vector<4x512xf32>
    %62 = arith.mulf %60, %61 : vector<4x512xf32>
    %63 = arith.addf %57, %62 : vector<4x512xf32>
    %64 = vector.extract_strided_slice %0 {offsets = [0, 12], sizes = [4, 1], strides = [1, 1]} : vector<4x78xf32> to vector<4x1xf32>
    %65 = vector.extract_strided_slice %28 {offsets = [0, 0], sizes = [1, 512], strides = [1, 1]} : vector<4x512xf32> to vector<1x512xf32>
    %66 = vector.broadcast %65 : vector<1x512xf32> to vector<4x512xf32>
    %67 = vector.broadcast %64 : vector<4x1xf32> to vector<4x512xf32>
    %68 = arith.mulf %66, %67 : vector<4x512xf32>
    %69 = arith.addf %63, %68 : vector<4x512xf32>
    %70 = vector.extract_strided_slice %0 {offsets = [0, 16], sizes = [4, 1], strides = [1, 1]} : vector<4x78xf32> to vector<4x1xf32>
    %71 = vector.extract_strided_slice %12 {offsets = [0, 0], sizes = [1, 512], strides = [1, 1]} : vector<4x512xf32> to vector<1x512xf32>
    %72 = vector.broadcast %71 : vector<1x512xf32> to vector<4x512xf32>
    %73 = vector.broadcast %70 : vector<4x1xf32> to vector<4x512xf32>
    %74 = arith.mulf %72, %73 : vector<4x512xf32>
    %75 = arith.addf %69, %74 : vector<4x512xf32>
    %76 = vector.extract_strided_slice %0 {offsets = [0, 20], sizes = [4, 1], strides = [1, 1]} : vector<4x78xf32> to vector<4x1xf32>
    %77 = vector.extract_strided_slice %32 {offsets = [0, 0], sizes = [1, 512], strides = [1, 1]} : vector<4x512xf32> to vector<1x512xf32>
    %78 = vector.broadcast %77 : vector<1x512xf32> to vector<4x512xf32>
    %79 = vector.broadcast %76 : vector<4x1xf32> to vector<4x512xf32>
    %80 = arith.mulf %78, %79 : vector<4x512xf32>
    %81 = arith.addf %75, %80 : vector<4x512xf32>
    %82 = vector.extract_strided_slice %0 {offsets = [0, 24], sizes = [4, 1], strides = [1, 1]} : vector<4x78xf32> to vector<4x1xf32>
    %83 = vector.extract_strided_slice %36 {offsets = [0, 0], sizes = [1, 512], strides = [1, 1]} : vector<4x512xf32> to vector<1x512xf32>
    %84 = vector.broadcast %83 : vector<1x512xf32> to vector<4x512xf32>
    %85 = vector.broadcast %82 : vector<4x1xf32> to vector<4x512xf32>
    %86 = arith.mulf %84, %85 : vector<4x512xf32>
    %87 = arith.addf %81, %86 : vector<4x512xf32>
    %88 = vector.extract_strided_slice %0 {offsets = [0, 28], sizes = [4, 1], strides = [1, 1]} : vector<4x78xf32> to vector<4x1xf32>
    %89 = vector.extract_strided_slice %40 {offsets = [0, 0], sizes = [1, 512], strides = [1, 1]} : vector<4x512xf32> to vector<1x512xf32>
    %90 = vector.broadcast %89 : vector<1x512xf32> to vector<4x512xf32>
    %91 = vector.broadcast %88 : vector<4x1xf32> to vector<4x512xf32>
    %92 = arith.mulf %90, %91 : vector<4x512xf32>
    %93 = arith.addf %87, %92 : vector<4x512xf32>
    %94 = vector.extract_strided_slice %0 {offsets = [0, 32], sizes = [4, 1], strides = [1, 1]} : vector<4x78xf32> to vector<4x1xf32>
    %95 = vector.extract_strided_slice %44 {offsets = [0, 0], sizes = [1, 512], strides = [1, 1]} : vector<4x512xf32> to vector<1x512xf32>
    %96 = vector.broadcast %95 : vector<1x512xf32> to vector<4x512xf32>
    %97 = vector.broadcast %94 : vector<4x1xf32> to vector<4x512xf32>
    %98 = arith.mulf %96, %97 : vector<4x512xf32>
    %99 = arith.addf %93, %98 : vector<4x512xf32>
    %cst_14 = arith.constant 0.000000e+00 : f32
    %100 = vector.broadcast %cst_14 : f32 to vector<4x512xf32>
    %101 = vector.extract_strided_slice %0 {offsets = [0, 1], sizes = [4, 1], strides = [1, 1]} : vector<4x78xf32> to vector<4x1xf32>
    %102 = vector.extract_strided_slice %16 {offsets = [1, 0], sizes = [1, 512], strides = [1, 1]} : vector<4x512xf32> to vector<1x512xf32>
    %103 = vector.broadcast %102 : vector<1x512xf32> to vector<4x512xf32>
    %104 = vector.broadcast %101 : vector<4x1xf32> to vector<4x512xf32>
    %105 = arith.mulf %103, %104 : vector<4x512xf32>
    %106 = arith.addf %100, %105 : vector<4x512xf32>
    %107 = vector.extract_strided_slice %0 {offsets = [0, 5], sizes = [4, 1], strides = [1, 1]} : vector<4x78xf32> to vector<4x1xf32>
    %108 = vector.extract_strided_slice %20 {offsets = [1, 0], sizes = [1, 512], strides = [1, 1]} : vector<4x512xf32> to vector<1x512xf32>
    %109 = vector.broadcast %108 : vector<1x512xf32> to vector<4x512xf32>
    %110 = vector.broadcast %107 : vector<4x1xf32> to vector<4x512xf32>
    %111 = arith.mulf %109, %110 : vector<4x512xf32>
    %112 = arith.addf %106, %111 : vector<4x512xf32>
    %113 = vector.extract_strided_slice %0 {offsets = [0, 9], sizes = [4, 1], strides = [1, 1]} : vector<4x78xf32> to vector<4x1xf32>
    %114 = vector.extract_strided_slice %24 {offsets = [1, 0], sizes = [1, 512], strides = [1, 1]} : vector<4x512xf32> to vector<1x512xf32>
    %115 = vector.broadcast %114 : vector<1x512xf32> to vector<4x512xf32>
    %116 = vector.broadcast %113 : vector<4x1xf32> to vector<4x512xf32>
    %117 = arith.mulf %115, %116 : vector<4x512xf32>
    %118 = arith.addf %112, %117 : vector<4x512xf32>
    %119 = vector.extract_strided_slice %0 {offsets = [0, 13], sizes = [4, 1], strides = [1, 1]} : vector<4x78xf32> to vector<4x1xf32>
    %120 = vector.extract_strided_slice %28 {offsets = [1, 0], sizes = [1, 512], strides = [1, 1]} : vector<4x512xf32> to vector<1x512xf32>
    %121 = vector.broadcast %120 : vector<1x512xf32> to vector<4x512xf32>
    %122 = vector.broadcast %119 : vector<4x1xf32> to vector<4x512xf32>
    %123 = arith.mulf %121, %122 : vector<4x512xf32>
    %124 = arith.addf %118, %123 : vector<4x512xf32>
    %125 = vector.extract_strided_slice %0 {offsets = [0, 17], sizes = [4, 1], strides = [1, 1]} : vector<4x78xf32> to vector<4x1xf32>
    %126 = vector.extract_strided_slice %12 {offsets = [1, 0], sizes = [1, 512], strides = [1, 1]} : vector<4x512xf32> to vector<1x512xf32>
    %127 = vector.broadcast %126 : vector<1x512xf32> to vector<4x512xf32>
    %128 = vector.broadcast %125 : vector<4x1xf32> to vector<4x512xf32>
    %129 = arith.mulf %127, %128 : vector<4x512xf32>
    %130 = arith.addf %124, %129 : vector<4x512xf32>
    %131 = vector.extract_strided_slice %0 {offsets = [0, 21], sizes = [4, 1], strides = [1, 1]} : vector<4x78xf32> to vector<4x1xf32>
    %132 = vector.extract_strided_slice %32 {offsets = [1, 0], sizes = [1, 512], strides = [1, 1]} : vector<4x512xf32> to vector<1x512xf32>
    %133 = vector.broadcast %132 : vector<1x512xf32> to vector<4x512xf32>
    %134 = vector.broadcast %131 : vector<4x1xf32> to vector<4x512xf32>
    %135 = arith.mulf %133, %134 : vector<4x512xf32>
    %136 = arith.addf %130, %135 : vector<4x512xf32>
    %137 = vector.extract_strided_slice %0 {offsets = [0, 25], sizes = [4, 1], strides = [1, 1]} : vector<4x78xf32> to vector<4x1xf32>
    %138 = vector.extract_strided_slice %36 {offsets = [1, 0], sizes = [1, 512], strides = [1, 1]} : vector<4x512xf32> to vector<1x512xf32>
    %139 = vector.broadcast %138 : vector<1x512xf32> to vector<4x512xf32>
    %140 = vector.broadcast %137 : vector<4x1xf32> to vector<4x512xf32>
    %141 = arith.mulf %139, %140 : vector<4x512xf32>
    %142 = arith.addf %136, %141 : vector<4x512xf32>
    %143 = vector.extract_strided_slice %0 {offsets = [0, 29], sizes = [4, 1], strides = [1, 1]} : vector<4x78xf32> to vector<4x1xf32>
    %144 = vector.extract_strided_slice %40 {offsets = [1, 0], sizes = [1, 512], strides = [1, 1]} : vector<4x512xf32> to vector<1x512xf32>
    %145 = vector.broadcast %144 : vector<1x512xf32> to vector<4x512xf32>
    %146 = vector.broadcast %143 : vector<4x1xf32> to vector<4x512xf32>
    %147 = arith.mulf %145, %146 : vector<4x512xf32>
    %148 = arith.addf %142, %147 : vector<4x512xf32>
    %149 = vector.extract_strided_slice %0 {offsets = [0, 33], sizes = [4, 1], strides = [1, 1]} : vector<4x78xf32> to vector<4x1xf32>
    %150 = vector.extract_strided_slice %44 {offsets = [1, 0], sizes = [1, 512], strides = [1, 1]} : vector<4x512xf32> to vector<1x512xf32>
    %151 = vector.broadcast %150 : vector<1x512xf32> to vector<4x512xf32>
    %152 = vector.broadcast %149 : vector<4x1xf32> to vector<4x512xf32>
    %153 = arith.mulf %151, %152 : vector<4x512xf32>
    %154 = arith.addf %148, %153 : vector<4x512xf32>
    %cst_15 = arith.constant 0.000000e+00 : f32
    %155 = vector.broadcast %cst_15 : f32 to vector<4x512xf32>
    %156 = vector.extract_strided_slice %0 {offsets = [0, 2], sizes = [4, 1], strides = [1, 1]} : vector<4x78xf32> to vector<4x1xf32>
    %157 = vector.extract_strided_slice %16 {offsets = [2, 0], sizes = [1, 512], strides = [1, 1]} : vector<4x512xf32> to vector<1x512xf32>
    %158 = vector.broadcast %157 : vector<1x512xf32> to vector<4x512xf32>
    %159 = vector.broadcast %156 : vector<4x1xf32> to vector<4x512xf32>
    %160 = arith.mulf %158, %159 : vector<4x512xf32>
    %161 = arith.addf %155, %160 : vector<4x512xf32>
    %162 = vector.extract_strided_slice %0 {offsets = [0, 6], sizes = [4, 1], strides = [1, 1]} : vector<4x78xf32> to vector<4x1xf32>
    %163 = vector.extract_strided_slice %20 {offsets = [2, 0], sizes = [1, 512], strides = [1, 1]} : vector<4x512xf32> to vector<1x512xf32>
    %164 = vector.broadcast %163 : vector<1x512xf32> to vector<4x512xf32>
    %165 = vector.broadcast %162 : vector<4x1xf32> to vector<4x512xf32>
    %166 = arith.mulf %164, %165 : vector<4x512xf32>
    %167 = arith.addf %161, %166 : vector<4x512xf32>
    %168 = vector.extract_strided_slice %0 {offsets = [0, 10], sizes = [4, 1], strides = [1, 1]} : vector<4x78xf32> to vector<4x1xf32>
    %169 = vector.extract_strided_slice %24 {offsets = [2, 0], sizes = [1, 512], strides = [1, 1]} : vector<4x512xf32> to vector<1x512xf32>
    %170 = vector.broadcast %169 : vector<1x512xf32> to vector<4x512xf32>
    %171 = vector.broadcast %168 : vector<4x1xf32> to vector<4x512xf32>
    %172 = arith.mulf %170, %171 : vector<4x512xf32>
    %173 = arith.addf %167, %172 : vector<4x512xf32>
    %174 = vector.extract_strided_slice %0 {offsets = [0, 14], sizes = [4, 1], strides = [1, 1]} : vector<4x78xf32> to vector<4x1xf32>
    %175 = vector.extract_strided_slice %28 {offsets = [2, 0], sizes = [1, 512], strides = [1, 1]} : vector<4x512xf32> to vector<1x512xf32>
    %176 = vector.broadcast %175 : vector<1x512xf32> to vector<4x512xf32>
    %177 = vector.broadcast %174 : vector<4x1xf32> to vector<4x512xf32>
    %178 = arith.mulf %176, %177 : vector<4x512xf32>
    %179 = arith.addf %173, %178 : vector<4x512xf32>
    %180 = vector.extract_strided_slice %0 {offsets = [0, 18], sizes = [4, 1], strides = [1, 1]} : vector<4x78xf32> to vector<4x1xf32>
    %181 = vector.extract_strided_slice %12 {offsets = [2, 0], sizes = [1, 512], strides = [1, 1]} : vector<4x512xf32> to vector<1x512xf32>
    %182 = vector.broadcast %181 : vector<1x512xf32> to vector<4x512xf32>
    %183 = vector.broadcast %180 : vector<4x1xf32> to vector<4x512xf32>
    %184 = arith.mulf %182, %183 : vector<4x512xf32>
    %185 = arith.addf %179, %184 : vector<4x512xf32>
    %186 = vector.extract_strided_slice %0 {offsets = [0, 22], sizes = [4, 1], strides = [1, 1]} : vector<4x78xf32> to vector<4x1xf32>
    %187 = vector.extract_strided_slice %32 {offsets = [2, 0], sizes = [1, 512], strides = [1, 1]} : vector<4x512xf32> to vector<1x512xf32>
    %188 = vector.broadcast %187 : vector<1x512xf32> to vector<4x512xf32>
    %189 = vector.broadcast %186 : vector<4x1xf32> to vector<4x512xf32>
    %190 = arith.mulf %188, %189 : vector<4x512xf32>
    %191 = arith.addf %185, %190 : vector<4x512xf32>
    %192 = vector.extract_strided_slice %0 {offsets = [0, 26], sizes = [4, 1], strides = [1, 1]} : vector<4x78xf32> to vector<4x1xf32>
    %193 = vector.extract_strided_slice %36 {offsets = [2, 0], sizes = [1, 512], strides = [1, 1]} : vector<4x512xf32> to vector<1x512xf32>
    %194 = vector.broadcast %193 : vector<1x512xf32> to vector<4x512xf32>
    %195 = vector.broadcast %192 : vector<4x1xf32> to vector<4x512xf32>
    %196 = arith.mulf %194, %195 : vector<4x512xf32>
    %197 = arith.addf %191, %196 : vector<4x512xf32>
    %198 = vector.extract_strided_slice %0 {offsets = [0, 30], sizes = [4, 1], strides = [1, 1]} : vector<4x78xf32> to vector<4x1xf32>
    %199 = vector.extract_strided_slice %40 {offsets = [2, 0], sizes = [1, 512], strides = [1, 1]} : vector<4x512xf32> to vector<1x512xf32>
    %200 = vector.broadcast %199 : vector<1x512xf32> to vector<4x512xf32>
    %201 = vector.broadcast %198 : vector<4x1xf32> to vector<4x512xf32>
    %202 = arith.mulf %200, %201 : vector<4x512xf32>
    %203 = arith.addf %197, %202 : vector<4x512xf32>
    %204 = vector.extract_strided_slice %0 {offsets = [0, 34], sizes = [4, 1], strides = [1, 1]} : vector<4x78xf32> to vector<4x1xf32>
    %205 = vector.extract_strided_slice %44 {offsets = [2, 0], sizes = [1, 512], strides = [1, 1]} : vector<4x512xf32> to vector<1x512xf32>
    %206 = vector.broadcast %205 : vector<1x512xf32> to vector<4x512xf32>
    %207 = vector.broadcast %204 : vector<4x1xf32> to vector<4x512xf32>
    %208 = arith.mulf %206, %207 : vector<4x512xf32>
    %209 = arith.addf %203, %208 : vector<4x512xf32>
    %cst_16 = arith.constant 0.000000e+00 : f32
    %210 = vector.broadcast %cst_16 : f32 to vector<4x512xf32>
    %211 = vector.extract_strided_slice %0 {offsets = [0, 3], sizes = [4, 1], strides = [1, 1]} : vector<4x78xf32> to vector<4x1xf32>
    %212 = vector.extract_strided_slice %16 {offsets = [3, 0], sizes = [1, 512], strides = [1, 1]} : vector<4x512xf32> to vector<1x512xf32>
    %213 = vector.broadcast %212 : vector<1x512xf32> to vector<4x512xf32>
    %214 = vector.broadcast %211 : vector<4x1xf32> to vector<4x512xf32>
    %215 = arith.mulf %213, %214 : vector<4x512xf32>
    %216 = arith.addf %210, %215 : vector<4x512xf32>
    %217 = vector.extract_strided_slice %0 {offsets = [0, 7], sizes = [4, 1], strides = [1, 1]} : vector<4x78xf32> to vector<4x1xf32>
    %218 = vector.extract_strided_slice %20 {offsets = [3, 0], sizes = [1, 512], strides = [1, 1]} : vector<4x512xf32> to vector<1x512xf32>
    %219 = vector.broadcast %218 : vector<1x512xf32> to vector<4x512xf32>
    %220 = vector.broadcast %217 : vector<4x1xf32> to vector<4x512xf32>
    %221 = arith.mulf %219, %220 : vector<4x512xf32>
    %222 = arith.addf %216, %221 : vector<4x512xf32>
    %223 = vector.extract_strided_slice %0 {offsets = [0, 11], sizes = [4, 1], strides = [1, 1]} : vector<4x78xf32> to vector<4x1xf32>
    %224 = vector.extract_strided_slice %24 {offsets = [3, 0], sizes = [1, 512], strides = [1, 1]} : vector<4x512xf32> to vector<1x512xf32>
    %225 = vector.broadcast %224 : vector<1x512xf32> to vector<4x512xf32>
    %226 = vector.broadcast %223 : vector<4x1xf32> to vector<4x512xf32>
    %227 = arith.mulf %225, %226 : vector<4x512xf32>
    %228 = arith.addf %222, %227 : vector<4x512xf32>
    %229 = vector.extract_strided_slice %0 {offsets = [0, 15], sizes = [4, 1], strides = [1, 1]} : vector<4x78xf32> to vector<4x1xf32>
    %230 = vector.extract_strided_slice %28 {offsets = [3, 0], sizes = [1, 512], strides = [1, 1]} : vector<4x512xf32> to vector<1x512xf32>
    %231 = vector.broadcast %230 : vector<1x512xf32> to vector<4x512xf32>
    %232 = vector.broadcast %229 : vector<4x1xf32> to vector<4x512xf32>
    %233 = arith.mulf %231, %232 : vector<4x512xf32>
    %234 = arith.addf %228, %233 : vector<4x512xf32>
    %235 = vector.extract_strided_slice %0 {offsets = [0, 19], sizes = [4, 1], strides = [1, 1]} : vector<4x78xf32> to vector<4x1xf32>
    %236 = vector.extract_strided_slice %12 {offsets = [3, 0], sizes = [1, 512], strides = [1, 1]} : vector<4x512xf32> to vector<1x512xf32>
    %237 = vector.broadcast %236 : vector<1x512xf32> to vector<4x512xf32>
    %238 = vector.broadcast %235 : vector<4x1xf32> to vector<4x512xf32>
    %239 = arith.mulf %237, %238 : vector<4x512xf32>
    %240 = arith.addf %234, %239 : vector<4x512xf32>
    %241 = vector.extract_strided_slice %0 {offsets = [0, 23], sizes = [4, 1], strides = [1, 1]} : vector<4x78xf32> to vector<4x1xf32>
    %242 = vector.extract_strided_slice %32 {offsets = [3, 0], sizes = [1, 512], strides = [1, 1]} : vector<4x512xf32> to vector<1x512xf32>
    %243 = vector.broadcast %242 : vector<1x512xf32> to vector<4x512xf32>
    %244 = vector.broadcast %241 : vector<4x1xf32> to vector<4x512xf32>
    %245 = arith.mulf %243, %244 : vector<4x512xf32>
    %246 = arith.addf %240, %245 : vector<4x512xf32>
    %247 = vector.extract_strided_slice %0 {offsets = [0, 27], sizes = [4, 1], strides = [1, 1]} : vector<4x78xf32> to vector<4x1xf32>
    %248 = vector.extract_strided_slice %36 {offsets = [3, 0], sizes = [1, 512], strides = [1, 1]} : vector<4x512xf32> to vector<1x512xf32>
    %249 = vector.broadcast %248 : vector<1x512xf32> to vector<4x512xf32>
    %250 = vector.broadcast %247 : vector<4x1xf32> to vector<4x512xf32>
    %251 = arith.mulf %249, %250 : vector<4x512xf32>
    %252 = arith.addf %246, %251 : vector<4x512xf32>
    %253 = vector.extract_strided_slice %0 {offsets = [0, 31], sizes = [4, 1], strides = [1, 1]} : vector<4x78xf32> to vector<4x1xf32>
    %254 = vector.extract_strided_slice %40 {offsets = [3, 0], sizes = [1, 512], strides = [1, 1]} : vector<4x512xf32> to vector<1x512xf32>
    %255 = vector.broadcast %254 : vector<1x512xf32> to vector<4x512xf32>
    %256 = vector.broadcast %253 : vector<4x1xf32> to vector<4x512xf32>
    %257 = arith.mulf %255, %256 : vector<4x512xf32>
    %258 = arith.addf %252, %257 : vector<4x512xf32>
    %259 = vector.extract_strided_slice %0 {offsets = [0, 35], sizes = [4, 1], strides = [1, 1]} : vector<4x78xf32> to vector<4x1xf32>
    %260 = vector.extract_strided_slice %44 {offsets = [3, 0], sizes = [1, 512], strides = [1, 1]} : vector<4x512xf32> to vector<1x512xf32>
    %261 = vector.broadcast %260 : vector<1x512xf32> to vector<4x512xf32>
    %262 = vector.broadcast %259 : vector<4x1xf32> to vector<4x512xf32>
    %263 = arith.mulf %261, %262 : vector<4x512xf32>
    %264 = arith.addf %258, %263 : vector<4x512xf32>
    %265 = arith.addf %99, %154 : vector<4x512xf32>
    %266 = arith.addf %209, %264 : vector<4x512xf32>
    %267 = arith.addf %265, %266 : vector<4x512xf32>
    %268 = vector.extract_strided_slice %0 {offsets = [0, 74], sizes = [4, 1], strides = [1, 1]} : vector<4x78xf32> to vector<4x1xf32>
    %269 = vector.broadcast %268 : vector<4x1xf32> to vector<4x512xf32>
    %270 = arith.addf %267, %269 : vector<4x512xf32>
    %271 = vector.extract_strided_slice %0 {offsets = [0, 75], sizes = [4, 1], strides = [1, 1]} : vector<4x78xf32> to vector<4x1xf32>
    %272 = vector.extract_strided_slice %0 {offsets = [0, 76], sizes = [4, 1], strides = [1, 1]} : vector<4x78xf32> to vector<4x1xf32>
    %273 = vector.broadcast %271 : vector<4x1xf32> to vector<4x512xf32>
    %274 = arith.mulf %270, %273 : vector<4x512xf32>
    %275 = vector.broadcast %272 : vector<4x1xf32> to vector<4x512xf32>
    %276 = arith.addf %274, %275 : vector<4x512xf32>
    %cst_17 = arith.constant 0.000000e+00 : f32
    %277 = vector.broadcast %cst_17 : f32 to vector<4x512xf32>
    %278 = arith.cmpf oge, %276, %277 : vector<4x512xf32>
    %cst_18 = arith.constant 0.00999999977 : f32
    %279 = vector.broadcast %cst_18 : f32 to vector<4x512xf32>
    %280 = arith.mulf %279, %276 : vector<4x512xf32>
    %281 = arith.select %278, %276, %280 : vector<4x512xi1>, vector<4x512xf32>
    %c17_i32_19 = arith.constant 17 : i32
    %282 = tpu.dynamic_rotate %281 by %c17_i32_19 dim 1 : vector<4x512xf32>, i32 -> vector<4x512xf32>
    %c0_20 = arith.constant 0 : index
    %c0_21 = arith.constant 0 : index
    %283 = vector.load %arg2[%c0_20, %c0_21] : memref<9x512xf32, #tpu.memory_space<vmem>>, vector<1x512xf32>
    %284 = vector.broadcast %283 : vector<1x512xf32> to vector<4x512xf32>
    %285 = arith.mulf %282, %284 : vector<4x512xf32>
    %c16_i32_22 = arith.constant 16 : i32
    %286 = tpu.dynamic_rotate %281 by %c16_i32_22 dim 1 : vector<4x512xf32>, i32 -> vector<4x512xf32>
    %c1_23 = arith.constant 1 : index
    %c0_24 = arith.constant 0 : index
    %287 = vector.load %arg2[%c1_23, %c0_24] : memref<9x512xf32, #tpu.memory_space<vmem>>, vector<1x512xf32>
    %288 = vector.broadcast %287 : vector<1x512xf32> to vector<4x512xf32>
    %289 = arith.mulf %286, %288 : vector<4x512xf32>
    %c15_i32_25 = arith.constant 15 : i32
    %290 = tpu.dynamic_rotate %281 by %c15_i32_25 dim 1 : vector<4x512xf32>, i32 -> vector<4x512xf32>
    %c2_26 = arith.constant 2 : index
    %c0_27 = arith.constant 0 : index
    %291 = vector.load %arg2[%c2_26, %c0_27] : memref<9x512xf32, #tpu.memory_space<vmem>>, vector<1x512xf32>
    %292 = vector.broadcast %291 : vector<1x512xf32> to vector<4x512xf32>
    %293 = arith.mulf %290, %292 : vector<4x512xf32>
    %c1_i32_28 = arith.constant 1 : i32
    %294 = tpu.dynamic_rotate %281 by %c1_i32_28 dim 1 : vector<4x512xf32>, i32 -> vector<4x512xf32>
    %c3_29 = arith.constant 3 : index
    %c0_30 = arith.constant 0 : index
    %295 = vector.load %arg2[%c3_29, %c0_30] : memref<9x512xf32, #tpu.memory_space<vmem>>, vector<1x512xf32>
    %296 = vector.broadcast %295 : vector<1x512xf32> to vector<4x512xf32>
    %297 = arith.mulf %294, %296 : vector<4x512xf32>
    %c511_i32_31 = arith.constant 511 : i32
    %298 = tpu.dynamic_rotate %281 by %c511_i32_31 dim 1 : vector<4x512xf32>, i32 -> vector<4x512xf32>
    %c5_32 = arith.constant 5 : index
    %c0_33 = arith.constant 0 : index
    %299 = vector.load %arg2[%c5_32, %c0_33] : memref<9x512xf32, #tpu.memory_space<vmem>>, vector<1x512xf32>
    %300 = vector.broadcast %299 : vector<1x512xf32> to vector<4x512xf32>
    %301 = arith.mulf %298, %300 : vector<4x512xf32>
    %c497_i32_34 = arith.constant 497 : i32
    %302 = tpu.dynamic_rotate %281 by %c497_i32_34 dim 1 : vector<4x512xf32>, i32 -> vector<4x512xf32>
    %c6_35 = arith.constant 6 : index
    %c0_36 = arith.constant 0 : index
    %303 = vector.load %arg2[%c6_35, %c0_36] : memref<9x512xf32, #tpu.memory_space<vmem>>, vector<1x512xf32>
    %304 = vector.broadcast %303 : vector<1x512xf32> to vector<4x512xf32>
    %305 = arith.mulf %302, %304 : vector<4x512xf32>
    %c496_i32_37 = arith.constant 496 : i32
    %306 = tpu.dynamic_rotate %281 by %c496_i32_37 dim 1 : vector<4x512xf32>, i32 -> vector<4x512xf32>
    %c7_38 = arith.constant 7 : index
    %c0_39 = arith.constant 0 : index
    %307 = vector.load %arg2[%c7_38, %c0_39] : memref<9x512xf32, #tpu.memory_space<vmem>>, vector<1x512xf32>
    %308 = vector.broadcast %307 : vector<1x512xf32> to vector<4x512xf32>
    %309 = arith.mulf %306, %308 : vector<4x512xf32>
    %c495_i32_40 = arith.constant 495 : i32
    %310 = tpu.dynamic_rotate %281 by %c495_i32_40 dim 1 : vector<4x512xf32>, i32 -> vector<4x512xf32>
    %c8_41 = arith.constant 8 : index
    %c0_42 = arith.constant 0 : index
    %311 = vector.load %arg2[%c8_41, %c0_42] : memref<9x512xf32, #tpu.memory_space<vmem>>, vector<1x512xf32>
    %312 = vector.broadcast %311 : vector<1x512xf32> to vector<4x512xf32>
    %313 = arith.mulf %310, %312 : vector<4x512xf32>
    %cst_43 = arith.constant 0.000000e+00 : f32
    %314 = vector.broadcast %cst_43 : f32 to vector<4x512xf32>
    %315 = vector.extract_strided_slice %0 {offsets = [0, 36], sizes = [4, 1], strides = [1, 1]} : vector<4x78xf32> to vector<4x1xf32>
    %316 = vector.extract_strided_slice %285 {offsets = [0, 0], sizes = [1, 512], strides = [1, 1]} : vector<4x512xf32> to vector<1x512xf32>
    %317 = vector.broadcast %316 : vector<1x512xf32> to vector<4x512xf32>
    %318 = vector.broadcast %315 : vector<4x1xf32> to vector<4x512xf32>
    %319 = arith.mulf %317, %318 : vector<4x512xf32>
    %320 = arith.addf %314, %319 : vector<4x512xf32>
    %321 = vector.extract_strided_slice %0 {offsets = [0, 40], sizes = [4, 1], strides = [1, 1]} : vector<4x78xf32> to vector<4x1xf32>
    %322 = vector.extract_strided_slice %289 {offsets = [0, 0], sizes = [1, 512], strides = [1, 1]} : vector<4x512xf32> to vector<1x512xf32>
    %323 = vector.broadcast %322 : vector<1x512xf32> to vector<4x512xf32>
    %324 = vector.broadcast %321 : vector<4x1xf32> to vector<4x512xf32>
    %325 = arith.mulf %323, %324 : vector<4x512xf32>
    %326 = arith.addf %320, %325 : vector<4x512xf32>
    %327 = vector.extract_strided_slice %0 {offsets = [0, 44], sizes = [4, 1], strides = [1, 1]} : vector<4x78xf32> to vector<4x1xf32>
    %328 = vector.extract_strided_slice %293 {offsets = [0, 0], sizes = [1, 512], strides = [1, 1]} : vector<4x512xf32> to vector<1x512xf32>
    %329 = vector.broadcast %328 : vector<1x512xf32> to vector<4x512xf32>
    %330 = vector.broadcast %327 : vector<4x1xf32> to vector<4x512xf32>
    %331 = arith.mulf %329, %330 : vector<4x512xf32>
    %332 = arith.addf %326, %331 : vector<4x512xf32>
    %333 = vector.extract_strided_slice %0 {offsets = [0, 48], sizes = [4, 1], strides = [1, 1]} : vector<4x78xf32> to vector<4x1xf32>
    %334 = vector.extract_strided_slice %297 {offsets = [0, 0], sizes = [1, 512], strides = [1, 1]} : vector<4x512xf32> to vector<1x512xf32>
    %335 = vector.broadcast %334 : vector<1x512xf32> to vector<4x512xf32>
    %336 = vector.broadcast %333 : vector<4x1xf32> to vector<4x512xf32>
    %337 = arith.mulf %335, %336 : vector<4x512xf32>
    %338 = arith.addf %332, %337 : vector<4x512xf32>
    %339 = vector.extract_strided_slice %0 {offsets = [0, 52], sizes = [4, 1], strides = [1, 1]} : vector<4x78xf32> to vector<4x1xf32>
    %340 = vector.extract_strided_slice %281 {offsets = [0, 0], sizes = [1, 512], strides = [1, 1]} : vector<4x512xf32> to vector<1x512xf32>
    %341 = vector.broadcast %340 : vector<1x512xf32> to vector<4x512xf32>
    %342 = vector.broadcast %339 : vector<4x1xf32> to vector<4x512xf32>
    %343 = arith.mulf %341, %342 : vector<4x512xf32>
    %344 = arith.addf %338, %343 : vector<4x512xf32>
    %345 = vector.extract_strided_slice %0 {offsets = [0, 56], sizes = [4, 1], strides = [1, 1]} : vector<4x78xf32> to vector<4x1xf32>
    %346 = vector.extract_strided_slice %301 {offsets = [0, 0], sizes = [1, 512], strides = [1, 1]} : vector<4x512xf32> to vector<1x512xf32>
    %347 = vector.broadcast %346 : vector<1x512xf32> to vector<4x512xf32>
    %348 = vector.broadcast %345 : vector<4x1xf32> to vector<4x512xf32>
    %349 = arith.mulf %347, %348 : vector<4x512xf32>
    %350 = arith.addf %344, %349 : vector<4x512xf32>
    %351 = vector.extract_strided_slice %0 {offsets = [0, 60], sizes = [4, 1], strides = [1, 1]} : vector<4x78xf32> to vector<4x1xf32>
    %352 = vector.extract_strided_slice %305 {offsets = [0, 0], sizes = [1, 512], strides = [1, 1]} : vector<4x512xf32> to vector<1x512xf32>
    %353 = vector.broadcast %352 : vector<1x512xf32> to vector<4x512xf32>
    %354 = vector.broadcast %351 : vector<4x1xf32> to vector<4x512xf32>
    %355 = arith.mulf %353, %354 : vector<4x512xf32>
    %356 = arith.addf %350, %355 : vector<4x512xf32>
    %357 = vector.extract_strided_slice %0 {offsets = [0, 64], sizes = [4, 1], strides = [1, 1]} : vector<4x78xf32> to vector<4x1xf32>
    %358 = vector.extract_strided_slice %309 {offsets = [0, 0], sizes = [1, 512], strides = [1, 1]} : vector<4x512xf32> to vector<1x512xf32>
    %359 = vector.broadcast %358 : vector<1x512xf32> to vector<4x512xf32>
    %360 = vector.broadcast %357 : vector<4x1xf32> to vector<4x512xf32>
    %361 = arith.mulf %359, %360 : vector<4x512xf32>
    %362 = arith.addf %356, %361 : vector<4x512xf32>
    %363 = vector.extract_strided_slice %0 {offsets = [0, 68], sizes = [4, 1], strides = [1, 1]} : vector<4x78xf32> to vector<4x1xf32>
    %364 = vector.extract_strided_slice %313 {offsets = [0, 0], sizes = [1, 512], strides = [1, 1]} : vector<4x512xf32> to vector<1x512xf32>
    %365 = vector.broadcast %364 : vector<1x512xf32> to vector<4x512xf32>
    %366 = vector.broadcast %363 : vector<4x1xf32> to vector<4x512xf32>
    %367 = arith.mulf %365, %366 : vector<4x512xf32>
    %368 = arith.addf %362, %367 : vector<4x512xf32>
    %cst_44 = arith.constant 0.000000e+00 : f32
    %369 = vector.broadcast %cst_44 : f32 to vector<4x512xf32>
    %370 = vector.extract_strided_slice %0 {offsets = [0, 37], sizes = [4, 1], strides = [1, 1]} : vector<4x78xf32> to vector<4x1xf32>
    %371 = vector.extract_strided_slice %285 {offsets = [1, 0], sizes = [1, 512], strides = [1, 1]} : vector<4x512xf32> to vector<1x512xf32>
    %372 = vector.broadcast %371 : vector<1x512xf32> to vector<4x512xf32>
    %373 = vector.broadcast %370 : vector<4x1xf32> to vector<4x512xf32>
    %374 = arith.mulf %372, %373 : vector<4x512xf32>
    %375 = arith.addf %369, %374 : vector<4x512xf32>
    %376 = vector.extract_strided_slice %0 {offsets = [0, 41], sizes = [4, 1], strides = [1, 1]} : vector<4x78xf32> to vector<4x1xf32>
    %377 = vector.extract_strided_slice %289 {offsets = [1, 0], sizes = [1, 512], strides = [1, 1]} : vector<4x512xf32> to vector<1x512xf32>
    %378 = vector.broadcast %377 : vector<1x512xf32> to vector<4x512xf32>
    %379 = vector.broadcast %376 : vector<4x1xf32> to vector<4x512xf32>
    %380 = arith.mulf %378, %379 : vector<4x512xf32>
    %381 = arith.addf %375, %380 : vector<4x512xf32>
    %382 = vector.extract_strided_slice %0 {offsets = [0, 45], sizes = [4, 1], strides = [1, 1]} : vector<4x78xf32> to vector<4x1xf32>
    %383 = vector.extract_strided_slice %293 {offsets = [1, 0], sizes = [1, 512], strides = [1, 1]} : vector<4x512xf32> to vector<1x512xf32>
    %384 = vector.broadcast %383 : vector<1x512xf32> to vector<4x512xf32>
    %385 = vector.broadcast %382 : vector<4x1xf32> to vector<4x512xf32>
    %386 = arith.mulf %384, %385 : vector<4x512xf32>
    %387 = arith.addf %381, %386 : vector<4x512xf32>
    %388 = vector.extract_strided_slice %0 {offsets = [0, 49], sizes = [4, 1], strides = [1, 1]} : vector<4x78xf32> to vector<4x1xf32>
    %389 = vector.extract_strided_slice %297 {offsets = [1, 0], sizes = [1, 512], strides = [1, 1]} : vector<4x512xf32> to vector<1x512xf32>
    %390 = vector.broadcast %389 : vector<1x512xf32> to vector<4x512xf32>
    %391 = vector.broadcast %388 : vector<4x1xf32> to vector<4x512xf32>
    %392 = arith.mulf %390, %391 : vector<4x512xf32>
    %393 = arith.addf %387, %392 : vector<4x512xf32>
    %394 = vector.extract_strided_slice %0 {offsets = [0, 53], sizes = [4, 1], strides = [1, 1]} : vector<4x78xf32> to vector<4x1xf32>
    %395 = vector.extract_strided_slice %281 {offsets = [1, 0], sizes = [1, 512], strides = [1, 1]} : vector<4x512xf32> to vector<1x512xf32>
    %396 = vector.broadcast %395 : vector<1x512xf32> to vector<4x512xf32>
    %397 = vector.broadcast %394 : vector<4x1xf32> to vector<4x512xf32>
    %398 = arith.mulf %396, %397 : vector<4x512xf32>
    %399 = arith.addf %393, %398 : vector<4x512xf32>
    %400 = vector.extract_strided_slice %0 {offsets = [0, 57], sizes = [4, 1], strides = [1, 1]} : vector<4x78xf32> to vector<4x1xf32>
    %401 = vector.extract_strided_slice %301 {offsets = [1, 0], sizes = [1, 512], strides = [1, 1]} : vector<4x512xf32> to vector<1x512xf32>
    %402 = vector.broadcast %401 : vector<1x512xf32> to vector<4x512xf32>
    %403 = vector.broadcast %400 : vector<4x1xf32> to vector<4x512xf32>
    %404 = arith.mulf %402, %403 : vector<4x512xf32>
    %405 = arith.addf %399, %404 : vector<4x512xf32>
    %406 = vector.extract_strided_slice %0 {offsets = [0, 61], sizes = [4, 1], strides = [1, 1]} : vector<4x78xf32> to vector<4x1xf32>
    %407 = vector.extract_strided_slice %305 {offsets = [1, 0], sizes = [1, 512], strides = [1, 1]} : vector<4x512xf32> to vector<1x512xf32>
    %408 = vector.broadcast %407 : vector<1x512xf32> to vector<4x512xf32>
    %409 = vector.broadcast %406 : vector<4x1xf32> to vector<4x512xf32>
    %410 = arith.mulf %408, %409 : vector<4x512xf32>
    %411 = arith.addf %405, %410 : vector<4x512xf32>
    %412 = vector.extract_strided_slice %0 {offsets = [0, 65], sizes = [4, 1], strides = [1, 1]} : vector<4x78xf32> to vector<4x1xf32>
    %413 = vector.extract_strided_slice %309 {offsets = [1, 0], sizes = [1, 512], strides = [1, 1]} : vector<4x512xf32> to vector<1x512xf32>
    %414 = vector.broadcast %413 : vector<1x512xf32> to vector<4x512xf32>
    %415 = vector.broadcast %412 : vector<4x1xf32> to vector<4x512xf32>
    %416 = arith.mulf %414, %415 : vector<4x512xf32>
    %417 = arith.addf %411, %416 : vector<4x512xf32>
    %418 = vector.extract_strided_slice %0 {offsets = [0, 69], sizes = [4, 1], strides = [1, 1]} : vector<4x78xf32> to vector<4x1xf32>
    %419 = vector.extract_strided_slice %313 {offsets = [1, 0], sizes = [1, 512], strides = [1, 1]} : vector<4x512xf32> to vector<1x512xf32>
    %420 = vector.broadcast %419 : vector<1x512xf32> to vector<4x512xf32>
    %421 = vector.broadcast %418 : vector<4x1xf32> to vector<4x512xf32>
    %422 = arith.mulf %420, %421 : vector<4x512xf32>
    %423 = arith.addf %417, %422 : vector<4x512xf32>
    %cst_45 = arith.constant 0.000000e+00 : f32
    %424 = vector.broadcast %cst_45 : f32 to vector<4x512xf32>
    %425 = vector.extract_strided_slice %0 {offsets = [0, 38], sizes = [4, 1], strides = [1, 1]} : vector<4x78xf32> to vector<4x1xf32>
    %426 = vector.extract_strided_slice %285 {offsets = [2, 0], sizes = [1, 512], strides = [1, 1]} : vector<4x512xf32> to vector<1x512xf32>
    %427 = vector.broadcast %426 : vector<1x512xf32> to vector<4x512xf32>
    %428 = vector.broadcast %425 : vector<4x1xf32> to vector<4x512xf32>
    %429 = arith.mulf %427, %428 : vector<4x512xf32>
    %430 = arith.addf %424, %429 : vector<4x512xf32>
    %431 = vector.extract_strided_slice %0 {offsets = [0, 42], sizes = [4, 1], strides = [1, 1]} : vector<4x78xf32> to vector<4x1xf32>
    %432 = vector.extract_strided_slice %289 {offsets = [2, 0], sizes = [1, 512], strides = [1, 1]} : vector<4x512xf32> to vector<1x512xf32>
    %433 = vector.broadcast %432 : vector<1x512xf32> to vector<4x512xf32>
    %434 = vector.broadcast %431 : vector<4x1xf32> to vector<4x512xf32>
    %435 = arith.mulf %433, %434 : vector<4x512xf32>
    %436 = arith.addf %430, %435 : vector<4x512xf32>
    %437 = vector.extract_strided_slice %0 {offsets = [0, 46], sizes = [4, 1], strides = [1, 1]} : vector<4x78xf32> to vector<4x1xf32>
    %438 = vector.extract_strided_slice %293 {offsets = [2, 0], sizes = [1, 512], strides = [1, 1]} : vector<4x512xf32> to vector<1x512xf32>
    %439 = vector.broadcast %438 : vector<1x512xf32> to vector<4x512xf32>
    %440 = vector.broadcast %437 : vector<4x1xf32> to vector<4x512xf32>
    %441 = arith.mulf %439, %440 : vector<4x512xf32>
    %442 = arith.addf %436, %441 : vector<4x512xf32>
    %443 = vector.extract_strided_slice %0 {offsets = [0, 50], sizes = [4, 1], strides = [1, 1]} : vector<4x78xf32> to vector<4x1xf32>
    %444 = vector.extract_strided_slice %297 {offsets = [2, 0], sizes = [1, 512], strides = [1, 1]} : vector<4x512xf32> to vector<1x512xf32>
    %445 = vector.broadcast %444 : vector<1x512xf32> to vector<4x512xf32>
    %446 = vector.broadcast %443 : vector<4x1xf32> to vector<4x512xf32>
    %447 = arith.mulf %445, %446 : vector<4x512xf32>
    %448 = arith.addf %442, %447 : vector<4x512xf32>
    %449 = vector.extract_strided_slice %0 {offsets = [0, 54], sizes = [4, 1], strides = [1, 1]} : vector<4x78xf32> to vector<4x1xf32>
    %450 = vector.extract_strided_slice %281 {offsets = [2, 0], sizes = [1, 512], strides = [1, 1]} : vector<4x512xf32> to vector<1x512xf32>
    %451 = vector.broadcast %450 : vector<1x512xf32> to vector<4x512xf32>
    %452 = vector.broadcast %449 : vector<4x1xf32> to vector<4x512xf32>
    %453 = arith.mulf %451, %452 : vector<4x512xf32>
    %454 = arith.addf %448, %453 : vector<4x512xf32>
    %455 = vector.extract_strided_slice %0 {offsets = [0, 58], sizes = [4, 1], strides = [1, 1]} : vector<4x78xf32> to vector<4x1xf32>
    %456 = vector.extract_strided_slice %301 {offsets = [2, 0], sizes = [1, 512], strides = [1, 1]} : vector<4x512xf32> to vector<1x512xf32>
    %457 = vector.broadcast %456 : vector<1x512xf32> to vector<4x512xf32>
    %458 = vector.broadcast %455 : vector<4x1xf32> to vector<4x512xf32>
    %459 = arith.mulf %457, %458 : vector<4x512xf32>
    %460 = arith.addf %454, %459 : vector<4x512xf32>
    %461 = vector.extract_strided_slice %0 {offsets = [0, 62], sizes = [4, 1], strides = [1, 1]} : vector<4x78xf32> to vector<4x1xf32>
    %462 = vector.extract_strided_slice %305 {offsets = [2, 0], sizes = [1, 512], strides = [1, 1]} : vector<4x512xf32> to vector<1x512xf32>
    %463 = vector.broadcast %462 : vector<1x512xf32> to vector<4x512xf32>
    %464 = vector.broadcast %461 : vector<4x1xf32> to vector<4x512xf32>
    %465 = arith.mulf %463, %464 : vector<4x512xf32>
    %466 = arith.addf %460, %465 : vector<4x512xf32>
    %467 = vector.extract_strided_slice %0 {offsets = [0, 66], sizes = [4, 1], strides = [1, 1]} : vector<4x78xf32> to vector<4x1xf32>
    %468 = vector.extract_strided_slice %309 {offsets = [2, 0], sizes = [1, 512], strides = [1, 1]} : vector<4x512xf32> to vector<1x512xf32>
    %469 = vector.broadcast %468 : vector<1x512xf32> to vector<4x512xf32>
    %470 = vector.broadcast %467 : vector<4x1xf32> to vector<4x512xf32>
    %471 = arith.mulf %469, %470 : vector<4x512xf32>
    %472 = arith.addf %466, %471 : vector<4x512xf32>
    %473 = vector.extract_strided_slice %0 {offsets = [0, 70], sizes = [4, 1], strides = [1, 1]} : vector<4x78xf32> to vector<4x1xf32>
    %474 = vector.extract_strided_slice %313 {offsets = [2, 0], sizes = [1, 512], strides = [1, 1]} : vector<4x512xf32> to vector<1x512xf32>
    %475 = vector.broadcast %474 : vector<1x512xf32> to vector<4x512xf32>
    %476 = vector.broadcast %473 : vector<4x1xf32> to vector<4x512xf32>
    %477 = arith.mulf %475, %476 : vector<4x512xf32>
    %478 = arith.addf %472, %477 : vector<4x512xf32>
    %cst_46 = arith.constant 0.000000e+00 : f32
    %479 = vector.broadcast %cst_46 : f32 to vector<4x512xf32>
    %480 = vector.extract_strided_slice %0 {offsets = [0, 39], sizes = [4, 1], strides = [1, 1]} : vector<4x78xf32> to vector<4x1xf32>
    %481 = vector.extract_strided_slice %285 {offsets = [3, 0], sizes = [1, 512], strides = [1, 1]} : vector<4x512xf32> to vector<1x512xf32>
    %482 = vector.broadcast %481 : vector<1x512xf32> to vector<4x512xf32>
    %483 = vector.broadcast %480 : vector<4x1xf32> to vector<4x512xf32>
    %484 = arith.mulf %482, %483 : vector<4x512xf32>
    %485 = arith.addf %479, %484 : vector<4x512xf32>
    %486 = vector.extract_strided_slice %0 {offsets = [0, 43], sizes = [4, 1], strides = [1, 1]} : vector<4x78xf32> to vector<4x1xf32>
    %487 = vector.extract_strided_slice %289 {offsets = [3, 0], sizes = [1, 512], strides = [1, 1]} : vector<4x512xf32> to vector<1x512xf32>
    %488 = vector.broadcast %487 : vector<1x512xf32> to vector<4x512xf32>
    %489 = vector.broadcast %486 : vector<4x1xf32> to vector<4x512xf32>
    %490 = arith.mulf %488, %489 : vector<4x512xf32>
    %491 = arith.addf %485, %490 : vector<4x512xf32>
    %492 = vector.extract_strided_slice %0 {offsets = [0, 47], sizes = [4, 1], strides = [1, 1]} : vector<4x78xf32> to vector<4x1xf32>
    %493 = vector.extract_strided_slice %293 {offsets = [3, 0], sizes = [1, 512], strides = [1, 1]} : vector<4x512xf32> to vector<1x512xf32>
    %494 = vector.broadcast %493 : vector<1x512xf32> to vector<4x512xf32>
    %495 = vector.broadcast %492 : vector<4x1xf32> to vector<4x512xf32>
    %496 = arith.mulf %494, %495 : vector<4x512xf32>
    %497 = arith.addf %491, %496 : vector<4x512xf32>
    %498 = vector.extract_strided_slice %0 {offsets = [0, 51], sizes = [4, 1], strides = [1, 1]} : vector<4x78xf32> to vector<4x1xf32>
    %499 = vector.extract_strided_slice %297 {offsets = [3, 0], sizes = [1, 512], strides = [1, 1]} : vector<4x512xf32> to vector<1x512xf32>
    %500 = vector.broadcast %499 : vector<1x512xf32> to vector<4x512xf32>
    %501 = vector.broadcast %498 : vector<4x1xf32> to vector<4x512xf32>
    %502 = arith.mulf %500, %501 : vector<4x512xf32>
    %503 = arith.addf %497, %502 : vector<4x512xf32>
    %504 = vector.extract_strided_slice %0 {offsets = [0, 55], sizes = [4, 1], strides = [1, 1]} : vector<4x78xf32> to vector<4x1xf32>
    %505 = vector.extract_strided_slice %281 {offsets = [3, 0], sizes = [1, 512], strides = [1, 1]} : vector<4x512xf32> to vector<1x512xf32>
    %506 = vector.broadcast %505 : vector<1x512xf32> to vector<4x512xf32>
    %507 = vector.broadcast %504 : vector<4x1xf32> to vector<4x512xf32>
    %508 = arith.mulf %506, %507 : vector<4x512xf32>
    %509 = arith.addf %503, %508 : vector<4x512xf32>
    %510 = vector.extract_strided_slice %0 {offsets = [0, 59], sizes = [4, 1], strides = [1, 1]} : vector<4x78xf32> to vector<4x1xf32>
    %511 = vector.extract_strided_slice %301 {offsets = [3, 0], sizes = [1, 512], strides = [1, 1]} : vector<4x512xf32> to vector<1x512xf32>
    %512 = vector.broadcast %511 : vector<1x512xf32> to vector<4x512xf32>
    %513 = vector.broadcast %510 : vector<4x1xf32> to vector<4x512xf32>
    %514 = arith.mulf %512, %513 : vector<4x512xf32>
    %515 = arith.addf %509, %514 : vector<4x512xf32>
    %516 = vector.extract_strided_slice %0 {offsets = [0, 63], sizes = [4, 1], strides = [1, 1]} : vector<4x78xf32> to vector<4x1xf32>
    %517 = vector.extract_strided_slice %305 {offsets = [3, 0], sizes = [1, 512], strides = [1, 1]} : vector<4x512xf32> to vector<1x512xf32>
    %518 = vector.broadcast %517 : vector<1x512xf32> to vector<4x512xf32>
    %519 = vector.broadcast %516 : vector<4x1xf32> to vector<4x512xf32>
    %520 = arith.mulf %518, %519 : vector<4x512xf32>
    %521 = arith.addf %515, %520 : vector<4x512xf32>
    %522 = vector.extract_strided_slice %0 {offsets = [0, 67], sizes = [4, 1], strides = [1, 1]} : vector<4x78xf32> to vector<4x1xf32>
    %523 = vector.extract_strided_slice %309 {offsets = [3, 0], sizes = [1, 512], strides = [1, 1]} : vector<4x512xf32> to vector<1x512xf32>
    %524 = vector.broadcast %523 : vector<1x512xf32> to vector<4x512xf32>
    %525 = vector.broadcast %522 : vector<4x1xf32> to vector<4x512xf32>
    %526 = arith.mulf %524, %525 : vector<4x512xf32>
    %527 = arith.addf %521, %526 : vector<4x512xf32>
    %528 = vector.extract_strided_slice %0 {offsets = [0, 71], sizes = [4, 1], strides = [1, 1]} : vector<4x78xf32> to vector<4x1xf32>
    %529 = vector.extract_strided_slice %313 {offsets = [3, 0], sizes = [1, 512], strides = [1, 1]} : vector<4x512xf32> to vector<1x512xf32>
    %530 = vector.broadcast %529 : vector<1x512xf32> to vector<4x512xf32>
    %531 = vector.broadcast %528 : vector<4x1xf32> to vector<4x512xf32>
    %532 = arith.mulf %530, %531 : vector<4x512xf32>
    %533 = arith.addf %527, %532 : vector<4x512xf32>
    %534 = arith.addf %368, %423 : vector<4x512xf32>
    %535 = arith.addf %478, %533 : vector<4x512xf32>
    %536 = arith.addf %534, %535 : vector<4x512xf32>
    %537 = vector.extract_strided_slice %0 {offsets = [0, 77], sizes = [4, 1], strides = [1, 1]} : vector<4x78xf32> to vector<4x1xf32>
    %538 = vector.broadcast %537 : vector<4x1xf32> to vector<4x512xf32>
    %539 = arith.addf %536, %538 : vector<4x512xf32>
    %c0_47 = arith.constant 0 : index
    %c0_48 = arith.constant 0 : index
    %540 = vector.load %arg4[%c0_47, %c0_48] : memref<4x512xf32, #tpu.memory_space<vmem>>, vector<4x512xf32>
    tpu.vector_store %arg4[%c0_47, %c0_48], %539 {strides = array<i32>} : memref<4x512xf32, #tpu.memory_space<vmem>>, vector<4x512xf32>,
    return
  }
  func.func @transform_0(%arg0: i32) -> (i32, i32) {
    %c0_i32 = arith.constant 0 : i32
    %c0_i32_0 = arith.constant 0 : i32
    return %c0_i32, %arg0 : i32, i32
  }
  func.func @transform_1(%arg0: i32) -> (i32, i32) {
    %c0_i32 = arith.constant 0 : i32
    %c0_i32_0 = arith.constant 0 : i32
    %c0_i32_1 = arith.constant 0 : i32
    return %c0_i32, %c0_i32_0 : i32, i32
  }
  func.func @transform_2(%arg0: i32) -> (i32, i32) {
    %c0_i32 = arith.constant 0 : i32
    %c0_i32_0 = arith.constant 0 : i32
    %c0_i32_1 = arith.constant 0 : i32
    return %c0_i32, %c0_i32_0 : i32, i32
  }
  func.func @transform_3(%arg0: i32) -> (i32, i32) {
    %c0_i32 = arith.constant 0 : i32
    %c0_i32_0 = arith.constant 0 : i32
    return %c0_i32, %arg0 : i32, i32
  }
}

</mosaic_0001>

<llo_original>
// kernel: tpu_custom_call.1
$region0: #{tpu_custom_call.1}
  #allocation0 [shape = 'u32[]', space=smem, size = 0x4, offset = 0x4, fixed_abs, tag = 'smem constant byte address 0x4 - core index']
  #allocation1 [shape = 'u32[144,128]{1,0:T(1,128)}', space=vmem, size = 0x12000, scoped, tag = 'internal scratch']
  %s0 = inlined_call_operand.hbm [shape: f32[4,512], index: 0, kind: input, shape index: {}]
  %s1 = inlined_call_operand.hbm [shape: f32[9,512], index: 1, kind: input, shape index: {}]
  %s2 = inlined_call_operand.hbm [shape: f32[4,78], index: 2, kind: input, shape index: {}]
  %s3 = inlined_call_operand.hbm [shape: f32[4,512], index: 3, kind: output, shape index: {}]
  %s4 = sld [smem:[#allocation0]]
  $region34: #{tpu_custom_call.1} parent=0
    _
  %s6 = ssub.s32 1, %s4
  %s7 = scalar_select 0, %s6, %s4
  $region1: #{tpu_custom_call.1} parent=0
    #allocation2 [shape = 'u8[8192]{0}', space=vmem, size = 0x2000, scoped, tag = 'input window, operand 0, single buffered']
    #allocation3 [shape = 's32[1]{0}', space=sflag, size = 0x4, scoped, tag = 'scoped memory for tpu_custom_call.1']
    #allocation4 [shape = 's32[1]{0}', space=sflag, size = 0x4, scoped, tag = 'scoped memory for tpu_custom_call.1']
    #allocation5 [shape = 'u8[32768]{0}', space=vmem, size = 0x8000, scoped, tag = 'input window, operand 1, single buffered']
    #allocation6 [shape = 's32[1]{0}', space=sflag, size = 0x4, scoped, tag = 'scoped memory for tpu_custom_call.1']
    #allocation7 [shape = 'u8[2048]{0}', space=vmem, size = 0x800, scoped, tag = 'input window, operand 2, single buffered']
    #allocation8 [shape = 'u8[8192]{0}', space=vmem, size = 0x2000, scoped, tag = 'output window, operand 0, single buffered']
    %8 = vsyncpa [#allocation3], 0
    %9 = vsyncpa [#allocation6], 0
    %10 = vsyncpa [#allocation4], 0
    // Predicated region
    $region2: #{tpu_custom_call.1} parent=1 // pred_check
      _
    $region3: #{tpu_custom_call.1} parent=1 // pred_check_branch
      %12 = sbr.rel (0) target = $region5
    $region4: #{tpu_custom_call.1} parent=1 // pred_region
      %s14 = ssub.s32 256, 256
      %15 = vsyncadd [#allocation3], %s14
      %s17 = sshll.u32 [#allocation2], 4
      %s18 = int_to_ptr.vmem [resolvable:$true] %s17
      %20 = dma.hbm_to_vmem [thread:$0]  %s0, 256, %s18, [#allocation3]
    $region5: #{tpu_custom_call.1} parent=1 // pred_fallthru
      _
    // Predicated region
    $region6: #{tpu_custom_call.1} parent=1 // pred_check
      _
    $region7: #{tpu_custom_call.1} parent=1 // pred_check_branch
      %22 = sbr.rel (0) target = $region9
    $region8: #{tpu_custom_call.1} parent=1 // pred_region
      %s24 = ssub.s32 1024, 1024
      %25 = vsyncadd [#allocation6], %s24
      %s26 = sshll.u32 [#allocation5], 4
      %s27 = int_to_ptr.vmem [resolvable:$true] %s26
      %32 = dma.hbm_to_vmem [thread:$0]  %s1, 1024, %s27, [#allocation6], 512, 512, 32
    $region9: #{tpu_custom_call.1} parent=1 // pred_fallthru
      _
    // Predicated region
    $region10: #{tpu_custom_call.1} parent=1 // pred_check
      _
    $region11: #{tpu_custom_call.1} parent=1 // pred_check_branch
      %34 = sbr.rel (0) target = $region13
    $region12: #{tpu_custom_call.1} parent=1 // pred_region
      %s36 = ssub.s32 64, 64
      %37 = vsyncadd [#allocation6], %s36
      %s39 = sshll.u32 [#allocation7], 4
      %s40 = int_to_ptr.vmem [resolvable:$true] %s39
      %42 = dma.hbm_to_vmem [thread:$0]  %s2, 64, %s40, [#allocation6]
    $region13: #{tpu_custom_call.1} parent=1 // pred_fallthru
      _
    // Predicated region
    $region14: #{tpu_custom_call.1} parent=1 // pred_check
      _
    $region15: #{tpu_custom_call.1} parent=1 // pred_check_branch
      %44 = sbr.rel (0) target = $region17
    $region16: #{tpu_custom_call.1} parent=1 // pred_region
      %45 = dma.done [#allocation3], 256
    $region17: #{tpu_custom_call.1} parent=1 // pred_fallthru
      _
    // Predicated region
    $region18: #{tpu_custom_call.1} parent=1 // pred_check
      _
    $region19: #{tpu_custom_call.1} parent=1 // pred_check_branch
      %47 = sbr.rel (0) target = $region21
    $region20: #{tpu_custom_call.1} parent=1 // pred_region
      %48 = dma.done [#allocation6], 1024
    $region21: #{tpu_custom_call.1} parent=1 // pred_fallthru
      _
    // Predicated region
    $region22: #{tpu_custom_call.1} parent=1 // pred_check
      _
    $region23: #{tpu_custom_call.1} parent=1 // pred_check_branch
      %50 = sbr.rel (0) target = $region25
    $region24: #{tpu_custom_call.1} parent=1 // pred_region
      %51 = dma.done [#allocation6], 64
    $region25: #{tpu_custom_call.1} parent=1 // pred_fallthru
      _
    %v52 = vld [vmem:[#allocation7] sm:$0xf]
    %v53 = vld [vmem:[#allocation2] sm:$0xff]
    %v54 = vld [vmem:[#allocation2 + $0x8] sm:$0xff]
    %56 = vset.pattern.permute.xlu0 72
    %57 = vperm.xlu0 %56, %v52
    %v58 = vpop.permute.xlu0 %57
    %v60 = vunpack.c.l.s4 839922192
    %v61 = vunpack.c.0.s8 %v60
    %v62 = vlaneseq
    %v63 = vshrl.u32 %v62, 7
    %v64 = vsub.s32 %v61, %v63
    %v65 = vrot.slane %v58, %v64
    %v67 = vmul.f32 %v53, %v65
    %v68 = vmul.f32 %v54, %v65
    %69 = vset.pattern.permute.xlu0 73
    %70 = vperm.xlu0 %69, %v52
    %v71 = vpop.permute.xlu0 %70
    %v73 = vunpack.c.l.s4 839922192
    %v74 = vunpack.c.0.s8 %v73
    %v75 = vlaneseq
    %v76 = vshrl.u32 %v75, 7
    %v77 = vsub.s32 %v74, %v76
    %v78 = vrot.slane %v71, %v77
    %v80 = vadd.f32 %v67, %v78
    %v81 = vadd.f32 %v68, %v78
    %vm82 = vcmp.ge.f32.partialorder %v80, 0.0
    %vm83 = vcmp.ge.f32.partialorder %v81, 0.0
    %v84 = vmul.f32 %v80, 0.01
    %v85 = vmul.f32 %v81, 0.01
    %v86 = vsel %vm82, %v80, %v84
    %v87 = vsel %vm83, %v81, %v85
    %v90 = vcombine.high %v86, %v86
    %v91 = vcombine.high %v87, %v87
    %94 = vrot.lane.b32.xlu0 %v86, 17
    %v95 = vpop.permute.xlu0 %94
    %96 = vrot.lane.b32.xlu0 %v90, 17
    %v97 = vpop.permute.xlu0 %96
    %98 = vrot.lane.b32.xlu0 %v87, 17
    %v99 = vpop.permute.xlu0 %98
    %100 = vrot.lane.b32.xlu0 %v91, 17
    %v101 = vpop.permute.xlu0 %100
    %v102 = vlaneseq
    %v103 = vand.u32 %v102, 127
    %vm104 = vcmp.lt.s32.totalorder %v103, 17
    %v105 = vsel %vm104, %v99, %v101
    %v106 = vsel %vm104, %v97, %v99
    %v107 = vsel %vm104, %v95, %v97
    %v108 = vsel %vm104, %v101, %v95
    %v109 = vld [vmem:[#allocation5] ss:$8 sm:$0xf]
    %v111 = vlaneseq
    %v112 = vshrl.u32 %v111, 7
    %v113 = vsub.s32 0, %v112
    %v114 = vrot.slane %v109, %v113
    %v115 = vlaneseq
    %v116 = vshrl.u32 %v115, 7
    %v117 = vsub.s32 1, %v116
    %v118 = vrot.slane %v109, %v117
    %v119 = vlaneseq
    %v120 = vshrl.u32 %v119, 7
    %v121 = vsub.s32 2, %v120
    %v122 = vrot.slane %v109, %v121
    %v123 = vlaneseq
    %v124 = vshrl.u32 %v123, 7
    %v125 = vsub.s32 3, %v124
    %v126 = vrot.slane %v109, %v125
    %v131 = vmul.f32 %v108, %v114
    %v132 = vmul.f32 %v107, %v118
    %v133 = vmul.f32 %v106, %v122
    %v134 = vmul.f32 %v105, %v126
    %135 = vrot.lane.b32.xlu0 %v86, 16
    %v136 = vpop.permute.xlu0 %135
    %137 = vrot.lane.b32.xlu0 %v90, 16
    %v138 = vpop.permute.xlu0 %137
    %139 = vrot.lane.b32.xlu0 %v87, 16
    %v140 = vpop.permute.xlu0 %139
    %141 = vrot.lane.b32.xlu0 %v91, 16
    %v142 = vpop.permute.xlu0 %141
    %vm143 = vcmp.lt.s32.totalorder %v103, 16
    %v144 = vsel %vm143, %v140, %v142
    %v145 = vsel %vm143, %v138, %v140
    %v146 = vsel %vm143, %v136, %v138
    %v147 = vsel %vm143, %v142, %v136
    %s148 = scalar_lea.vmem [#allocation5], 1
    %v149 = vld [vmem:[%s148] ss:$8 sm:$0xf]
    %v151 = vlaneseq
    %v152 = vshrl.u32 %v151, 7
    %v153 = vsub.s32 0, %v152
    %v154 = vrot.slane %v149, %v153
    %v155 = vlaneseq
    %v156 = vshrl.u32 %v155, 7
    %v157 = vsub.s32 1, %v156
    %v158 = vrot.slane %v149, %v157
    %v159 = vlaneseq
    %v160 = vshrl.u32 %v159, 7
    %v161 = vsub.s32 2, %v160
    %v162 = vrot.slane %v149, %v161
    %v163 = vlaneseq
    %v164 = vshrl.u32 %v163, 7
    %v165 = vsub.s32 3, %v164
    %v166 = vrot.slane %v149, %v165
    %v171 = vmul.f32 %v147, %v154
    %v172 = vmul.f32 %v146, %v158
    %v173 = vmul.f32 %v145, %v162
    %v174 = vmul.f32 %v144, %v166
    %175 = vrot.lane.b32.xlu0 %v86, 15
    %v176 = vpop.permute.xlu0 %175
    %177 = vrot.lane.b32.xlu0 %v90, 15
    %v178 = vpop.permute.xlu0 %177
    %179 = vrot.lane.b32.xlu0 %v87, 15
    %v180 = vpop.permute.xlu0 %179
    %181 = vrot.lane.b32.xlu0 %v91, 15
    %v182 = vpop.permute.xlu0 %181
    %vm183 = vcmp.lt.s32.totalorder %v103, 15
    %v184 = vsel %vm183, %v180, %v182
    %v185 = vsel %vm183, %v178, %v180
    %v186 = vsel %vm183, %v176, %v178
    %v187 = vsel %vm183, %v182, %v176
    %s188 = scalar_lea.vmem [#allocation5], 2
    %v189 = vld [vmem:[%s188] ss:$8 sm:$0xf]
    %v191 = vlaneseq
    %v192 = vshrl.u32 %v191, 7
    %v193 = vsub.s32 0, %v192
    %v194 = vrot.slane %v189, %v193
    %v195 = vlaneseq
    %v196 = vshrl.u32 %v195, 7
    %v197 = vsub.s32 1, %v196
    %v198 = vrot.slane %v189, %v197
    %v199 = vlaneseq
    %v200 = vshrl.u32 %v199, 7
    %v201 = vsub.s32 2, %v200
    %v202 = vrot.slane %v189, %v201
    %v203 = vlaneseq
    %v204 = vshrl.u32 %v203, 7
    %v205 = vsub.s32 3, %v204
    %v206 = vrot.slane %v189, %v205
    %v211 = vmul.f32 %v187, %v194
    %v212 = vmul.f32 %v186, %v198
    %v213 = vmul.f32 %v185, %v202
    %v214 = vmul.f32 %v184, %v206
    %215 = vrot.lane.b32.xlu0 %v86, 1
    %v216 = vpop.permute.xlu0 %215
    %217 = vrot.lane.b32.xlu0 %v90, 1
    %v218 = vpop.permute.xlu0 %217
    %219 = vrot.lane.b32.xlu0 %v87, 1
    %v220 = vpop.permute.xlu0 %219
    %221 = vrot.lane.b32.xlu0 %v91, 1
    %v222 = vpop.permute.xlu0 %221
    %vm223 = vcmp.lt.s32.totalorder %v103, 1
    %v224 = vsel %vm223, %v220, %v222
    %v225 = vsel %vm223, %v218, %v220
    %v226 = vsel %vm223, %v216, %v218
    %v227 = vsel %vm223, %v222, %v216
    %s228 = scalar_lea.vmem [#allocation5], 3
    %v229 = vld [vmem:[%s228] ss:$8 sm:$0xf]
    %v231 = vlaneseq
    %v232 = vshrl.u32 %v231, 7
    %v233 = vsub.s32 0, %v232
    %v234 = vrot.slane %v229, %v233
    %v235 = vlaneseq
    %v236 = vshrl.u32 %v235, 7
    %v237 = vsub.s32 1, %v236
    %v238 = vrot.slane %v229, %v237
    %v239 = vlaneseq
    %v240 = vshrl.u32 %v239, 7
    %v241 = vsub.s32 2, %v240
    %v242 = vrot.slane %v229, %v241
    %v243 = vlaneseq
    %v244 = vshrl.u32 %v243, 7
    %v245 = vsub.s32 3, %v244
    %v246 = vrot.slane %v229, %v245
    %v251 = vmul.f32 %v227, %v234
    %v252 = vmul.f32 %v226, %v238
    %v253 = vmul.f32 %v225, %v242
    %v254 = vmul.f32 %v224, %v246
    %255 = vrot.lane.b32.xlu0 %v86, 127
    %v256 = vpop.permute.xlu0 %255
    %257 = vrot.lane.b32.xlu0 %v90, 127
    %v258 = vpop.permute.xlu0 %257
    %259 = vrot.lane.b32.xlu0 %v87, 127
    %v260 = vpop.permute.xlu0 %259
    %261 = vrot.lane.b32.xlu0 %v91, 127
    %v262 = vpop.permute.xlu0 %261
    %vm263 = vcmp.lt.s32.totalorder %v103, 127
    %v264 = vsel %vm263, %v260, %v262
    %v265 = vsel %vm263, %v258, %v260
    %v266 = vsel %vm263, %v256, %v258
    %v267 = vsel %vm263, %v262, %v256
    %s268 = scalar_lea.vmem [#allocation5], 5
    %v269 = vld [vmem:[%s268] ss:$8 sm:$0xf]
    %v271 = vlaneseq
    %v272 = vshrl.u32 %v271, 7
    %v273 = vsub.s32 0, %v272
    %v274 = vrot.slane %v269, %v273
    %v275 = vlaneseq
    %v276 = vshrl.u32 %v275, 7
    %v277 = vsub.s32 1, %v276
    %v278 = vrot.slane %v269, %v277
    %v279 = vlaneseq
    %v280 = vshrl.u32 %v279, 7
    %v281 = vsub.s32 2, %v280
    %v282 = vrot.slane %v269, %v281
    %v283 = vlaneseq
    %v284 = vshrl.u32 %v283, 7
    %v285 = vsub.s32 3, %v284
    %v286 = vrot.slane %v269, %v285
    %v291 = vmul.f32 %v266, %v274
    %v292 = vmul.f32 %v265, %v278
    %v293 = vmul.f32 %v264, %v282
    %v294 = vmul.f32 %v267, %v286
    %295 = vrot.lane.b32.xlu0 %v86, 113
    %v296 = vpop.permute.xlu0 %295
    %297 = vrot.lane.b32.xlu0 %v90, 113
    %v298 = vpop.permute.xlu0 %297
    %299 = vrot.lane.b32.xlu0 %v87, 113
    %v300 = vpop.permute.xlu0 %299
    %301 = vrot.lane.b32.xlu0 %v91, 113
    %v302 = vpop.permute.xlu0 %301
    %vm303 = vcmp.lt.s32.totalorder %v103, 113
    %v304 = vsel %vm303, %v300, %v302
    %v305 = vsel %vm303, %v298, %v300
    %v306 = vsel %vm303, %v296, %v298
    %v307 = vsel %vm303, %v302, %v296
    %s308 = scalar_lea.vmem [#allocation5], 6
    %v309 = vld [vmem:[%s308] ss:$8 sm:$0xf]
    %v311 = vlaneseq
    %v312 = vshrl.u32 %v311, 7
    %v313 = vsub.s32 0, %v312
    %v314 = vrot.slane %v309, %v313
    %v315 = vlaneseq
    %v316 = vshrl.u32 %v315, 7
    %v317 = vsub.s32 1, %v316
    %v318 = vrot.slane %v309, %v317
    %v319 = vlaneseq
    %v320 = vshrl.u32 %v319, 7
    %v321 = vsub.s32 2, %v320
    %v322 = vrot.slane %v309, %v321
    %v323 = vlaneseq
    %v324 = vshrl.u32 %v323, 7
    %v325 = vsub.s32 3, %v324
    %v326 = vrot.slane %v309, %v325
    %v331 = vmul.f32 %v306, %v314
    %v332 = vmul.f32 %v305, %v318
    %v333 = vmul.f32 %v304, %v322
    %v334 = vmul.f32 %v307, %v326
    %335 = vrot.lane.b32.xlu0 %v86, 112
    %v336 = vpop.permute.xlu0 %335
    %337 = vrot.lane.b32.xlu0 %v90, 112
    %v338 = vpop.permute.xlu0 %337
    %339 = vrot.lane.b32.xlu0 %v87, 112
    %v340 = vpop.permute.xlu0 %339
    %341 = vrot.lane.b32.xlu0 %v91, 112
    %v342 = vpop.permute.xlu0 %341
    %vm343 = vcmp.lt.s32.totalorder %v103, 112
    %v344 = vsel %vm343, %v340, %v342
    %v345 = vsel %vm343, %v338, %v340
    %v346 = vsel %vm343, %v336, %v338
    %v347 = vsel %vm343, %v342, %v336
    %s348 = scalar_lea.vmem [#allocation5], 7
    %v349 = vld [vmem:[%s348] ss:$8 sm:$0xf]
    %v351 = vlaneseq
    %v352 = vshrl.u32 %v351, 7
    %v353 = vsub.s32 0, %v352
    %v354 = vrot.slane %v349, %v353
    %v355 = vlaneseq
    %v356 = vshrl.u32 %v355, 7
    %v357 = vsub.s32 1, %v356
    %v358 = vrot.slane %v349, %v357
    %v359 = vlaneseq
    %v360 = vshrl.u32 %v359, 7
    %v361 = vsub.s32 2, %v360
    %v362 = vrot.slane %v349, %v361
    %v363 = vlaneseq
    %v364 = vshrl.u32 %v363, 7
    %v365 = vsub.s32 3, %v364
    %v366 = vrot.slane %v349, %v365
    %v371 = vmul.f32 %v346, %v354
    %v372 = vmul.f32 %v345, %v358
    %v373 = vmul.f32 %v344, %v362
    %v374 = vmul.f32 %v347, %v366
    %375 = vrot.lane.b32.xlu0 %v86, 111
    %v376 = vpop.permute.xlu0 %375
    %377 = vrot.lane.b32.xlu0 %v90, 111
    %v378 = vpop.permute.xlu0 %377
    %379 = vrot.lane.b32.xlu0 %v87, 111
    %v380 = vpop.permute.xlu0 %379
    %381 = vrot.lane.b32.xlu0 %v91, 111
    %v382 = vpop.permute.xlu0 %381
    %vm383 = vcmp.lt.s32.totalorder %v103, 111
    %v384 = vsel %vm383, %v380, %v382
    %v385 = vsel %vm383, %v378, %v380
    %v386 = vsel %vm383, %v376, %v378
    %v387 = vsel %vm383, %v382, %v376
    %s388 = scalar_lea.vmem [#allocation5], 32
    %v389 = vld [vmem:[%s388] ss:$8 sm:$0xf]
    %v391 = vlaneseq
    %v392 = vshrl.u32 %v391, 7
    %v393 = vsub.s32 0, %v392
    %v394 = vrot.slane %v389, %v393
    %v395 = vlaneseq
    %v396 = vshrl.u32 %v395, 7
    %v397 = vsub.s32 1, %v396
    %v398 = vrot.slane %v389, %v397
    %v399 = vlaneseq
    %v400 = vshrl.u32 %v399, 7
    %v401 = vsub.s32 2, %v400
    %v402 = vrot.slane %v389, %v401
    %v403 = vlaneseq
    %v404 = vshrl.u32 %v403, 7
    %v405 = vsub.s32 3, %v404
    %v406 = vrot.slane %v389, %v405
    %v411 = vmul.f32 %v386, %v394
    %v412 = vmul.f32 %v385, %v398
    %v413 = vmul.f32 %v384, %v402
    %v414 = vmul.f32 %v387, %v406
    %v415 = vlaneseq
    %v416 = vshrl.u32 %v415, 7
    %v417 = vsub.s32 0, %v416
    %v418 = vrot.slane %v131, %v417
    %v419 = vlaneseq
    %v420 = vshrl.u32 %v419, 7
    %v421 = vsub.s32 0, %v420
    %v422 = vrot.slane %v132, %v421
    %v423 = vlaneseq
    %v424 = vshrl.u32 %v423, 7
    %v425 = vsub.s32 0, %v424
    %v426 = vrot.slane %v133, %v425
    %v427 = vlaneseq
    %v428 = vshrl.u32 %v427, 7
    %v429 = vsub.s32 0, %v428
    %v430 = vrot.slane %v134, %v429
    %431 = vset.pattern.permute.xlu0 0
    %432 = vperm.xlu0 %431, %v52
    %v433 = vpop.permute.xlu0 %432
    %v435 = vmul.f32 %v418, %v433
    %v436 = vmul.f32 %v422, %v433
    %v437 = vmul.f32 %v426, %v433
    %v438 = vmul.f32 %v430, %v433
    %v439 = vadd.f32 %v435, 0.0
    %v440 = vadd.f32 %v436, 0.0
    %v441 = vadd.f32 %v437, 0.0
    %v442 = vadd.f32 %v438, 0.0
    %v443 = vlaneseq
    %v444 = vshrl.u32 %v443, 7
    %v445 = vsub.s32 0, %v444
    %v446 = vrot.slane %v171, %v445
    %v447 = vlaneseq
    %v448 = vshrl.u32 %v447, 7
    %v449 = vsub.s32 0, %v448
    %v450 = vrot.slane %v172, %v449
    %v451 = vlaneseq
    %v452 = vshrl.u32 %v451, 7
    %v453 = vsub.s32 0, %v452
    %v454 = vrot.slane %v173, %v453
    %v455 = vlaneseq
    %v456 = vshrl.u32 %v455, 7
    %v457 = vsub.s32 0, %v456
    %v458 = vrot.slane %v174, %v457
    %459 = vset.pattern.permute.xlu0 4
    %460 = vperm.xlu0 %459, %v52
    %v461 = vpop.permute.xlu0 %460
    %v463 = vmul.f32 %v446, %v461
    %v464 = vmul.f32 %v450, %v461
    %v465 = vmul.f32 %v454, %v461
    %v466 = vmul.f32 %v458, %v461
    %v467 = vadd.f32 %v439, %v463
    %v468 = vadd.f32 %v440, %v464
    %v469 = vadd.f32 %v441, %v465
    %v470 = vadd.f32 %v442, %v466
    %v471 = vlaneseq
    %v472 = vshrl.u32 %v471, 7
    %v473 = vsub.s32 0, %v472
    %v474 = vrot.slane %v211, %v473
    %v475 = vlaneseq
    %v476 = vshrl.u32 %v475, 7
    %v477 = vsub.s32 0, %v476
    %v478 = vrot.slane %v212, %v477
    %v479 = vlaneseq
    %v480 = vshrl.u32 %v479, 7
    %v481 = vsub.s32 0, %v480
    %v482 = vrot.slane %v213, %v481
    %v483 = vlaneseq
    %v484 = vshrl.u32 %v483, 7
    %v485 = vsub.s32 0, %v484
    %v486 = vrot.slane %v214, %v485
    %487 = vset.pattern.permute.xlu0 8
    %488 = vperm.xlu0 %487, %v52
    %v489 = vpop.permute.xlu0 %488
    %v491 = vmul.f32 %v474, %v489
    %v492 = vmul.f32 %v478, %v489
    %v493 = vmul.f32 %v482, %v489
    %v494 = vmul.f32 %v486, %v489
    %v495 = vadd.f32 %v467, %v491
    %v496 = vadd.f32 %v468, %v492
    %v497 = vadd.f32 %v469, %v493
    %v498 = vadd.f32 %v470, %v494
    %v499 = vlaneseq
    %v500 = vshrl.u32 %v499, 7
    %v501 = vsub.s32 0, %v500
    %v502 = vrot.slane %v251, %v501
    %v503 = vlaneseq
    %v504 = vshrl.u32 %v503, 7
    %v505 = vsub.s32 0, %v504
    %v506 = vrot.slane %v252, %v505
    %v507 = vlaneseq
    %v508 = vshrl.u32 %v507, 7
    %v509 = vsub.s32 0, %v508
    %v510 = vrot.slane %v253, %v509
    %v511 = vlaneseq
    %v512 = vshrl.u32 %v511, 7
    %v513 = vsub.s32 0, %v512
    %v514 = vrot.slane %v254, %v513
    %515 = vset.pattern.permute.xlu0 12
    %516 = vperm.xlu0 %515, %v52
    %v517 = vpop.permute.xlu0 %516
    %v519 = vmul.f32 %v502, %v517
    %v520 = vmul.f32 %v506, %v517
    %v521 = vmul.f32 %v510, %v517
    %v522 = vmul.f32 %v514, %v517
    %v523 = vadd.f32 %v495, %v519
    %v524 = vadd.f32 %v496, %v520
    %v525 = vadd.f32 %v497, %v521
    %v526 = vadd.f32 %v498, %v522
    %v527 = vlaneseq
    %v528 = vshrl.u32 %v527, 7
    %v529 = vsub.s32 0, %v528
    %v530 = vrot.slane %v86, %v529
    %v531 = vlaneseq
    %v532 = vshrl.u32 %v531, 7
    %v533 = vsub.s32 4, %v532
    %v534 = vrot.slane %v86, %v533
    %v535 = vlaneseq
    %v536 = vshrl.u32 %v535, 7
    %v537 = vsub.s32 0, %v536
    %v538 = vrot.slane %v87, %v537
    %v539 = vlaneseq
    %v540 = vshrl.u32 %v539, 7
    %v541 = vsub.s32 4, %v540
    %v542 = vrot.slane %v87, %v541
    %v547 = vlaneseq
    %v548 = vshrl.u32 %v547, 7
    %v549 = vsub.s32 0, %v548
    %v550 = vrot.slane %v530, %v549
    %v551 = vlaneseq
    %v552 = vshrl.u32 %v551, 7
    %v553 = vsub.s32 0, %v552
    %v554 = vrot.slane %v534, %v553
    %v555 = vlaneseq
    %v556 = vshrl.u32 %v555, 7
    %v557 = vsub.s32 0, %v556
    %v558 = vrot.slane %v538, %v557
    %v559 = vlaneseq
    %v560 = vshrl.u32 %v559, 7
    %v561 = vsub.s32 0, %v560
    %v562 = vrot.slane %v542, %v561
    %563 = vset.pattern.permute.xlu0 16
    %564 = vperm.xlu0 %563, %v52
    %v565 = vpop.permute.xlu0 %564
    %v567 = vmul.f32 %v550, %v565
    %v568 = vmul.f32 %v554, %v565
    %v569 = vmul.f32 %v558, %v565
    %v570 = vmul.f32 %v562, %v565
    %v571 = vadd.f32 %v523, %v567
    %v572 = vadd.f32 %v524, %v568
    %v573 = vadd.f32 %v525, %v569
    %v574 = vadd.f32 %v526, %v570
    %v575 = vlaneseq
    %v576 = vshrl.u32 %v575, 7
    %v577 = vsub.s32 0, %v576
    %v578 = vrot.slane %v291, %v577
    %v579 = vlaneseq
    %v580 = vshrl.u32 %v579, 7
    %v581 = vsub.s32 0, %v580
    %v582 = vrot.slane %v292, %v581
    %v583 = vlaneseq
    %v584 = vshrl.u32 %v583, 7
    %v585 = vsub.s32 0, %v584
    %v586 = vrot.slane %v293, %v585
    %v587 = vlaneseq
    %v588 = vshrl.u32 %v587, 7
    %v589 = vsub.s32 0, %v588
    %v590 = vrot.slane %v294, %v589
    %591 = vset.pattern.permute.xlu0 20
    %592 = vperm.xlu0 %591, %v52
    %v593 = vpop.permute.xlu0 %592
    %v595 = vmul.f32 %v578, %v593
    %v596 = vmul.f32 %v582, %v593
    %v597 = vmul.f32 %v586, %v593
    %v598 = vmul.f32 %v590, %v593
    %v599 = vadd.f32 %v571, %v595
    %v600 = vadd.f32 %v572, %v596
    %v601 = vadd.f32 %v573, %v597
    %v602 = vadd.f32 %v574, %v598
    %v603 = vlaneseq
    %v604 = vshrl.u32 %v603, 7
    %v605 = vsub.s32 0, %v604
    %v606 = vrot.slane %v331, %v605
    %v607 = vlaneseq
    %v608 = vshrl.u32 %v607, 7
    %v609 = vsub.s32 0, %v608
    %v610 = vrot.slane %v332, %v609
    %v611 = vlaneseq
    %v612 = vshrl.u32 %v611, 7
    %v613 = vsub.s32 0, %v612
    %v614 = vrot.slane %v333, %v613
    %v615 = vlaneseq
    %v616 = vshrl.u32 %v615, 7
    %v617 = vsub.s32 0, %v616
    %v618 = vrot.slane %v334, %v617
    %619 = vset.pattern.permute.xlu0 24
    %620 = vperm.xlu0 %619, %v52
    %v621 = vpop.permute.xlu0 %620
    %v623 = vmul.f32 %v606, %v621
    %v624 = vmul.f32 %v610, %v621
    %v625 = vmul.f32 %v614, %v621
    %v626 = vmul.f32 %v618, %v621
    %v627 = vadd.f32 %v599, %v623
    %v628 = vadd.f32 %v600, %v624
    %v629 = vadd.f32 %v601, %v625
    %v630 = vadd.f32 %v602, %v626
    %v631 = vlaneseq
    %v632 = vshrl.u32 %v631, 7
    %v633 = vsub.s32 0, %v632
    %v634 = vrot.slane %v371, %v633
    %v635 = vlaneseq
    %v636 = vshrl.u32 %v635, 7
    %v637 = vsub.s32 0, %v636
    %v638 = vrot.slane %v372, %v637
    %v639 = vlaneseq
    %v640 = vshrl.u32 %v639, 7
    %v641 = vsub.s32 0, %v640
    %v642 = vrot.slane %v373, %v641
    %v643 = vlaneseq
    %v644 = vshrl.u32 %v643, 7
    %v645 = vsub.s32 0, %v644
    %v646 = vrot.slane %v374, %v645
    %647 = vset.pattern.permute.xlu0 28
    %648 = vperm.xlu0 %647, %v52
    %v649 = vpop.permute.xlu0 %648
    %v651 = vmul.f32 %v634, %v649
    %v652 = vmul.f32 %v638, %v649
    %v653 = vmul.f32 %v642, %v649
    %v654 = vmul.f32 %v646, %v649
    %v655 = vadd.f32 %v627, %v651
    %v656 = vadd.f32 %v628, %v652
    %v657 = vadd.f32 %v629, %v653
    %v658 = vadd.f32 %v630, %v654
    %v659 = vlaneseq
    %v660 = vshrl.u32 %v659, 7
    %v661 = vsub.s32 0, %v660
    %v662 = vrot.slane %v411, %v661
    %v663 = vlaneseq
    %v664 = vshrl.u32 %v663, 7
    %v665 = vsub.s32 0, %v664
    %v666 = vrot.slane %v412, %v665
    %v667 = vlaneseq
    %v668 = vshrl.u32 %v667, 7
    %v669 = vsub.s32 0, %v668
    %v670 = vrot.slane %v413, %v669
    %v671 = vlaneseq
    %v672 = vshrl.u32 %v671, 7
    %v673 = vsub.s32 0, %v672
    %v674 = vrot.slane %v414, %v673
    %675 = vset.pattern.permute.xlu0 32
    %676 = vperm.xlu0 %675, %v52
    %v677 = vpop.permute.xlu0 %676
    %v679 = vmul.f32 %v662, %v677
    %v680 = vmul.f32 %v666, %v677
    %v681 = vmul.f32 %v670, %v677
    %v682 = vmul.f32 %v674, %v677
    %v683 = vadd.f32 %v655, %v679
    %v684 = vadd.f32 %v656, %v680
    %v685 = vadd.f32 %v657, %v681
    %v686 = vadd.f32 %v658, %v682
    %v687 = vlaneseq
    %v688 = vshrl.u32 %v687, 7
    %v689 = vsub.s32 1, %v688
    %v690 = vrot.slane %v131, %v689
    %v691 = vlaneseq
    %v692 = vshrl.u32 %v691, 7
    %v693 = vsub.s32 1, %v692
    %v694 = vrot.slane %v132, %v693
    %v695 = vlaneseq
    %v696 = vshrl.u32 %v695, 7
    %v697 = vsub.s32 1, %v696
    %v698 = vrot.slane %v133, %v697
    %v699 = vlaneseq
    %v700 = vshrl.u32 %v699, 7
    %v701 = vsub.s32 1, %v700
    %v702 = vrot.slane %v134, %v701
    %703 = vset.pattern.permute.xlu0 1
    %704 = vperm.xlu0 %703, %v52
    %v705 = vpop.permute.xlu0 %704
    %v707 = vmul.f32 %v690, %v705
    %v708 = vmul.f32 %v694, %v705
    %v709 = vmul.f32 %v698, %v705
    %v710 = vmul.f32 %v702, %v705
    %v711 = vadd.f32 %v707, 0.0
    %v712 = vadd.f32 %v708, 0.0
    %v713 = vadd.f32 %v709, 0.0
    %v714 = vadd.f32 %v710, 0.0
    %v715 = vlaneseq
    %v716 = vshrl.u32 %v715, 7
    %v717 = vsub.s32 1, %v716
    %v718 = vrot.slane %v171, %v717
    %v719 = vlaneseq
    %v720 = vshrl.u32 %v719, 7
    %v721 = vsub.s32 1, %v720
    %v722 = vrot.slane %v172, %v721
    %v723 = vlaneseq
    %v724 = vshrl.u32 %v723, 7
    %v725 = vsub.s32 1, %v724
    %v726 = vrot.slane %v173, %v725
    %v727 = vlaneseq
    %v728 = vshrl.u32 %v727, 7
    %v729 = vsub.s32 1, %v728
    %v730 = vrot.slane %v174, %v729
    %731 = vset.pattern.permute.xlu0 5
    %732 = vperm.xlu0 %731, %v52
    %v733 = vpop.permute.xlu0 %732
    %v735 = vmul.f32 %v718, %v733
    %v736 = vmul.f32 %v722, %v733
    %v737 = vmul.f32 %v726, %v733
    %v738 = vmul.f32 %v730, %v733
    %v739 = vadd.f32 %v711, %v735
    %v740 = vadd.f32 %v712, %v736
    %v741 = vadd.f32 %v713, %v737
    %v742 = vadd.f32 %v714, %v738
    %v743 = vlaneseq
    %v744 = vshrl.u32 %v743, 7
    %v745 = vsub.s32 1, %v744
    %v746 = vrot.slane %v211, %v745
    %v747 = vlaneseq
    %v748 = vshrl.u32 %v747, 7
    %v749 = vsub.s32 1, %v748
    %v750 = vrot.slane %v212, %v749
    %v751 = vlaneseq
    %v752 = vshrl.u32 %v751, 7
    %v753 = vsub.s32 1, %v752
    %v754 = vrot.slane %v213, %v753
    %v755 = vlaneseq
    %v756 = vshrl.u32 %v755, 7
    %v757 = vsub.s32 1, %v756
    %v758 = vrot.slane %v214, %v757
    %759 = vset.pattern.permute.xlu0 9
    %760 = vperm.xlu0 %759, %v52
    %v761 = vpop.permute.xlu0 %760
    %v763 = vmul.f32 %v746, %v761
    %v764 = vmul.f32 %v750, %v761
    %v765 = vmul.f32 %v754, %v761
    %v766 = vmul.f32 %v758, %v761
    %v767 = vadd.f32 %v739, %v763
    %v768 = vadd.f32 %v740, %v764
    %v769 = vadd.f32 %v741, %v765
    %v770 = vadd.f32 %v742, %v766
    %v771 = vlaneseq
    %v772 = vshrl.u32 %v771, 7
    %v773 = vsub.s32 1, %v772
    %v774 = vrot.slane %v251, %v773
    %v775 = vlaneseq
    %v776 = vshrl.u32 %v775, 7
    %v777 = vsub.s32 1, %v776
    %v778 = vrot.slane %v252, %v777
    %v779 = vlaneseq
    %v780 = vshrl.u32 %v779, 7
    %v781 = vsub.s32 1, %v780
    %v782 = vrot.slane %v253, %v781
    %v783 = vlaneseq
    %v784 = vshrl.u32 %v783, 7
    %v785 = vsub.s32 1, %v784
    %v786 = vrot.slane %v254, %v785
    %787 = vset.pattern.permute.xlu0 13
    %788 = vperm.xlu0 %787, %v52
    %v789 = vpop.permute.xlu0 %788
    %v791 = vmul.f32 %v774, %v789
    %v792 = vmul.f32 %v778, %v789
    %v793 = vmul.f32 %v782, %v789
    %v794 = vmul.f32 %v786, %v789
    %v795 = vadd.f32 %v767, %v791
    %v796 = vadd.f32 %v768, %v792
    %v797 = vadd.f32 %v769, %v793
    %v798 = vadd.f32 %v770, %v794
    %v799 = vlaneseq
    %v800 = vshrl.u32 %v799, 7
    %v801 = vsub.s32 1, %v800
    %v802 = vrot.slane %v86, %v801
    %v803 = vlaneseq
    %v804 = vshrl.u32 %v803, 7
    %v805 = vsub.s32 5, %v804
    %v806 = vrot.slane %v86, %v805
    %v807 = vlaneseq
    %v808 = vshrl.u32 %v807, 7
    %v809 = vsub.s32 1, %v808
    %v810 = vrot.slane %v87, %v809
    %v811 = vlaneseq
    %v812 = vshrl.u32 %v811, 7
    %v813 = vsub.s32 5, %v812
    %v814 = vrot.slane %v87, %v813
    %v819 = vlaneseq
    %v820 = vshrl.u32 %v819, 7
    %v821 = vsub.s32 1, %v820
    %v822 = vrot.slane %v802, %v821
    %v823 = vlaneseq
    %v824 = vshrl.u32 %v823, 7
    %v825 = vsub.s32 1, %v824
    %v826 = vrot.slane %v806, %v825
    %v827 = vlaneseq
    %v828 = vshrl.u32 %v827, 7
    %v829 = vsub.s32 1, %v828
    %v830 = vrot.slane %v810, %v829
    %v831 = vlaneseq
    %v832 = vshrl.u32 %v831, 7
    %v833 = vsub.s32 1, %v832
    %v834 = vrot.slane %v814, %v833
    %835 = vset.pattern.permute.xlu0 17
    %836 = vperm.xlu0 %835, %v52
    %v837 = vpop.permute.xlu0 %836
    %v839 = vmul.f32 %v822, %v837
    %v840 = vmul.f32 %v826, %v837
    %v841 = vmul.f32 %v830, %v837
    %v842 = vmul.f32 %v834, %v837
    %v843 = vadd.f32 %v795, %v839
    %v844 = vadd.f32 %v796, %v840
    %v845 = vadd.f32 %v797, %v841
    %v846 = vadd.f32 %v798, %v842
    %v847 = vlaneseq
    %v848 = vshrl.u32 %v847, 7
    %v849 = vsub.s32 1, %v848
    %v850 = vrot.slane %v291, %v849
    %v851 = vlaneseq
    %v852 = vshrl.u32 %v851, 7
    %v853 = vsub.s32 1, %v852
    %v854 = vrot.slane %v292, %v853
    %v855 = vlaneseq
    %v856 = vshrl.u32 %v855, 7
    %v857 = vsub.s32 1, %v856
    %v858 = vrot.slane %v293, %v857
    %v859 = vlaneseq
    %v860 = vshrl.u32 %v859, 7
    %v861 = vsub.s32 1, %v860
    %v862 = vrot.slane %v294, %v861
    %863 = vset.pattern.permute.xlu0 21
    %864 = vperm.xlu0 %863, %v52
    %v865 = vpop.permute.xlu0 %864
    %v867 = vmul.f32 %v850, %v865
    %v868 = vmul.f32 %v854, %v865
    %v869 = vmul.f32 %v858, %v865
    %v870 = vmul.f32 %v862, %v865
    %v871 = vadd.f32 %v843, %v867
    %v872 = vadd.f32 %v844, %v868
    %v873 = vadd.f32 %v845, %v869
    %v874 = vadd.f32 %v846, %v870
    %v875 = vlaneseq
    %v876 = vshrl.u32 %v875, 7
    %v877 = vsub.s32 1, %v876
    %v878 = vrot.slane %v331, %v877
    %v879 = vlaneseq
    %v880 = vshrl.u32 %v879, 7
    %v881 = vsub.s32 1, %v880
    %v882 = vrot.slane %v332, %v881
    %v883 = vlaneseq
    %v884 = vshrl.u32 %v883, 7
    %v885 = vsub.s32 1, %v884
    %v886 = vrot.slane %v333, %v885
    %v887 = vlaneseq
    %v888 = vshrl.u32 %v887, 7
    %v889 = vsub.s32 1, %v888
    %v890 = vrot.slane %v334, %v889
    %891 = vset.pattern.permute.xlu0 25
    %892 = vperm.xlu0 %891, %v52
    %v893 = vpop.permute.xlu0 %892
    %v895 = vmul.f32 %v878, %v893
    %v896 = vmul.f32 %v882, %v893
    %v897 = vmul.f32 %v886, %v893
    %v898 = vmul.f32 %v890, %v893
    %v899 = vadd.f32 %v871, %v895
    %v900 = vadd.f32 %v872, %v896
    %v901 = vadd.f32 %v873, %v897
    %v902 = vadd.f32 %v874, %v898
    %v903 = vlaneseq
    %v904 = vshrl.u32 %v903, 7
    %v905 = vsub.s32 1, %v904
    %v906 = vrot.slane %v371, %v905
    %v907 = vlaneseq
    %v908 = vshrl.u32 %v907, 7
    %v909 = vsub.s32 1, %v908
    %v910 = vrot.slane %v372, %v909
    %v911 = vlaneseq
    %v912 = vshrl.u32 %v911, 7
    %v913 = vsub.s32 1, %v912
    %v914 = vrot.slane %v373, %v913
    %v915 = vlaneseq
    %v916 = vshrl.u32 %v915, 7
    %v917 = vsub.s32 1, %v916
    %v918 = vrot.slane %v374, %v917
    %919 = vset.pattern.permute.xlu0 29
    %920 = vperm.xlu0 %919, %v52
    %v921 = vpop.permute.xlu0 %920
    %v923 = vmul.f32 %v906, %v921
    %v924 = vmul.f32 %v910, %v921
    %v925 = vmul.f32 %v914, %v921
    %v926 = vmul.f32 %v918, %v921
    %v927 = vadd.f32 %v899, %v923
    %v928 = vadd.f32 %v900, %v924
    %v929 = vadd.f32 %v901, %v925
    %v930 = vadd.f32 %v902, %v926
    %v931 = vlaneseq
    %v932 = vshrl.u32 %v931, 7
    %v933 = vsub.s32 1, %v932
    %v934 = vrot.slane %v411, %v933
    %v935 = vlaneseq
    %v936 = vshrl.u32 %v935, 7
    %v937 = vsub.s32 1, %v936
    %v938 = vrot.slane %v412, %v937
    %v939 = vlaneseq
    %v940 = vshrl.u32 %v939, 7
    %v941 = vsub.s32 1, %v940
    %v942 = vrot.slane %v413, %v941
    %v943 = vlaneseq
    %v944 = vshrl.u32 %v943, 7
    %v945 = vsub.s32 1, %v944
    %v946 = vrot.slane %v414, %v945
    %947 = vset.pattern.permute.xlu0 33
    %948 = vperm.xlu0 %947, %v52
    %v949 = vpop.permute.xlu0 %948
    %v951 = vmul.f32 %v934, %v949
    %v952 = vmul.f32 %v938, %v949
    %v953 = vmul.f32 %v942, %v949
    %v954 = vmul.f32 %v946, %v949
    %v955 = vadd.f32 %v927, %v951
    %v956 = vadd.f32 %v928, %v952
    %v957 = vadd.f32 %v929, %v953
    %v958 = vadd.f32 %v930, %v954
    %v959 = vlaneseq
    %v960 = vshrl.u32 %v959, 7
    %v961 = vsub.s32 2, %v960
    %v962 = vrot.slane %v131, %v961
    %v963 = vlaneseq
    %v964 = vshrl.u32 %v963, 7
    %v965 = vsub.s32 2, %v964
    %v966 = vrot.slane %v132, %v965
    %v967 = vlaneseq
    %v968 = vshrl.u32 %v967, 7
    %v969 = vsub.s32 2, %v968
    %v970 = vrot.slane %v133, %v969
    %v971 = vlaneseq
    %v972 = vshrl.u32 %v971, 7
    %v973 = vsub.s32 2, %v972
    %v974 = vrot.slane %v134, %v973
    %975 = vset.pattern.permute.xlu0 2
    %976 = vperm.xlu0 %975, %v52
    %v977 = vpop.permute.xlu0 %976
    %v979 = vmul.f32 %v962, %v977
    %v980 = vmul.f32 %v966, %v977
    %v981 = vmul.f32 %v970, %v977
    %v982 = vmul.f32 %v974, %v977
    %v983 = vadd.f32 %v979, 0.0
    %v984 = vadd.f32 %v980, 0.0
    %v985 = vadd.f32 %v981, 0.0
    %v986 = vadd.f32 %v982, 0.0
    %v987 = vlaneseq
    %v988 = vshrl.u32 %v987, 7
    %v989 = vsub.s32 2, %v988
    %v990 = vrot.slane %v171, %v989
    %v991 = vlaneseq
    %v992 = vshrl.u32 %v991, 7
    %v993 = vsub.s32 2, %v992
    %v994 = vrot.slane %v172, %v993
    %v995 = vlaneseq
    %v996 = vshrl.u32 %v995, 7
    %v997 = vsub.s32 2, %v996
    %v998 = vrot.slane %v173, %v997
    %v999 = vlaneseq
    %v1000 = vshrl.u32 %v999, 7
    %v1001 = vsub.s32 2, %v1000
    %v1002 = vrot.slane %v174, %v1001
    %1003 = vset.pattern.permute.xlu0 6
    %1004 = vperm.xlu0 %1003, %v52
    %v1005 = vpop.permute.xlu0 %1004
    %v1007 = vmul.f32 %v990, %v1005
    %v1008 = vmul.f32 %v994, %v1005
    %v1009 = vmul.f32 %v998, %v1005
    %v1010 = vmul.f32 %v1002, %v1005
    %v1011 = vadd.f32 %v983, %v1007
    %v1012 = vadd.f32 %v984, %v1008
    %v1013 = vadd.f32 %v985, %v1009
    %v1014 = vadd.f32 %v986, %v1010
    %v1015 = vlaneseq
    %v1016 = vshrl.u32 %v1015, 7
    %v1017 = vsub.s32 2, %v1016
    %v1018 = vrot.slane %v211, %v1017
    %v1019 = vlaneseq
    %v1020 = vshrl.u32 %v1019, 7
    %v1021 = vsub.s32 2, %v1020
    %v1022 = vrot.slane %v212, %v1021
    %v1023 = vlaneseq
    %v1024 = vshrl.u32 %v1023, 7
    %v1025 = vsub.s32 2, %v1024
    %v1026 = vrot.slane %v213, %v1025
    %v1027 = vlaneseq
    %v1028 = vshrl.u32 %v1027, 7
    %v1029 = vsub.s32 2, %v1028
    %v1030 = vrot.slane %v214, %v1029
    %1031 = vset.pattern.permute.xlu0 10
    %1032 = vperm.xlu0 %1031, %v52
    %v1033 = vpop.permute.xlu0 %1032
    %v1035 = vmul.f32 %v1018, %v1033
    %v1036 = vmul.f32 %v1022, %v1033
    %v1037 = vmul.f32 %v1026, %v1033
    %v1038 = vmul.f32 %v1030, %v1033
    %v1039 = vadd.f32 %v1011, %v1035
    %v1040 = vadd.f32 %v1012, %v1036
    %v1041 = vadd.f32 %v1013, %v1037
    %v1042 = vadd.f32 %v1014, %v1038
    %v1043 = vlaneseq
    %v1044 = vshrl.u32 %v1043, 7
    %v1045 = vsub.s32 2, %v1044
    %v1046 = vrot.slane %v251, %v1045
    %v1047 = vlaneseq
    %v1048 = vshrl.u32 %v1047, 7
    %v1049 = vsub.s32 2, %v1048
    %v1050 = vrot.slane %v252, %v1049
    %v1051 = vlaneseq
    %v1052 = vshrl.u32 %v1051, 7
    %v1053 = vsub.s32 2, %v1052
    %v1054 = vrot.slane %v253, %v1053
    %v1055 = vlaneseq
    %v1056 = vshrl.u32 %v1055, 7
    %v1057 = vsub.s32 2, %v1056
    %v1058 = vrot.slane %v254, %v1057
    %1059 = vset.pattern.permute.xlu0 14
    %1060 = vperm.xlu0 %1059, %v52
    %v1061 = vpop.permute.xlu0 %1060
    %v1063 = vmul.f32 %v1046, %v1061
    %v1064 = vmul.f32 %v1050, %v1061
    %v1065 = vmul.f32 %v1054, %v1061
    %v1066 = vmul.f32 %v1058, %v1061
    %v1067 = vadd.f32 %v1039, %v1063
    %v1068 = vadd.f32 %v1040, %v1064
    %v1069 = vadd.f32 %v1041, %v1065
    %v1070 = vadd.f32 %v1042, %v1066
    %v1071 = vlaneseq
    %v1072 = vshrl.u32 %v1071, 7
    %v1073 = vsub.s32 2, %v1072
    %v1074 = vrot.slane %v86, %v1073
    %v1075 = vlaneseq
    %v1076 = vshrl.u32 %v1075, 7
    %v1077 = vsub.s32 6, %v1076
    %v1078 = vrot.slane %v86, %v1077
    %v1079 = vlaneseq
    %v1080 = vshrl.u32 %v1079, 7
    %v1081 = vsub.s32 2, %v1080
    %v1082 = vrot.slane %v87, %v1081
    %v1083 = vlaneseq
    %v1084 = vshrl.u32 %v1083, 7
    %v1085 = vsub.s32 6, %v1084
    %v1086 = vrot.slane %v87, %v1085
    %v1091 = vlaneseq
    %v1092 = vshrl.u32 %v1091, 7
    %v1093 = vsub.s32 2, %v1092
    %v1094 = vrot.slane %v1074, %v1093
    %v1095 = vlaneseq
    %v1096 = vshrl.u32 %v1095, 7
    %v1097 = vsub.s32 2, %v1096
    %v1098 = vrot.slane %v1078, %v1097
    %v1099 = vlaneseq
    %v1100 = vshrl.u32 %v1099, 7
    %v1101 = vsub.s32 2, %v1100
    %v1102 = vrot.slane %v1082, %v1101
    %v1103 = vlaneseq
    %v1104 = vshrl.u32 %v1103, 7
    %v1105 = vsub.s32 2, %v1104
    %v1106 = vrot.slane %v1086, %v1105
    %1107 = vset.pattern.permute.xlu0 18
    %1108 = vperm.xlu0 %1107, %v52
    %v1109 = vpop.permute.xlu0 %1108
    %v1111 = vmul.f32 %v1094, %v1109
    %v1112 = vmul.f32 %v1098, %v1109
    %v1113 = vmul.f32 %v1102, %v1109
    %v1114 = vmul.f32 %v1106, %v1109
    %v1115 = vadd.f32 %v1067, %v1111
    %v1116 = vadd.f32 %v1068, %v1112
    %v1117 = vadd.f32 %v1069, %v1113
    %v1118 = vadd.f32 %v1070, %v1114
    %v1119 = vlaneseq
    %v1120 = vshrl.u32 %v1119, 7
    %v1121 = vsub.s32 2, %v1120
    %v1122 = vrot.slane %v291, %v1121
    %v1123 = vlaneseq
    %v1124 = vshrl.u32 %v1123, 7
    %v1125 = vsub.s32 2, %v1124
    %v1126 = vrot.slane %v292, %v1125
    %v1127 = vlaneseq
    %v1128 = vshrl.u32 %v1127, 7
    %v1129 = vsub.s32 2, %v1128
    %v1130 = vrot.slane %v293, %v1129
    %v1131 = vlaneseq
    %v1132 = vshrl.u32 %v1131, 7
    %v1133 = vsub.s32 2, %v1132
    %v1134 = vrot.slane %v294, %v1133
    %1135 = vset.pattern.permute.xlu0 22
    %1136 = vperm.xlu0 %1135, %v52
    %v1137 = vpop.permute.xlu0 %1136
    %v1139 = vmul.f32 %v1122, %v1137
    %v1140 = vmul.f32 %v1126, %v1137
    %v1141 = vmul.f32 %v1130, %v1137
    %v1142 = vmul.f32 %v1134, %v1137
    %v1143 = vadd.f32 %v1115, %v1139
    %v1144 = vadd.f32 %v1116, %v1140
    %v1145 = vadd.f32 %v1117, %v1141
    %v1146 = vadd.f32 %v1118, %v1142
    %v1147 = vlaneseq
    %v1148 = vshrl.u32 %v1147, 7
    %v1149 = vsub.s32 2, %v1148
    %v1150 = vrot.slane %v331, %v1149
    %v1151 = vlaneseq
    %v1152 = vshrl.u32 %v1151, 7
    %v1153 = vsub.s32 2, %v1152
    %v1154 = vrot.slane %v332, %v1153
    %v1155 = vlaneseq
    %v1156 = vshrl.u32 %v1155, 7
    %v1157 = vsub.s32 2, %v1156
    %v1158 = vrot.slane %v333, %v1157
    %v1159 = vlaneseq
    %v1160 = vshrl.u32 %v1159, 7
    %v1161 = vsub.s32 2, %v1160
    %v1162 = vrot.slane %v334, %v1161
    %1163 = vset.pattern.permute.xlu0 26
    %1164 = vperm.xlu0 %1163, %v52
    %v1165 = vpop.permute.xlu0 %1164
    %v1167 = vmul.f32 %v1150, %v1165
    %v1168 = vmul.f32 %v1154, %v1165
    %v1169 = vmul.f32 %v1158, %v1165
    %v1170 = vmul.f32 %v1162, %v1165
    %v1171 = vadd.f32 %v1143, %v1167
    %v1172 = vadd.f32 %v1144, %v1168
    %v1173 = vadd.f32 %v1145, %v1169
    %v1174 = vadd.f32 %v1146, %v1170
    %v1175 = vlaneseq
    %v1176 = vshrl.u32 %v1175, 7
    %v1177 = vsub.s32 2, %v1176
    %v1178 = vrot.slane %v371, %v1177
    %v1179 = vlaneseq
    %v1180 = vshrl.u32 %v1179, 7
    %v1181 = vsub.s32 2, %v1180
    %v1182 = vrot.slane %v372, %v1181
    %v1183 = vlaneseq
    %v1184 = vshrl.u32 %v1183, 7
    %v1185 = vsub.s32 2, %v1184
    %v1186 = vrot.slane %v373, %v1185
    %v1187 = vlaneseq
    %v1188 = vshrl.u32 %v1187, 7
    %v1189 = vsub.s32 2, %v1188
    %v1190 = vrot.slane %v374, %v1189
    %1191 = vset.pattern.permute.xlu0 30
    %1192 = vperm.xlu0 %1191, %v52
    %v1193 = vpop.permute.xlu0 %1192
    %v1195 = vmul.f32 %v1178, %v1193
    %v1196 = vmul.f32 %v1182, %v1193
    %v1197 = vmul.f32 %v1186, %v1193
    %v1198 = vmul.f32 %v1190, %v1193
    %v1199 = vadd.f32 %v1171, %v1195
    %v1200 = vadd.f32 %v1172, %v1196
    %v1201 = vadd.f32 %v1173, %v1197
    %v1202 = vadd.f32 %v1174, %v1198
    %v1203 = vlaneseq
    %v1204 = vshrl.u32 %v1203, 7
    %v1205 = vsub.s32 2, %v1204
    %v1206 = vrot.slane %v411, %v1205
    %v1207 = vlaneseq
    %v1208 = vshrl.u32 %v1207, 7
    %v1209 = vsub.s32 2, %v1208
    %v1210 = vrot.slane %v412, %v1209
    %v1211 = vlaneseq
    %v1212 = vshrl.u32 %v1211, 7
    %v1213 = vsub.s32 2, %v1212
    %v1214 = vrot.slane %v413, %v1213
    %v1215 = vlaneseq
    %v1216 = vshrl.u32 %v1215, 7
    %v1217 = vsub.s32 2, %v1216
    %v1218 = vrot.slane %v414, %v1217
    %1219 = vset.pattern.permute.xlu0 34
    %1220 = vperm.xlu0 %1219, %v52
    %v1221 = vpop.permute.xlu0 %1220
    %v1223 = vmul.f32 %v1206, %v1221
    %v1224 = vmul.f32 %v1210, %v1221
    %v1225 = vmul.f32 %v1214, %v1221
    %v1226 = vmul.f32 %v1218, %v1221
    %v1227 = vadd.f32 %v1199, %v1223
    %v1228 = vadd.f32 %v1200, %v1224
    %v1229 = vadd.f32 %v1201, %v1225
    %v1230 = vadd.f32 %v1202, %v1226
    %v1231 = vlaneseq
    %v1232 = vshrl.u32 %v1231, 7
    %v1233 = vsub.s32 3, %v1232
    %v1234 = vrot.slane %v131, %v1233
    %v1235 = vlaneseq
    %v1236 = vshrl.u32 %v1235, 7
    %v1237 = vsub.s32 3, %v1236
    %v1238 = vrot.slane %v132, %v1237
    %v1239 = vlaneseq
    %v1240 = vshrl.u32 %v1239, 7
    %v1241 = vsub.s32 3, %v1240
    %v1242 = vrot.slane %v133, %v1241
    %v1243 = vlaneseq
    %v1244 = vshrl.u32 %v1243, 7
    %v1245 = vsub.s32 3, %v1244
    %v1246 = vrot.slane %v134, %v1245
    %1247 = vset.pattern.permute.xlu0 3
    %1248 = vperm.xlu0 %1247, %v52
    %v1249 = vpop.permute.xlu0 %1248
    %v1251 = vmul.f32 %v1234, %v1249
    %v1252 = vmul.f32 %v1238, %v1249
    %v1253 = vmul.f32 %v1242, %v1249
    %v1254 = vmul.f32 %v1246, %v1249
    %v1255 = vadd.f32 %v1251, 0.0
    %v1256 = vadd.f32 %v1252, 0.0
    %v1257 = vadd.f32 %v1253, 0.0
    %v1258 = vadd.f32 %v1254, 0.0
    %v1259 = vlaneseq
    %v1260 = vshrl.u32 %v1259, 7
    %v1261 = vsub.s32 3, %v1260
    %v1262 = vrot.slane %v171, %v1261
    %v1263 = vlaneseq
    %v1264 = vshrl.u32 %v1263, 7
    %v1265 = vsub.s32 3, %v1264
    %v1266 = vrot.slane %v172, %v1265
    %v1267 = vlaneseq
    %v1268 = vshrl.u32 %v1267, 7
    %v1269 = vsub.s32 3, %v1268
    %v1270 = vrot.slane %v173, %v1269
    %v1271 = vlaneseq
    %v1272 = vshrl.u32 %v1271, 7
    %v1273 = vsub.s32 3, %v1272
    %v1274 = vrot.slane %v174, %v1273
    %1275 = vset.pattern.permute.xlu0 7
    %1276 = vperm.xlu0 %1275, %v52
    %v1277 = vpop.permute.xlu0 %1276
    %v1279 = vmul.f32 %v1262, %v1277
    %v1280 = vmul.f32 %v1266, %v1277
    %v1281 = vmul.f32 %v1270, %v1277
    %v1282 = vmul.f32 %v1274, %v1277
    %v1283 = vadd.f32 %v1255, %v1279
    %v1284 = vadd.f32 %v1256, %v1280
    %v1285 = vadd.f32 %v1257, %v1281
    %v1286 = vadd.f32 %v1258, %v1282
    %v1287 = vlaneseq
    %v1288 = vshrl.u32 %v1287, 7
    %v1289 = vsub.s32 3, %v1288
    %v1290 = vrot.slane %v211, %v1289
    %v1291 = vlaneseq
    %v1292 = vshrl.u32 %v1291, 7
    %v1293 = vsub.s32 3, %v1292
    %v1294 = vrot.slane %v212, %v1293
    %v1295 = vlaneseq
    %v1296 = vshrl.u32 %v1295, 7
    %v1297 = vsub.s32 3, %v1296
    %v1298 = vrot.slane %v213, %v1297
    %v1299 = vlaneseq
    %v1300 = vshrl.u32 %v1299, 7
    %v1301 = vsub.s32 3, %v1300
    %v1302 = vrot.slane %v214, %v1301
    %1303 = vset.pattern.permute.xlu0 11
    %1304 = vperm.xlu0 %1303, %v52
    %v1305 = vpop.permute.xlu0 %1304
    %v1307 = vmul.f32 %v1290, %v1305
    %v1308 = vmul.f32 %v1294, %v1305
    %v1309 = vmul.f32 %v1298, %v1305
    %v1310 = vmul.f32 %v1302, %v1305
    %v1311 = vadd.f32 %v1283, %v1307
    %v1312 = vadd.f32 %v1284, %v1308
    %v1313 = vadd.f32 %v1285, %v1309
    %v1314 = vadd.f32 %v1286, %v1310
    %v1315 = vlaneseq
    %v1316 = vshrl.u32 %v1315, 7
    %v1317 = vsub.s32 3, %v1316
    %v1318 = vrot.slane %v251, %v1317
    %v1319 = vlaneseq
    %v1320 = vshrl.u32 %v1319, 7
    %v1321 = vsub.s32 3, %v1320
    %v1322 = vrot.slane %v252, %v1321
    %v1323 = vlaneseq
    %v1324 = vshrl.u32 %v1323, 7
    %v1325 = vsub.s32 3, %v1324
    %v1326 = vrot.slane %v253, %v1325
    %v1327 = vlaneseq
    %v1328 = vshrl.u32 %v1327, 7
    %v1329 = vsub.s32 3, %v1328
    %v1330 = vrot.slane %v254, %v1329
    %1331 = vset.pattern.permute.xlu0 15
    %1332 = vperm.xlu0 %1331, %v52
    %v1333 = vpop.permute.xlu0 %1332
    %v1335 = vmul.f32 %v1318, %v1333
    %v1336 = vmul.f32 %v1322, %v1333
    %v1337 = vmul.f32 %v1326, %v1333
    %v1338 = vmul.f32 %v1330, %v1333
    %v1339 = vadd.f32 %v1311, %v1335
    %v1340 = vadd.f32 %v1312, %v1336
    %v1341 = vadd.f32 %v1313, %v1337
    %v1342 = vadd.f32 %v1314, %v1338
    %v1343 = vlaneseq
    %v1344 = vshrl.u32 %v1343, 7
    %v1345 = vsub.s32 3, %v1344
    %v1346 = vrot.slane %v86, %v1345
    %v1347 = vlaneseq
    %v1348 = vshrl.u32 %v1347, 7
    %v1349 = vsub.s32 7, %v1348
    %v1350 = vrot.slane %v86, %v1349
    %v1351 = vlaneseq
    %v1352 = vshrl.u32 %v1351, 7
    %v1353 = vsub.s32 3, %v1352
    %v1354 = vrot.slane %v87, %v1353
    %v1355 = vlaneseq
    %v1356 = vshrl.u32 %v1355, 7
    %v1357 = vsub.s32 7, %v1356
    %v1358 = vrot.slane %v87, %v1357
    %v1363 = vlaneseq
    %v1364 = vshrl.u32 %v1363, 7
    %v1365 = vsub.s32 3, %v1364
    %v1366 = vrot.slane %v1346, %v1365
    %v1367 = vlaneseq
    %v1368 = vshrl.u32 %v1367, 7
    %v1369 = vsub.s32 3, %v1368
    %v1370 = vrot.slane %v1350, %v1369
    %v1371 = vlaneseq
    %v1372 = vshrl.u32 %v1371, 7
    %v1373 = vsub.s32 3, %v1372
    %v1374 = vrot.slane %v1354, %v1373
    %v1375 = vlaneseq
    %v1376 = vshrl.u32 %v1375, 7
    %v1377 = vsub.s32 3, %v1376
    %v1378 = vrot.slane %v1358, %v1377
    %1379 = vset.pattern.permute.xlu0 19
    %1380 = vperm.xlu0 %1379, %v52
    %v1381 = vpop.permute.xlu0 %1380
    %v1383 = vmul.f32 %v1366, %v1381
    %v1384 = vmul.f32 %v1370, %v1381
    %v1385 = vmul.f32 %v1374, %v1381
    %v1386 = vmul.f32 %v1378, %v1381
    %v1387 = vadd.f32 %v1339, %v1383
    %v1388 = vadd.f32 %v1340, %v1384
    %v1389 = vadd.f32 %v1341, %v1385
    %v1390 = vadd.f32 %v1342, %v1386
    %v1391 = vlaneseq
    %v1392 = vshrl.u32 %v1391, 7
    %v1393 = vsub.s32 3, %v1392
    %v1394 = vrot.slane %v291, %v1393
    %v1395 = vlaneseq
    %v1396 = vshrl.u32 %v1395, 7
    %v1397 = vsub.s32 3, %v1396
    %v1398 = vrot.slane %v292, %v1397
    %v1399 = vlaneseq
    %v1400 = vshrl.u32 %v1399, 7
    %v1401 = vsub.s32 3, %v1400
    %v1402 = vrot.slane %v293, %v1401
    %v1403 = vlaneseq
    %v1404 = vshrl.u32 %v1403, 7
    %v1405 = vsub.s32 3, %v1404
    %v1406 = vrot.slane %v294, %v1405
    %1407 = vset.pattern.permute.xlu0 23
    %1408 = vperm.xlu0 %1407, %v52
    %v1409 = vpop.permute.xlu0 %1408
    %v1411 = vmul.f32 %v1394, %v1409
    %v1412 = vmul.f32 %v1398, %v1409
    %v1413 = vmul.f32 %v1402, %v1409
    %v1414 = vmul.f32 %v1406, %v1409
    %v1415 = vadd.f32 %v1387, %v1411
    %v1416 = vadd.f32 %v1388, %v1412
    %v1417 = vadd.f32 %v1389, %v1413
    %v1418 = vadd.f32 %v1390, %v1414
    %v1419 = vlaneseq
    %v1420 = vshrl.u32 %v1419, 7
    %v1421 = vsub.s32 3, %v1420
    %v1422 = vrot.slane %v331, %v1421
    %v1423 = vlaneseq
    %v1424 = vshrl.u32 %v1423, 7
    %v1425 = vsub.s32 3, %v1424
    %v1426 = vrot.slane %v332, %v1425
    %v1427 = vlaneseq
    %v1428 = vshrl.u32 %v1427, 7
    %v1429 = vsub.s32 3, %v1428
    %v1430 = vrot.slane %v333, %v1429
    %v1431 = vlaneseq
    %v1432 = vshrl.u32 %v1431, 7
    %v1433 = vsub.s32 3, %v1432
    %v1434 = vrot.slane %v334, %v1433
    %1435 = vset.pattern.permute.xlu0 27
    %1436 = vperm.xlu0 %1435, %v52
    %v1437 = vpop.permute.xlu0 %1436
    %v1439 = vmul.f32 %v1422, %v1437
    %v1440 = vmul.f32 %v1426, %v1437
    %v1441 = vmul.f32 %v1430, %v1437
    %v1442 = vmul.f32 %v1434, %v1437
    %v1443 = vadd.f32 %v1415, %v1439
    %v1444 = vadd.f32 %v1416, %v1440
    %v1445 = vadd.f32 %v1417, %v1441
    %v1446 = vadd.f32 %v1418, %v1442
    %v1447 = vlaneseq
    %v1448 = vshrl.u32 %v1447, 7
    %v1449 = vsub.s32 3, %v1448
    %v1450 = vrot.slane %v371, %v1449
    %v1451 = vlaneseq
    %v1452 = vshrl.u32 %v1451, 7
    %v1453 = vsub.s32 3, %v1452
    %v1454 = vrot.slane %v372, %v1453
    %v1455 = vlaneseq
    %v1456 = vshrl.u32 %v1455, 7
    %v1457 = vsub.s32 3, %v1456
    %v1458 = vrot.slane %v373, %v1457
    %v1459 = vlaneseq
    %v1460 = vshrl.u32 %v1459, 7
    %v1461 = vsub.s32 3, %v1460
    %v1462 = vrot.slane %v374, %v1461
    %1463 = vset.pattern.permute.xlu0 31
    %1464 = vperm.xlu0 %1463, %v52
    %v1465 = vpop.permute.xlu0 %1464
    %v1467 = vmul.f32 %v1450, %v1465
    %v1468 = vmul.f32 %v1454, %v1465
    %v1469 = vmul.f32 %v1458, %v1465
    %v1470 = vmul.f32 %v1462, %v1465
    %v1471 = vadd.f32 %v1443, %v1467
    %v1472 = vadd.f32 %v1444, %v1468
    %v1473 = vadd.f32 %v1445, %v1469
    %v1474 = vadd.f32 %v1446, %v1470
    %v1475 = vlaneseq
    %v1476 = vshrl.u32 %v1475, 7
    %v1477 = vsub.s32 3, %v1476
    %v1478 = vrot.slane %v411, %v1477
    %v1479 = vlaneseq
    %v1480 = vshrl.u32 %v1479, 7
    %v1481 = vsub.s32 3, %v1480
    %v1482 = vrot.slane %v412, %v1481
    %v1483 = vlaneseq
    %v1484 = vshrl.u32 %v1483, 7
    %v1485 = vsub.s32 3, %v1484
    %v1486 = vrot.slane %v413, %v1485
    %v1487 = vlaneseq
    %v1488 = vshrl.u32 %v1487, 7
    %v1489 = vsub.s32 3, %v1488
    %v1490 = vrot.slane %v414, %v1489
    %1491 = vset.pattern.permute.xlu0 35
    %1492 = vperm.xlu0 %1491, %v52
    %v1493 = vpop.permute.xlu0 %1492
    %v1495 = vmul.f32 %v1478, %v1493
    %v1496 = vmul.f32 %v1482, %v1493
    %v1497 = vmul.f32 %v1486, %v1493
    %v1498 = vmul.f32 %v1490, %v1493
    %v1499 = vadd.f32 %v1471, %v1495
    %v1500 = vadd.f32 %v1472, %v1496
    %v1501 = vadd.f32 %v1473, %v1497
    %v1502 = vadd.f32 %v1474, %v1498
    %v1503 = vadd.f32 %v683, %v955
    %v1504 = vadd.f32 %v684, %v956
    %v1505 = vadd.f32 %v685, %v957
    %v1506 = vadd.f32 %v686, %v958
    %v1507 = vadd.f32 %v1227, %v1499
    %v1508 = vadd.f32 %v1228, %v1500
    %v1509 = vadd.f32 %v1229, %v1501
    %v1510 = vadd.f32 %v1230, %v1502
    %v1511 = vadd.f32 %v1503, %v1507
    %v1512 = vadd.f32 %v1504, %v1508
    %v1513 = vadd.f32 %v1505, %v1509
    %v1514 = vadd.f32 %v1506, %v1510
    %1515 = vset.pattern.permute.xlu0 74
    %1516 = vperm.xlu0 %1515, %v52
    %v1517 = vpop.permute.xlu0 %1516
    %v1519 = vadd.f32 %v1511, %v1517
    %v1520 = vadd.f32 %v1512, %v1517
    %v1521 = vadd.f32 %v1513, %v1517
    %v1522 = vadd.f32 %v1514, %v1517
    %1523 = vset.pattern.permute.xlu0 75
    %1524 = vperm.xlu0 %1523, %v52
    %v1525 = vpop.permute.xlu0 %1524
    %v1527 = vmul.f32 %v1519, %v1525
    %v1528 = vmul.f32 %v1520, %v1525
    %v1529 = vmul.f32 %v1521, %v1525
    %v1530 = vmul.f32 %v1522, %v1525
    %1531 = vset.pattern.permute.xlu0 76
    %1532 = vperm.xlu0 %1531, %v52
    %v1533 = vpop.permute.xlu0 %1532
    %v1535 = vadd.f32 %v1527, %v1533
    %v1536 = vadd.f32 %v1528, %v1533
    %v1537 = vadd.f32 %v1529, %v1533
    %v1538 = vadd.f32 %v1530, %v1533
    %vm1539 = vcmp.ge.f32.partialorder %v1535, 0.0
    %vm1540 = vcmp.ge.f32.partialorder %v1536, 0.0
    %vm1541 = vcmp.ge.f32.partialorder %v1537, 0.0
    %vm1542 = vcmp.ge.f32.partialorder %v1538, 0.0
    %v1543 = vmul.f32 %v1535, 0.01
    %v1544 = vmul.f32 %v1536, 0.01
    %v1545 = vmul.f32 %v1537, 0.01
    %v1546 = vmul.f32 %v1538, 0.01
    %v1547 = vsel %vm1539, %v1535, %v1543
    %v1548 = vsel %vm1540, %v1536, %v1544
    %v1549 = vsel %vm1541, %v1537, %v1545
    %v1550 = vsel %vm1542, %v1538, %v1546
    %1551 = vrot.lane.b32.xlu0 %v1547, 17
    %v1552 = vpop.permute.xlu0 %1551
    %1553 = vrot.lane.b32.xlu0 %v1548, 17
    %v1554 = vpop.permute.xlu0 %1553
    %1555 = vrot.lane.b32.xlu0 %v1549, 17
    %v1556 = vpop.permute.xlu0 %1555
    %1557 = vrot.lane.b32.xlu0 %v1550, 17
    %v1558 = vpop.permute.xlu0 %1557
    %v1559 = vsel %vm104, %v1556, %v1558
    %v1560 = vsel %vm104, %v1554, %v1556
    %v1561 = vsel %vm104, %v1552, %v1554
    %v1562 = vsel %vm104, %v1558, %v1552
    %v1563 = vmul.f32 %v1562, %v114
    %v1564 = vmul.f32 %v1561, %v118
    %v1565 = vmul.f32 %v1560, %v122
    %v1566 = vmul.f32 %v1559, %v126
    %1567 = vrot.lane.b32.xlu0 %v1547, 16
    %v1568 = vpop.permute.xlu0 %1567
    %1569 = vrot.lane.b32.xlu0 %v1548, 16
    %v1570 = vpop.permute.xlu0 %1569
    %1571 = vrot.lane.b32.xlu0 %v1549, 16
    %v1572 = vpop.permute.xlu0 %1571
    %1573 = vrot.lane.b32.xlu0 %v1550, 16
    %v1574 = vpop.permute.xlu0 %1573
    %v1575 = vsel %vm143, %v1572, %v1574
    %v1576 = vsel %vm143, %v1570, %v1572
    %v1577 = vsel %vm143, %v1568, %v1570
    %v1578 = vsel %vm143, %v1574, %v1568
    %v1579 = vmul.f32 %v1578, %v154
    %v1580 = vmul.f32 %v1577, %v158
    %v1581 = vmul.f32 %v1576, %v162
    %v1582 = vmul.f32 %v1575, %v166
    %1583 = vrot.lane.b32.xlu0 %v1547, 15
    %v1584 = vpop.permute.xlu0 %1583
    %1585 = vrot.lane.b32.xlu0 %v1548, 15
    %v1586 = vpop.permute.xlu0 %1585
    %1587 = vrot.lane.b32.xlu0 %v1549, 15
    %v1588 = vpop.permute.xlu0 %1587
    %1589 = vrot.lane.b32.xlu0 %v1550, 15
    %v1590 = vpop.permute.xlu0 %1589
    %v1591 = vsel %vm183, %v1588, %v1590
    %v1592 = vsel %vm183, %v1586, %v1588
    %v1593 = vsel %vm183, %v1584, %v1586
    %v1594 = vsel %vm183, %v1590, %v1584
    %v1595 = vmul.f32 %v1594, %v194
    %v1596 = vmul.f32 %v1593, %v198
    %v1597 = vmul.f32 %v1592, %v202
    %v1598 = vmul.f32 %v1591, %v206
    %1599 = vrot.lane.b32.xlu0 %v1547, 1
    %v1600 = vpop.permute.xlu0 %1599
    %1601 = vrot.lane.b32.xlu0 %v1548, 1
    %v1602 = vpop.permute.xlu0 %1601
    %1603 = vrot.lane.b32.xlu0 %v1549, 1
    %v1604 = vpop.permute.xlu0 %1603
    %1605 = vrot.lane.b32.xlu0 %v1550, 1
    %v1606 = vpop.permute.xlu0 %1605
    %v1607 = vsel %vm223, %v1604, %v1606
    %v1608 = vsel %vm223, %v1602, %v1604
    %v1609 = vsel %vm223, %v1600, %v1602
    %v1610 = vsel %vm223, %v1606, %v1600
    %v1611 = vmul.f32 %v1610, %v234
    %v1612 = vmul.f32 %v1609, %v238
    %v1613 = vmul.f32 %v1608, %v242
    %v1614 = vmul.f32 %v1607, %v246
    %1615 = vrot.lane.b32.xlu0 %v1547, 127
    %v1616 = vpop.permute.xlu0 %1615
    %1617 = vrot.lane.b32.xlu0 %v1548, 127
    %v1618 = vpop.permute.xlu0 %1617
    %1619 = vrot.lane.b32.xlu0 %v1549, 127
    %v1620 = vpop.permute.xlu0 %1619
    %1621 = vrot.lane.b32.xlu0 %v1550, 127
    %v1622 = vpop.permute.xlu0 %1621
    %v1623 = vsel %vm263, %v1620, %v1622
    %v1624 = vsel %vm263, %v1618, %v1620
    %v1625 = vsel %vm263, %v1616, %v1618
    %v1626 = vsel %vm263, %v1622, %v1616
    %v1627 = vmul.f32 %v1625, %v274
    %v1628 = vmul.f32 %v1624, %v278
    %v1629 = vmul.f32 %v1623, %v282
    %v1630 = vmul.f32 %v1626, %v286
    %1631 = vrot.lane.b32.xlu0 %v1547, 113
    %v1632 = vpop.permute.xlu0 %1631
    %1633 = vrot.lane.b32.xlu0 %v1548, 113
    %v1634 = vpop.permute.xlu0 %1633
    %1635 = vrot.lane.b32.xlu0 %v1549, 113
    %v1636 = vpop.permute.xlu0 %1635
    %1637 = vrot.lane.b32.xlu0 %v1550, 113
    %v1638 = vpop.permute.xlu0 %1637
    %v1639 = vsel %vm303, %v1636, %v1638
    %v1640 = vsel %vm303, %v1634, %v1636
    %v1641 = vsel %vm303, %v1632, %v1634
    %v1642 = vsel %vm303, %v1638, %v1632
    %v1643 = vmul.f32 %v1641, %v314
    %v1644 = vmul.f32 %v1640, %v318
    %v1645 = vmul.f32 %v1639, %v322
    %v1646 = vmul.f32 %v1642, %v326
    %1647 = vrot.lane.b32.xlu0 %v1547, 112
    %v1648 = vpop.permute.xlu0 %1647
    %1649 = vrot.lane.b32.xlu0 %v1548, 112
    %v1650 = vpop.permute.xlu0 %1649
    %1651 = vrot.lane.b32.xlu0 %v1549, 112
    %v1652 = vpop.permute.xlu0 %1651
    %1653 = vrot.lane.b32.xlu0 %v1550, 112
    %v1654 = vpop.permute.xlu0 %1653
    %v1655 = vsel %vm343, %v1652, %v1654
    %v1656 = vsel %vm343, %v1650, %v1652
    %v1657 = vsel %vm343, %v1648, %v1650
    %v1658 = vsel %vm343, %v1654, %v1648
    %v1659 = vmul.f32 %v1657, %v354
    %v1660 = vmul.f32 %v1656, %v358
    %v1661 = vmul.f32 %v1655, %v362
    %v1662 = vmul.f32 %v1658, %v366
    %1663 = vrot.lane.b32.xlu0 %v1547, 111
    %v1664 = vpop.permute.xlu0 %1663
    %1665 = vrot.lane.b32.xlu0 %v1548, 111
    %v1666 = vpop.permute.xlu0 %1665
    %1667 = vrot.lane.b32.xlu0 %v1549, 111
    %v1668 = vpop.permute.xlu0 %1667
    %1669 = vrot.lane.b32.xlu0 %v1550, 111
    %v1670 = vpop.permute.xlu0 %1669
    %v1671 = vsel %vm383, %v1668, %v1670
    %v1672 = vsel %vm383, %v1666, %v1668
    %v1673 = vsel %vm383, %v1664, %v1666
    %v1674 = vsel %vm383, %v1670, %v1664
    %v1675 = vmul.f32 %v1673, %v394
    %v1676 = vmul.f32 %v1672, %v398
    %v1677 = vmul.f32 %v1671, %v402
    %v1678 = vmul.f32 %v1674, %v406
    %v1679 = vlaneseq
    %v1680 = vshrl.u32 %v1679, 7
    %v1681 = vsub.s32 0, %v1680
    %v1682 = vrot.slane %v1563, %v1681
    %v1683 = vlaneseq
    %v1684 = vshrl.u32 %v1683, 7
    %v1685 = vsub.s32 0, %v1684
    %v1686 = vrot.slane %v1564, %v1685
    %v1687 = vlaneseq
    %v1688 = vshrl.u32 %v1687, 7
    %v1689 = vsub.s32 0, %v1688
    %v1690 = vrot.slane %v1565, %v1689
    %v1691 = vlaneseq
    %v1692 = vshrl.u32 %v1691, 7
    %v1693 = vsub.s32 0, %v1692
    %v1694 = vrot.slane %v1566, %v1693
    %1695 = vset.pattern.permute.xlu0 36
    %1696 = vperm.xlu0 %1695, %v52
    %v1697 = vpop.permute.xlu0 %1696
    %v1699 = vmul.f32 %v1682, %v1697
    %v1700 = vmul.f32 %v1686, %v1697
    %v1701 = vmul.f32 %v1690, %v1697
    %v1702 = vmul.f32 %v1694, %v1697
    %v1703 = vadd.f32 %v1699, 0.0
    %v1704 = vadd.f32 %v1700, 0.0
    %v1705 = vadd.f32 %v1701, 0.0
    %v1706 = vadd.f32 %v1702, 0.0
    %v1707 = vlaneseq
    %v1708 = vshrl.u32 %v1707, 7
    %v1709 = vsub.s32 0, %v1708
    %v1710 = vrot.slane %v1579, %v1709
    %v1711 = vlaneseq
    %v1712 = vshrl.u32 %v1711, 7
    %v1713 = vsub.s32 0, %v1712
    %v1714 = vrot.slane %v1580, %v1713
    %v1715 = vlaneseq
    %v1716 = vshrl.u32 %v1715, 7
    %v1717 = vsub.s32 0, %v1716
    %v1718 = vrot.slane %v1581, %v1717
    %v1719 = vlaneseq
    %v1720 = vshrl.u32 %v1719, 7
    %v1721 = vsub.s32 0, %v1720
    %v1722 = vrot.slane %v1582, %v1721
    %1723 = vset.pattern.permute.xlu0 40
    %1724 = vperm.xlu0 %1723, %v52
    %v1725 = vpop.permute.xlu0 %1724
    %v1727 = vmul.f32 %v1710, %v1725
    %v1728 = vmul.f32 %v1714, %v1725
    %v1729 = vmul.f32 %v1718, %v1725
    %v1730 = vmul.f32 %v1722, %v1725
    %v1731 = vadd.f32 %v1703, %v1727
    %v1732 = vadd.f32 %v1704, %v1728
    %v1733 = vadd.f32 %v1705, %v1729
    %v1734 = vadd.f32 %v1706, %v1730
    %v1735 = vlaneseq
    %v1736 = vshrl.u32 %v1735, 7
    %v1737 = vsub.s32 0, %v1736
    %v1738 = vrot.slane %v1595, %v1737
    %v1739 = vlaneseq
    %v1740 = vshrl.u32 %v1739, 7
    %v1741 = vsub.s32 0, %v1740
    %v1742 = vrot.slane %v1596, %v1741
    %v1743 = vlaneseq
    %v1744 = vshrl.u32 %v1743, 7
    %v1745 = vsub.s32 0, %v1744
    %v1746 = vrot.slane %v1597, %v1745
    %v1747 = vlaneseq
    %v1748 = vshrl.u32 %v1747, 7
    %v1749 = vsub.s32 0, %v1748
    %v1750 = vrot.slane %v1598, %v1749
    %1751 = vset.pattern.permute.xlu0 44
    %1752 = vperm.xlu0 %1751, %v52
    %v1753 = vpop.permute.xlu0 %1752
    %v1755 = vmul.f32 %v1738, %v1753
    %v1756 = vmul.f32 %v1742, %v1753
    %v1757 = vmul.f32 %v1746, %v1753
    %v1758 = vmul.f32 %v1750, %v1753
    %v1759 = vadd.f32 %v1731, %v1755
    %v1760 = vadd.f32 %v1732, %v1756
    %v1761 = vadd.f32 %v1733, %v1757
    %v1762 = vadd.f32 %v1734, %v1758
    %v1763 = vlaneseq
    %v1764 = vshrl.u32 %v1763, 7
    %v1765 = vsub.s32 0, %v1764
    %v1766 = vrot.slane %v1611, %v1765
    %v1767 = vlaneseq
    %v1768 = vshrl.u32 %v1767, 7
    %v1769 = vsub.s32 0, %v1768
    %v1770 = vrot.slane %v1612, %v1769
    %v1771 = vlaneseq
    %v1772 = vshrl.u32 %v1771, 7
    %v1773 = vsub.s32 0, %v1772
    %v1774 = vrot.slane %v1613, %v1773
    %v1775 = vlaneseq
    %v1776 = vshrl.u32 %v1775, 7
    %v1777 = vsub.s32 0, %v1776
    %v1778 = vrot.slane %v1614, %v1777
    %1779 = vset.pattern.permute.xlu0 48
    %1780 = vperm.xlu0 %1779, %v52
    %v1781 = vpop.permute.xlu0 %1780
    %v1783 = vmul.f32 %v1766, %v1781
    %v1784 = vmul.f32 %v1770, %v1781
    %v1785 = vmul.f32 %v1774, %v1781
    %v1786 = vmul.f32 %v1778, %v1781
    %v1787 = vadd.f32 %v1759, %v1783
    %v1788 = vadd.f32 %v1760, %v1784
    %v1789 = vadd.f32 %v1761, %v1785
    %v1790 = vadd.f32 %v1762, %v1786
    %v1791 = vlaneseq
    %v1792 = vshrl.u32 %v1791, 7
    %v1793 = vsub.s32 0, %v1792
    %v1794 = vrot.slane %v1547, %v1793
    %v1795 = vlaneseq
    %v1796 = vshrl.u32 %v1795, 7
    %v1797 = vsub.s32 0, %v1796
    %v1798 = vrot.slane %v1548, %v1797
    %v1799 = vlaneseq
    %v1800 = vshrl.u32 %v1799, 7
    %v1801 = vsub.s32 0, %v1800
    %v1802 = vrot.slane %v1549, %v1801
    %v1803 = vlaneseq
    %v1804 = vshrl.u32 %v1803, 7
    %v1805 = vsub.s32 0, %v1804
    %v1806 = vrot.slane %v1550, %v1805
    %1807 = vset.pattern.permute.xlu0 52
    %1808 = vperm.xlu0 %1807, %v52
    %v1809 = vpop.permute.xlu0 %1808
    %v1811 = vmul.f32 %v1794, %v1809
    %v1812 = vmul.f32 %v1798, %v1809
    %v1813 = vmul.f32 %v1802, %v1809
    %v1814 = vmul.f32 %v1806, %v1809
    %v1815 = vadd.f32 %v1787, %v1811
    %v1816 = vadd.f32 %v1788, %v1812
    %v1817 = vadd.f32 %v1789, %v1813
    %v1818 = vadd.f32 %v1790, %v1814
    %v1819 = vlaneseq
    %v1820 = vshrl.u32 %v1819, 7
    %v1821 = vsub.s32 0, %v1820
    %v1822 = vrot.slane %v1627, %v1821
    %v1823 = vlaneseq
    %v1824 = vshrl.u32 %v1823, 7
    %v1825 = vsub.s32 0, %v1824
    %v1826 = vrot.slane %v1628, %v1825
    %v1827 = vlaneseq
    %v1828 = vshrl.u32 %v1827, 7
    %v1829 = vsub.s32 0, %v1828
    %v1830 = vrot.slane %v1629, %v1829
    %v1831 = vlaneseq
    %v1832 = vshrl.u32 %v1831, 7
    %v1833 = vsub.s32 0, %v1832
    %v1834 = vrot.slane %v1630, %v1833
    %1835 = vset.pattern.permute.xlu0 56
    %1836 = vperm.xlu0 %1835, %v52
    %v1837 = vpop.permute.xlu0 %1836
    %v1839 = vmul.f32 %v1822, %v1837
    %v1840 = vmul.f32 %v1826, %v1837
    %v1841 = vmul.f32 %v1830, %v1837
    %v1842 = vmul.f32 %v1834, %v1837
    %v1843 = vadd.f32 %v1815, %v1839
    %v1844 = vadd.f32 %v1816, %v1840
    %v1845 = vadd.f32 %v1817, %v1841
    %v1846 = vadd.f32 %v1818, %v1842
    %v1847 = vlaneseq
    %v1848 = vshrl.u32 %v1847, 7
    %v1849 = vsub.s32 0, %v1848
    %v1850 = vrot.slane %v1643, %v1849
    %v1851 = vlaneseq
    %v1852 = vshrl.u32 %v1851, 7
    %v1853 = vsub.s32 0, %v1852
    %v1854 = vrot.slane %v1644, %v1853
    %v1855 = vlaneseq
    %v1856 = vshrl.u32 %v1855, 7
    %v1857 = vsub.s32 0, %v1856
    %v1858 = vrot.slane %v1645, %v1857
    %v1859 = vlaneseq
    %v1860 = vshrl.u32 %v1859, 7
    %v1861 = vsub.s32 0, %v1860
    %v1862 = vrot.slane %v1646, %v1861
    %1863 = vset.pattern.permute.xlu0 60
    %1864 = vperm.xlu0 %1863, %v52
    %v1865 = vpop.permute.xlu0 %1864
    %v1867 = vmul.f32 %v1850, %v1865
    %v1868 = vmul.f32 %v1854, %v1865
    %v1869 = vmul.f32 %v1858, %v1865
    %v1870 = vmul.f32 %v1862, %v1865
    %v1871 = vadd.f32 %v1843, %v1867
    %v1872 = vadd.f32 %v1844, %v1868
    %v1873 = vadd.f32 %v1845, %v1869
    %v1874 = vadd.f32 %v1846, %v1870
    %v1875 = vlaneseq
    %v1876 = vshrl.u32 %v1875, 7
    %v1877 = vsub.s32 0, %v1876
    %v1878 = vrot.slane %v1659, %v1877
    %v1879 = vlaneseq
    %v1880 = vshrl.u32 %v1879, 7
    %v1881 = vsub.s32 0, %v1880
    %v1882 = vrot.slane %v1660, %v1881
    %v1883 = vlaneseq
    %v1884 = vshrl.u32 %v1883, 7
    %v1885 = vsub.s32 0, %v1884
    %v1886 = vrot.slane %v1661, %v1885
    %v1887 = vlaneseq
    %v1888 = vshrl.u32 %v1887, 7
    %v1889 = vsub.s32 0, %v1888
    %v1890 = vrot.slane %v1662, %v1889
    %1891 = vset.pattern.permute.xlu0 64
    %1892 = vperm.xlu0 %1891, %v52
    %v1893 = vpop.permute.xlu0 %1892
    %v1895 = vmul.f32 %v1878, %v1893
    %v1896 = vmul.f32 %v1882, %v1893
    %v1897 = vmul.f32 %v1886, %v1893
    %v1898 = vmul.f32 %v1890, %v1893
    %v1899 = vadd.f32 %v1871, %v1895
    %v1900 = vadd.f32 %v1872, %v1896
    %v1901 = vadd.f32 %v1873, %v1897
    %v1902 = vadd.f32 %v1874, %v1898
    %v1903 = vlaneseq
    %v1904 = vshrl.u32 %v1903, 7
    %v1905 = vsub.s32 0, %v1904
    %v1906 = vrot.slane %v1675, %v1905
    %v1907 = vlaneseq
    %v1908 = vshrl.u32 %v1907, 7
    %v1909 = vsub.s32 0, %v1908
    %v1910 = vrot.slane %v1676, %v1909
    %v1911 = vlaneseq
    %v1912 = vshrl.u32 %v1911, 7
    %v1913 = vsub.s32 0, %v1912
    %v1914 = vrot.slane %v1677, %v1913
    %v1915 = vlaneseq
    %v1916 = vshrl.u32 %v1915, 7
    %v1917 = vsub.s32 0, %v1916
    %v1918 = vrot.slane %v1678, %v1917
    %1919 = vset.pattern.permute.xlu0 68
    %1920 = vperm.xlu0 %1919, %v52
    %v1921 = vpop.permute.xlu0 %1920
    %v1923 = vmul.f32 %v1906, %v1921
    %v1924 = vmul.f32 %v1910, %v1921
    %v1925 = vmul.f32 %v1914, %v1921
    %v1926 = vmul.f32 %v1918, %v1921
    %v1927 = vadd.f32 %v1899, %v1923
    %v1928 = vadd.f32 %v1900, %v1924
    %v1929 = vadd.f32 %v1901, %v1925
    %v1930 = vadd.f32 %v1902, %v1926
    %v1931 = vlaneseq
    %v1932 = vshrl.u32 %v1931, 7
    %v1933 = vsub.s32 1, %v1932
    %v1934 = vrot.slane %v1563, %v1933
    %v1935 = vlaneseq
    %v1936 = vshrl.u32 %v1935, 7
    %v1937 = vsub.s32 1, %v1936
    %v1938 = vrot.slane %v1564, %v1937
    %v1939 = vlaneseq
    %v1940 = vshrl.u32 %v1939, 7
    %v1941 = vsub.s32 1, %v1940
    %v1942 = vrot.slane %v1565, %v1941
    %v1943 = vlaneseq
    %v1944 = vshrl.u32 %v1943, 7
    %v1945 = vsub.s32 1, %v1944
    %v1946 = vrot.slane %v1566, %v1945
    %1947 = vset.pattern.permute.xlu0 37
    %1948 = vperm.xlu0 %1947, %v52
    %v1949 = vpop.permute.xlu0 %1948
    %v1951 = vmul.f32 %v1934, %v1949
    %v1952 = vmul.f32 %v1938, %v1949
    %v1953 = vmul.f32 %v1942, %v1949
    %v1954 = vmul.f32 %v1946, %v1949
    %v1955 = vadd.f32 %v1951, 0.0
    %v1956 = vadd.f32 %v1952, 0.0
    %v1957 = vadd.f32 %v1953, 0.0
    %v1958 = vadd.f32 %v1954, 0.0
    %v1959 = vlaneseq
    %v1960 = vshrl.u32 %v1959, 7
    %v1961 = vsub.s32 1, %v1960
    %v1962 = vrot.slane %v1579, %v1961
    %v1963 = vlaneseq
    %v1964 = vshrl.u32 %v1963, 7
    %v1965 = vsub.s32 1, %v1964
    %v1966 = vrot.slane %v1580, %v1965
    %v1967 = vlaneseq
    %v1968 = vshrl.u32 %v1967, 7
    %v1969 = vsub.s32 1, %v1968
    %v1970 = vrot.slane %v1581, %v1969
    %v1971 = vlaneseq
    %v1972 = vshrl.u32 %v1971, 7
    %v1973 = vsub.s32 1, %v1972
    %v1974 = vrot.slane %v1582, %v1973
    %1975 = vset.pattern.permute.xlu0 41
    %1976 = vperm.xlu0 %1975, %v52
    %v1977 = vpop.permute.xlu0 %1976
    %v1979 = vmul.f32 %v1962, %v1977
    %v1980 = vmul.f32 %v1966, %v1977
    %v1981 = vmul.f32 %v1970, %v1977
    %v1982 = vmul.f32 %v1974, %v1977
    %v1983 = vadd.f32 %v1955, %v1979
    %v1984 = vadd.f32 %v1956, %v1980
    %v1985 = vadd.f32 %v1957, %v1981
    %v1986 = vadd.f32 %v1958, %v1982
    %v1987 = vlaneseq
    %v1988 = vshrl.u32 %v1987, 7
    %v1989 = vsub.s32 1, %v1988
    %v1990 = vrot.slane %v1595, %v1989
    %v1991 = vlaneseq
    %v1992 = vshrl.u32 %v1991, 7
    %v1993 = vsub.s32 1, %v1992
    %v1994 = vrot.slane %v1596, %v1993
    %v1995 = vlaneseq
    %v1996 = vshrl.u32 %v1995, 7
    %v1997 = vsub.s32 1, %v1996
    %v1998 = vrot.slane %v1597, %v1997
    %v1999 = vlaneseq
    %v2000 = vshrl.u32 %v1999, 7
    %v2001 = vsub.s32 1, %v2000
    %v2002 = vrot.slane %v1598, %v2001
    %2003 = vset.pattern.permute.xlu0 45
    %2004 = vperm.xlu0 %2003, %v52
    %v2005 = vpop.permute.xlu0 %2004
    %v2007 = vmul.f32 %v1990, %v2005
    %v2008 = vmul.f32 %v1994, %v2005
    %v2009 = vmul.f32 %v1998, %v2005
    %v2010 = vmul.f32 %v2002, %v2005
    %v2011 = vadd.f32 %v1983, %v2007
    %v2012 = vadd.f32 %v1984, %v2008
    %v2013 = vadd.f32 %v1985, %v2009
    %v2014 = vadd.f32 %v1986, %v2010
    %v2015 = vlaneseq
    %v2016 = vshrl.u32 %v2015, 7
    %v2017 = vsub.s32 1, %v2016
    %v2018 = vrot.slane %v1611, %v2017
    %v2019 = vlaneseq
    %v2020 = vshrl.u32 %v2019, 7
    %v2021 = vsub.s32 1, %v2020
    %v2022 = vrot.slane %v1612, %v2021
    %v2023 = vlaneseq
    %v2024 = vshrl.u32 %v2023, 7
    %v2025 = vsub.s32 1, %v2024
    %v2026 = vrot.slane %v1613, %v2025
    %v2027 = vlaneseq
    %v2028 = vshrl.u32 %v2027, 7
    %v2029 = vsub.s32 1, %v2028
    %v2030 = vrot.slane %v1614, %v2029
    %2031 = vset.pattern.permute.xlu0 49
    %2032 = vperm.xlu0 %2031, %v52
    %v2033 = vpop.permute.xlu0 %2032
    %v2035 = vmul.f32 %v2018, %v2033
    %v2036 = vmul.f32 %v2022, %v2033
    %v2037 = vmul.f32 %v2026, %v2033
    %v2038 = vmul.f32 %v2030, %v2033
    %v2039 = vadd.f32 %v2011, %v2035
    %v2040 = vadd.f32 %v2012, %v2036
    %v2041 = vadd.f32 %v2013, %v2037
    %v2042 = vadd.f32 %v2014, %v2038
    %v2043 = vlaneseq
    %v2044 = vshrl.u32 %v2043, 7
    %v2045 = vsub.s32 1, %v2044
    %v2046 = vrot.slane %v1547, %v2045
    %v2047 = vlaneseq
    %v2048 = vshrl.u32 %v2047, 7
    %v2049 = vsub.s32 1, %v2048
    %v2050 = vrot.slane %v1548, %v2049
    %v2051 = vlaneseq
    %v2052 = vshrl.u32 %v2051, 7
    %v2053 = vsub.s32 1, %v2052
    %v2054 = vrot.slane %v1549, %v2053
    %v2055 = vlaneseq
    %v2056 = vshrl.u32 %v2055, 7
    %v2057 = vsub.s32 1, %v2056
    %v2058 = vrot.slane %v1550, %v2057
    %2059 = vset.pattern.permute.xlu0 53
    %2060 = vperm.xlu0 %2059, %v52
    %v2061 = vpop.permute.xlu0 %2060
    %v2063 = vmul.f32 %v2046, %v2061
    %v2064 = vmul.f32 %v2050, %v2061
    %v2065 = vmul.f32 %v2054, %v2061
    %v2066 = vmul.f32 %v2058, %v2061
    %v2067 = vadd.f32 %v2039, %v2063
    %v2068 = vadd.f32 %v2040, %v2064
    %v2069 = vadd.f32 %v2041, %v2065
    %v2070 = vadd.f32 %v2042, %v2066
    %v2071 = vlaneseq
    %v2072 = vshrl.u32 %v2071, 7
    %v2073 = vsub.s32 1, %v2072
    %v2074 = vrot.slane %v1627, %v2073
    %v2075 = vlaneseq
    %v2076 = vshrl.u32 %v2075, 7
    %v2077 = vsub.s32 1, %v2076
    %v2078 = vrot.slane %v1628, %v2077
    %v2079 = vlaneseq
    %v2080 = vshrl.u32 %v2079, 7
    %v2081 = vsub.s32 1, %v2080
    %v2082 = vrot.slane %v1629, %v2081
    %v2083 = vlaneseq
    %v2084 = vshrl.u32 %v2083, 7
    %v2085 = vsub.s32 1, %v2084
    %v2086 = vrot.slane %v1630, %v2085
    %2087 = vset.pattern.permute.xlu0 57
    %2088 = vperm.xlu0 %2087, %v52
    %v2089 = vpop.permute.xlu0 %2088
    %v2091 = vmul.f32 %v2074, %v2089
    %v2092 = vmul.f32 %v2078, %v2089
    %v2093 = vmul.f32 %v2082, %v2089
    %v2094 = vmul.f32 %v2086, %v2089
    %v2095 = vadd.f32 %v2067, %v2091
    %v2096 = vadd.f32 %v2068, %v2092
    %v2097 = vadd.f32 %v2069, %v2093
    %v2098 = vadd.f32 %v2070, %v2094
    %v2099 = vlaneseq
    %v2100 = vshrl.u32 %v2099, 7
    %v2101 = vsub.s32 1, %v2100
    %v2102 = vrot.slane %v1643, %v2101
    %v2103 = vlaneseq
    %v2104 = vshrl.u32 %v2103, 7
    %v2105 = vsub.s32 1, %v2104
    %v2106 = vrot.slane %v1644, %v2105
    %v2107 = vlaneseq
    %v2108 = vshrl.u32 %v2107, 7
    %v2109 = vsub.s32 1, %v2108
    %v2110 = vrot.slane %v1645, %v2109
    %v2111 = vlaneseq
    %v2112 = vshrl.u32 %v2111, 7
    %v2113 = vsub.s32 1, %v2112
    %v2114 = vrot.slane %v1646, %v2113
    %2115 = vset.pattern.permute.xlu0 61
    %2116 = vperm.xlu0 %2115, %v52
    %v2117 = vpop.permute.xlu0 %2116
    %v2119 = vmul.f32 %v2102, %v2117
    %v2120 = vmul.f32 %v2106, %v2117
    %v2121 = vmul.f32 %v2110, %v2117
    %v2122 = vmul.f32 %v2114, %v2117
    %v2123 = vadd.f32 %v2095, %v2119
    %v2124 = vadd.f32 %v2096, %v2120
    %v2125 = vadd.f32 %v2097, %v2121
    %v2126 = vadd.f32 %v2098, %v2122
    %v2127 = vlaneseq
    %v2128 = vshrl.u32 %v2127, 7
    %v2129 = vsub.s32 1, %v2128
    %v2130 = vrot.slane %v1659, %v2129
    %v2131 = vlaneseq
    %v2132 = vshrl.u32 %v2131, 7
    %v2133 = vsub.s32 1, %v2132
    %v2134 = vrot.slane %v1660, %v2133
    %v2135 = vlaneseq
    %v2136 = vshrl.u32 %v2135, 7
    %v2137 = vsub.s32 1, %v2136
    %v2138 = vrot.slane %v1661, %v2137
    %v2139 = vlaneseq
    %v2140 = vshrl.u32 %v2139, 7
    %v2141 = vsub.s32 1, %v2140
    %v2142 = vrot.slane %v1662, %v2141
    %2143 = vset.pattern.permute.xlu0 65
    %2144 = vperm.xlu0 %2143, %v52
    %v2145 = vpop.permute.xlu0 %2144
    %v2147 = vmul.f32 %v2130, %v2145
    %v2148 = vmul.f32 %v2134, %v2145
    %v2149 = vmul.f32 %v2138, %v2145
    %v2150 = vmul.f32 %v2142, %v2145
    %v2151 = vadd.f32 %v2123, %v2147
    %v2152 = vadd.f32 %v2124, %v2148
    %v2153 = vadd.f32 %v2125, %v2149
    %v2154 = vadd.f32 %v2126, %v2150
    %v2155 = vlaneseq
    %v2156 = vshrl.u32 %v2155, 7
    %v2157 = vsub.s32 1, %v2156
    %v2158 = vrot.slane %v1675, %v2157
    %v2159 = vlaneseq
    %v2160 = vshrl.u32 %v2159, 7
    %v2161 = vsub.s32 1, %v2160
    %v2162 = vrot.slane %v1676, %v2161
    %v2163 = vlaneseq
    %v2164 = vshrl.u32 %v2163, 7
    %v2165 = vsub.s32 1, %v2164
    %v2166 = vrot.slane %v1677, %v2165
    %v2167 = vlaneseq
    %v2168 = vshrl.u32 %v2167, 7
    %v2169 = vsub.s32 1, %v2168
    %v2170 = vrot.slane %v1678, %v2169
    %2171 = vset.pattern.permute.xlu0 69
    %2172 = vperm.xlu0 %2171, %v52
    %v2173 = vpop.permute.xlu0 %2172
    %v2175 = vmul.f32 %v2158, %v2173
    %v2176 = vmul.f32 %v2162, %v2173
    %v2177 = vmul.f32 %v2166, %v2173
    %v2178 = vmul.f32 %v2170, %v2173
    %v2179 = vadd.f32 %v2151, %v2175
    %v2180 = vadd.f32 %v2152, %v2176
    %v2181 = vadd.f32 %v2153, %v2177
    %v2182 = vadd.f32 %v2154, %v2178
    %v2183 = vlaneseq
    %v2184 = vshrl.u32 %v2183, 7
    %v2185 = vsub.s32 2, %v2184
    %v2186 = vrot.slane %v1563, %v2185
    %v2187 = vlaneseq
    %v2188 = vshrl.u32 %v2187, 7
    %v2189 = vsub.s32 2, %v2188
    %v2190 = vrot.slane %v1564, %v2189
    %v2191 = vlaneseq
    %v2192 = vshrl.u32 %v2191, 7
    %v2193 = vsub.s32 2, %v2192
    %v2194 = vrot.slane %v1565, %v2193
    %v2195 = vlaneseq
    %v2196 = vshrl.u32 %v2195, 7
    %v2197 = vsub.s32 2, %v2196
    %v2198 = vrot.slane %v1566, %v2197
    %2199 = vset.pattern.permute.xlu0 38
    %2200 = vperm.xlu0 %2199, %v52
    %v2201 = vpop.permute.xlu0 %2200
    %v2203 = vmul.f32 %v2186, %v2201
    %v2204 = vmul.f32 %v2190, %v2201
    %v2205 = vmul.f32 %v2194, %v2201
    %v2206 = vmul.f32 %v2198, %v2201
    %v2207 = vadd.f32 %v2203, 0.0
    %v2208 = vadd.f32 %v2204, 0.0
    %v2209 = vadd.f32 %v2205, 0.0
    %v2210 = vadd.f32 %v2206, 0.0
    %v2211 = vlaneseq
    %v2212 = vshrl.u32 %v2211, 7
    %v2213 = vsub.s32 2, %v2212
    %v2214 = vrot.slane %v1579, %v2213
    %v2215 = vlaneseq
    %v2216 = vshrl.u32 %v2215, 7
    %v2217 = vsub.s32 2, %v2216
    %v2218 = vrot.slane %v1580, %v2217
    %v2219 = vlaneseq
    %v2220 = vshrl.u32 %v2219, 7
    %v2221 = vsub.s32 2, %v2220
    %v2222 = vrot.slane %v1581, %v2221
    %v2223 = vlaneseq
    %v2224 = vshrl.u32 %v2223, 7
    %v2225 = vsub.s32 2, %v2224
    %v2226 = vrot.slane %v1582, %v2225
    %2227 = vset.pattern.permute.xlu0 42
    %2228 = vperm.xlu0 %2227, %v52
    %v2229 = vpop.permute.xlu0 %2228
    %v2231 = vmul.f32 %v2214, %v2229
    %v2232 = vmul.f32 %v2218, %v2229
    %v2233 = vmul.f32 %v2222, %v2229
    %v2234 = vmul.f32 %v2226, %v2229
    %v2235 = vadd.f32 %v2207, %v2231
    %v2236 = vadd.f32 %v2208, %v2232
    %v2237 = vadd.f32 %v2209, %v2233
    %v2238 = vadd.f32 %v2210, %v2234
    %v2239 = vlaneseq
    %v2240 = vshrl.u32 %v2239, 7
    %v2241 = vsub.s32 2, %v2240
    %v2242 = vrot.slane %v1595, %v2241
    %v2243 = vlaneseq
    %v2244 = vshrl.u32 %v2243, 7
    %v2245 = vsub.s32 2, %v2244
    %v2246 = vrot.slane %v1596, %v2245
    %v2247 = vlaneseq
    %v2248 = vshrl.u32 %v2247, 7
    %v2249 = vsub.s32 2, %v2248
    %v2250 = vrot.slane %v1597, %v2249
    %v2251 = vlaneseq
    %v2252 = vshrl.u32 %v2251, 7
    %v2253 = vsub.s32 2, %v2252
    %v2254 = vrot.slane %v1598, %v2253
    %2255 = vset.pattern.permute.xlu0 46
    %2256 = vperm.xlu0 %2255, %v52
    %v2257 = vpop.permute.xlu0 %2256
    %v2259 = vmul.f32 %v2242, %v2257
    %v2260 = vmul.f32 %v2246, %v2257
    %v2261 = vmul.f32 %v2250, %v2257
    %v2262 = vmul.f32 %v2254, %v2257
    %v2263 = vadd.f32 %v2235, %v2259
    %v2264 = vadd.f32 %v2236, %v2260
    %v2265 = vadd.f32 %v2237, %v2261
    %v2266 = vadd.f32 %v2238, %v2262
    %v2267 = vlaneseq
    %v2268 = vshrl.u32 %v2267, 7
    %v2269 = vsub.s32 2, %v2268
    %v2270 = vrot.slane %v1611, %v2269
    %v2271 = vlaneseq
    %v2272 = vshrl.u32 %v2271, 7
    %v2273 = vsub.s32 2, %v2272
    %v2274 = vrot.slane %v1612, %v2273
    %v2275 = vlaneseq
    %v2276 = vshrl.u32 %v2275, 7
    %v2277 = vsub.s32 2, %v2276
    %v2278 = vrot.slane %v1613, %v2277
    %v2279 = vlaneseq
    %v2280 = vshrl.u32 %v2279, 7
    %v2281 = vsub.s32 2, %v2280
    %v2282 = vrot.slane %v1614, %v2281
    %2283 = vset.pattern.permute.xlu0 50
    %2284 = vperm.xlu0 %2283, %v52
    %v2285 = vpop.permute.xlu0 %2284
    %v2287 = vmul.f32 %v2270, %v2285
    %v2288 = vmul.f32 %v2274, %v2285
    %v2289 = vmul.f32 %v2278, %v2285
    %v2290 = vmul.f32 %v2282, %v2285
    %v2291 = vadd.f32 %v2263, %v2287
    %v2292 = vadd.f32 %v2264, %v2288
    %v2293 = vadd.f32 %v2265, %v2289
    %v2294 = vadd.f32 %v2266, %v2290
    %v2295 = vlaneseq
    %v2296 = vshrl.u32 %v2295, 7
    %v2297 = vsub.s32 2, %v2296
    %v2298 = vrot.slane %v1547, %v2297
    %v2299 = vlaneseq
    %v2300 = vshrl.u32 %v2299, 7
    %v2301 = vsub.s32 2, %v2300
    %v2302 = vrot.slane %v1548, %v2301
    %v2303 = vlaneseq
    %v2304 = vshrl.u32 %v2303, 7
    %v2305 = vsub.s32 2, %v2304
    %v2306 = vrot.slane %v1549, %v2305
    %v2307 = vlaneseq
    %v2308 = vshrl.u32 %v2307, 7
    %v2309 = vsub.s32 2, %v2308
    %v2310 = vrot.slane %v1550, %v2309
    %2311 = vset.pattern.permute.xlu0 54
    %2312 = vperm.xlu0 %2311, %v52
    %v2313 = vpop.permute.xlu0 %2312
    %v2315 = vmul.f32 %v2298, %v2313
    %v2316 = vmul.f32 %v2302, %v2313
    %v2317 = vmul.f32 %v2306, %v2313
    %v2318 = vmul.f32 %v2310, %v2313
    %v2319 = vadd.f32 %v2291, %v2315
    %v2320 = vadd.f32 %v2292, %v2316
    %v2321 = vadd.f32 %v2293, %v2317
    %v2322 = vadd.f32 %v2294, %v2318
    %v2323 = vlaneseq
    %v2324 = vshrl.u32 %v2323, 7
    %v2325 = vsub.s32 2, %v2324
    %v2326 = vrot.slane %v1627, %v2325
    %v2327 = vlaneseq
    %v2328 = vshrl.u32 %v2327, 7
    %v2329 = vsub.s32 2, %v2328
    %v2330 = vrot.slane %v1628, %v2329
    %v2331 = vlaneseq
    %v2332 = vshrl.u32 %v2331, 7
    %v2333 = vsub.s32 2, %v2332
    %v2334 = vrot.slane %v1629, %v2333
    %v2335 = vlaneseq
    %v2336 = vshrl.u32 %v2335, 7
    %v2337 = vsub.s32 2, %v2336
    %v2338 = vrot.slane %v1630, %v2337
    %2339 = vset.pattern.permute.xlu0 58
    %2340 = vperm.xlu0 %2339, %v52
    %v2341 = vpop.permute.xlu0 %2340
    %v2343 = vmul.f32 %v2326, %v2341
    %v2344 = vmul.f32 %v2330, %v2341
    %v2345 = vmul.f32 %v2334, %v2341
    %v2346 = vmul.f32 %v2338, %v2341
    %v2347 = vadd.f32 %v2319, %v2343
    %v2348 = vadd.f32 %v2320, %v2344
    %v2349 = vadd.f32 %v2321, %v2345
    %v2350 = vadd.f32 %v2322, %v2346
    %v2351 = vlaneseq
    %v2352 = vshrl.u32 %v2351, 7
    %v2353 = vsub.s32 2, %v2352
    %v2354 = vrot.slane %v1643, %v2353
    %v2355 = vlaneseq
    %v2356 = vshrl.u32 %v2355, 7
    %v2357 = vsub.s32 2, %v2356
    %v2358 = vrot.slane %v1644, %v2357
    %v2359 = vlaneseq
    %v2360 = vshrl.u32 %v2359, 7
    %v2361 = vsub.s32 2, %v2360
    %v2362 = vrot.slane %v1645, %v2361
    %v2363 = vlaneseq
    %v2364 = vshrl.u32 %v2363, 7
    %v2365 = vsub.s32 2, %v2364
    %v2366 = vrot.slane %v1646, %v2365
    %2367 = vset.pattern.permute.xlu0 62
    %2368 = vperm.xlu0 %2367, %v52
    %v2369 = vpop.permute.xlu0 %2368
    %v2371 = vmul.f32 %v2354, %v2369
    %v2372 = vmul.f32 %v2358, %v2369
    %v2373 = vmul.f32 %v2362, %v2369
    %v2374 = vmul.f32 %v2366, %v2369
    %v2375 = vadd.f32 %v2347, %v2371
    %v2376 = vadd.f32 %v2348, %v2372
    %v2377 = vadd.f32 %v2349, %v2373
    %v2378 = vadd.f32 %v2350, %v2374
    %v2379 = vlaneseq
    %v2380 = vshrl.u32 %v2379, 7
    %v2381 = vsub.s32 2, %v2380
    %v2382 = vrot.slane %v1659, %v2381
    %v2383 = vlaneseq
    %v2384 = vshrl.u32 %v2383, 7
    %v2385 = vsub.s32 2, %v2384
    %v2386 = vrot.slane %v1660, %v2385
    %v2387 = vlaneseq
    %v2388 = vshrl.u32 %v2387, 7
    %v2389 = vsub.s32 2, %v2388
    %v2390 = vrot.slane %v1661, %v2389
    %v2391 = vlaneseq
    %v2392 = vshrl.u32 %v2391, 7
    %v2393 = vsub.s32 2, %v2392
    %v2394 = vrot.slane %v1662, %v2393
    %2395 = vset.pattern.permute.xlu0 66
    %2396 = vperm.xlu0 %2395, %v52
    %v2397 = vpop.permute.xlu0 %2396
    %v2399 = vmul.f32 %v2382, %v2397
    %v2400 = vmul.f32 %v2386, %v2397
    %v2401 = vmul.f32 %v2390, %v2397
    %v2402 = vmul.f32 %v2394, %v2397
    %v2403 = vadd.f32 %v2375, %v2399
    %v2404 = vadd.f32 %v2376, %v2400
    %v2405 = vadd.f32 %v2377, %v2401
    %v2406 = vadd.f32 %v2378, %v2402
    %v2407 = vlaneseq
    %v2408 = vshrl.u32 %v2407, 7
    %v2409 = vsub.s32 2, %v2408
    %v2410 = vrot.slane %v1675, %v2409
    %v2411 = vlaneseq
    %v2412 = vshrl.u32 %v2411, 7
    %v2413 = vsub.s32 2, %v2412
    %v2414 = vrot.slane %v1676, %v2413
    %v2415 = vlaneseq
    %v2416 = vshrl.u32 %v2415, 7
    %v2417 = vsub.s32 2, %v2416
    %v2418 = vrot.slane %v1677, %v2417
    %v2419 = vlaneseq
    %v2420 = vshrl.u32 %v2419, 7
    %v2421 = vsub.s32 2, %v2420
    %v2422 = vrot.slane %v1678, %v2421
    %2423 = vset.pattern.permute.xlu0 70
    %2424 = vperm.xlu0 %2423, %v52
    %v2425 = vpop.permute.xlu0 %2424
    %v2427 = vmul.f32 %v2410, %v2425
    %v2428 = vmul.f32 %v2414, %v2425
    %v2429 = vmul.f32 %v2418, %v2425
    %v2430 = vmul.f32 %v2422, %v2425
    %v2431 = vadd.f32 %v2403, %v2427
    %v2432 = vadd.f32 %v2404, %v2428
    %v2433 = vadd.f32 %v2405, %v2429
    %v2434 = vadd.f32 %v2406, %v2430
    %v2435 = vlaneseq
    %v2436 = vshrl.u32 %v2435, 7
    %v2437 = vsub.s32 3, %v2436
    %v2438 = vrot.slane %v1563, %v2437
    %v2439 = vlaneseq
    %v2440 = vshrl.u32 %v2439, 7
    %v2441 = vsub.s32 3, %v2440
    %v2442 = vrot.slane %v1564, %v2441
    %v2443 = vlaneseq
    %v2444 = vshrl.u32 %v2443, 7
    %v2445 = vsub.s32 3, %v2444
    %v2446 = vrot.slane %v1565, %v2445
    %v2447 = vlaneseq
    %v2448 = vshrl.u32 %v2447, 7
    %v2449 = vsub.s32 3, %v2448
    %v2450 = vrot.slane %v1566, %v2449
    %2451 = vset.pattern.permute.xlu0 39
    %2452 = vperm.xlu0 %2451, %v52
    %v2453 = vpop.permute.xlu0 %2452
    %v2455 = vmul.f32 %v2438, %v2453
    %v2456 = vmul.f32 %v2442, %v2453
    %v2457 = vmul.f32 %v2446, %v2453
    %v2458 = vmul.f32 %v2450, %v2453
    %v2459 = vadd.f32 %v2455, 0.0
    %v2460 = vadd.f32 %v2456, 0.0
    %v2461 = vadd.f32 %v2457, 0.0
    %v2462 = vadd.f32 %v2458, 0.0
    %v2463 = vlaneseq
    %v2464 = vshrl.u32 %v2463, 7
    %v2465 = vsub.s32 3, %v2464
    %v2466 = vrot.slane %v1579, %v2465
    %v2467 = vlaneseq
    %v2468 = vshrl.u32 %v2467, 7
    %v2469 = vsub.s32 3, %v2468
    %v2470 = vrot.slane %v1580, %v2469
    %v2471 = vlaneseq
    %v2472 = vshrl.u32 %v2471, 7
    %v2473 = vsub.s32 3, %v2472
    %v2474 = vrot.slane %v1581, %v2473
    %v2475 = vlaneseq
    %v2476 = vshrl.u32 %v2475, 7
    %v2477 = vsub.s32 3, %v2476
    %v2478 = vrot.slane %v1582, %v2477
    %2479 = vset.pattern.permute.xlu0 43
    %2480 = vperm.xlu0 %2479, %v52
    %v2481 = vpop.permute.xlu0 %2480
    %v2483 = vmul.f32 %v2466, %v2481
    %v2484 = vmul.f32 %v2470, %v2481
    %v2485 = vmul.f32 %v2474, %v2481
    %v2486 = vmul.f32 %v2478, %v2481
    %v2487 = vadd.f32 %v2459, %v2483
    %v2488 = vadd.f32 %v2460, %v2484
    %v2489 = vadd.f32 %v2461, %v2485
    %v2490 = vadd.f32 %v2462, %v2486
    %v2491 = vlaneseq
    %v2492 = vshrl.u32 %v2491, 7
    %v2493 = vsub.s32 3, %v2492
    %v2494 = vrot.slane %v1595, %v2493
    %v2495 = vlaneseq
    %v2496 = vshrl.u32 %v2495, 7
    %v2497 = vsub.s32 3, %v2496
    %v2498 = vrot.slane %v1596, %v2497
    %v2499 = vlaneseq
    %v2500 = vshrl.u32 %v2499, 7
    %v2501 = vsub.s32 3, %v2500
    %v2502 = vrot.slane %v1597, %v2501
    %v2503 = vlaneseq
    %v2504 = vshrl.u32 %v2503, 7
    %v2505 = vsub.s32 3, %v2504
    %v2506 = vrot.slane %v1598, %v2505
    %2507 = vset.pattern.permute.xlu0 47
    %2508 = vperm.xlu0 %2507, %v52
    %v2509 = vpop.permute.xlu0 %2508
    %v2511 = vmul.f32 %v2494, %v2509
    %v2512 = vmul.f32 %v2498, %v2509
    %v2513 = vmul.f32 %v2502, %v2509
    %v2514 = vmul.f32 %v2506, %v2509
    %v2515 = vadd.f32 %v2487, %v2511
    %v2516 = vadd.f32 %v2488, %v2512
    %v2517 = vadd.f32 %v2489, %v2513
    %v2518 = vadd.f32 %v2490, %v2514
    %v2519 = vlaneseq
    %v2520 = vshrl.u32 %v2519, 7
    %v2521 = vsub.s32 3, %v2520
    %v2522 = vrot.slane %v1611, %v2521
    %v2523 = vlaneseq
    %v2524 = vshrl.u32 %v2523, 7
    %v2525 = vsub.s32 3, %v2524
    %v2526 = vrot.slane %v1612, %v2525
    %v2527 = vlaneseq
    %v2528 = vshrl.u32 %v2527, 7
    %v2529 = vsub.s32 3, %v2528
    %v2530 = vrot.slane %v1613, %v2529
    %v2531 = vlaneseq
    %v2532 = vshrl.u32 %v2531, 7
    %v2533 = vsub.s32 3, %v2532
    %v2534 = vrot.slane %v1614, %v2533
    %2535 = vset.pattern.permute.xlu0 51
    %2536 = vperm.xlu0 %2535, %v52
    %v2537 = vpop.permute.xlu0 %2536
    %v2539 = vmul.f32 %v2522, %v2537
    %v2540 = vmul.f32 %v2526, %v2537
    %v2541 = vmul.f32 %v2530, %v2537
    %v2542 = vmul.f32 %v2534, %v2537
    %v2543 = vadd.f32 %v2515, %v2539
    %v2544 = vadd.f32 %v2516, %v2540
    %v2545 = vadd.f32 %v2517, %v2541
    %v2546 = vadd.f32 %v2518, %v2542
    %v2547 = vlaneseq
    %v2548 = vshrl.u32 %v2547, 7
    %v2549 = vsub.s32 3, %v2548
    %v2550 = vrot.slane %v1547, %v2549
    %v2551 = vlaneseq
    %v2552 = vshrl.u32 %v2551, 7
    %v2553 = vsub.s32 3, %v2552
    %v2554 = vrot.slane %v1548, %v2553
    %v2555 = vlaneseq
    %v2556 = vshrl.u32 %v2555, 7
    %v2557 = vsub.s32 3, %v2556
    %v2558 = vrot.slane %v1549, %v2557
    %v2559 = vlaneseq
    %v2560 = vshrl.u32 %v2559, 7
    %v2561 = vsub.s32 3, %v2560
    %v2562 = vrot.slane %v1550, %v2561
    %2563 = vset.pattern.permute.xlu0 55
    %2564 = vperm.xlu0 %2563, %v52
    %v2565 = vpop.permute.xlu0 %2564
    %v2567 = vmul.f32 %v2550, %v2565
    %v2568 = vmul.f32 %v2554, %v2565
    %v2569 = vmul.f32 %v2558, %v2565
    %v2570 = vmul.f32 %v2562, %v2565
    %v2571 = vadd.f32 %v2543, %v2567
    %v2572 = vadd.f32 %v2544, %v2568
    %v2573 = vadd.f32 %v2545, %v2569
    %v2574 = vadd.f32 %v2546, %v2570
    %v2575 = vlaneseq
    %v2576 = vshrl.u32 %v2575, 7
    %v2577 = vsub.s32 3, %v2576
    %v2578 = vrot.slane %v1627, %v2577
    %v2579 = vlaneseq
    %v2580 = vshrl.u32 %v2579, 7
    %v2581 = vsub.s32 3, %v2580
    %v2582 = vrot.slane %v1628, %v2581
    %v2583 = vlaneseq
    %v2584 = vshrl.u32 %v2583, 7
    %v2585 = vsub.s32 3, %v2584
    %v2586 = vrot.slane %v1629, %v2585
    %v2587 = vlaneseq
    %v2588 = vshrl.u32 %v2587, 7
    %v2589 = vsub.s32 3, %v2588
    %v2590 = vrot.slane %v1630, %v2589
    %2591 = vset.pattern.permute.xlu0 59
    %2592 = vperm.xlu0 %2591, %v52
    %v2593 = vpop.permute.xlu0 %2592
    %v2595 = vmul.f32 %v2578, %v2593
    %v2596 = vmul.f32 %v2582, %v2593
    %v2597 = vmul.f32 %v2586, %v2593
    %v2598 = vmul.f32 %v2590, %v2593
    %v2599 = vadd.f32 %v2571, %v2595
    %v2600 = vadd.f32 %v2572, %v2596
    %v2601 = vadd.f32 %v2573, %v2597
    %v2602 = vadd.f32 %v2574, %v2598
    %v2603 = vlaneseq
    %v2604 = vshrl.u32 %v2603, 7
    %v2605 = vsub.s32 3, %v2604
    %v2606 = vrot.slane %v1643, %v2605
    %v2607 = vlaneseq
    %v2608 = vshrl.u32 %v2607, 7
    %v2609 = vsub.s32 3, %v2608
    %v2610 = vrot.slane %v1644, %v2609
    %v2611 = vlaneseq
    %v2612 = vshrl.u32 %v2611, 7
    %v2613 = vsub.s32 3, %v2612
    %v2614 = vrot.slane %v1645, %v2613
    %v2615 = vlaneseq
    %v2616 = vshrl.u32 %v2615, 7
    %v2617 = vsub.s32 3, %v2616
    %v2618 = vrot.slane %v1646, %v2617
    %2619 = vset.pattern.permute.xlu0 63
    %2620 = vperm.xlu0 %2619, %v52
    %v2621 = vpop.permute.xlu0 %2620
    %v2623 = vmul.f32 %v2606, %v2621
    %v2624 = vmul.f32 %v2610, %v2621
    %v2625 = vmul.f32 %v2614, %v2621
    %v2626 = vmul.f32 %v2618, %v2621
    %v2627 = vadd.f32 %v2599, %v2623
    %v2628 = vadd.f32 %v2600, %v2624
    %v2629 = vadd.f32 %v2601, %v2625
    %v2630 = vadd.f32 %v2602, %v2626
    %v2631 = vlaneseq
    %v2632 = vshrl.u32 %v2631, 7
    %v2633 = vsub.s32 3, %v2632
    %v2634 = vrot.slane %v1659, %v2633
    %v2635 = vlaneseq
    %v2636 = vshrl.u32 %v2635, 7
    %v2637 = vsub.s32 3, %v2636
    %v2638 = vrot.slane %v1660, %v2637
    %v2639 = vlaneseq
    %v2640 = vshrl.u32 %v2639, 7
    %v2641 = vsub.s32 3, %v2640
    %v2642 = vrot.slane %v1661, %v2641
    %v2643 = vlaneseq
    %v2644 = vshrl.u32 %v2643, 7
    %v2645 = vsub.s32 3, %v2644
    %v2646 = vrot.slane %v1662, %v2645
    %2647 = vset.pattern.permute.xlu0 67
    %2648 = vperm.xlu0 %2647, %v52
    %v2649 = vpop.permute.xlu0 %2648
    %v2651 = vmul.f32 %v2634, %v2649
    %v2652 = vmul.f32 %v2638, %v2649
    %v2653 = vmul.f32 %v2642, %v2649
    %v2654 = vmul.f32 %v2646, %v2649
    %v2655 = vadd.f32 %v2627, %v2651
    %v2656 = vadd.f32 %v2628, %v2652
    %v2657 = vadd.f32 %v2629, %v2653
    %v2658 = vadd.f32 %v2630, %v2654
    %v2659 = vlaneseq
    %v2660 = vshrl.u32 %v2659, 7
    %v2661 = vsub.s32 3, %v2660
    %v2662 = vrot.slane %v1675, %v2661
    %v2663 = vlaneseq
    %v2664 = vshrl.u32 %v2663, 7
    %v2665 = vsub.s32 3, %v2664
    %v2666 = vrot.slane %v1676, %v2665
    %v2667 = vlaneseq
    %v2668 = vshrl.u32 %v2667, 7
    %v2669 = vsub.s32 3, %v2668
    %v2670 = vrot.slane %v1677, %v2669
    %v2671 = vlaneseq
    %v2672 = vshrl.u32 %v2671, 7
    %v2673 = vsub.s32 3, %v2672
    %v2674 = vrot.slane %v1678, %v2673
    %2675 = vset.pattern.permute.xlu0 71
    %2676 = vperm.xlu0 %2675, %v52
    %v2677 = vpop.permute.xlu0 %2676
    %v2679 = vmul.f32 %v2662, %v2677
    %v2680 = vmul.f32 %v2666, %v2677
    %v2681 = vmul.f32 %v2670, %v2677
    %v2682 = vmul.f32 %v2674, %v2677
    %v2683 = vadd.f32 %v2655, %v2679
    %v2684 = vadd.f32 %v2656, %v2680
    %v2685 = vadd.f32 %v2657, %v2681
    %v2686 = vadd.f32 %v2658, %v2682
    %v2687 = vadd.f32 %v1927, %v2179
    %v2688 = vadd.f32 %v1928, %v2180
    %v2689 = vadd.f32 %v1929, %v2181
    %v2690 = vadd.f32 %v1930, %v2182
    %v2691 = vadd.f32 %v2431, %v2683
    %v2692 = vadd.f32 %v2432, %v2684
    %v2693 = vadd.f32 %v2433, %v2685
    %v2694 = vadd.f32 %v2434, %v2686
    %v2695 = vadd.f32 %v2687, %v2691
    %v2696 = vadd.f32 %v2688, %v2692
    %v2697 = vadd.f32 %v2689, %v2693
    %v2698 = vadd.f32 %v2690, %v2694
    %2699 = vset.pattern.permute.xlu0 77
    %2700 = vperm.xlu0 %2699, %v52
    %v2701 = vpop.permute.xlu0 %2700
    %v2703 = vadd.f32 %v2695, %v2701
    %v2704 = vadd.f32 %v2696, %v2701
    %v2705 = vadd.f32 %v2697, %v2701
    %v2706 = vadd.f32 %v2698, %v2701
    %v2711 = vcombine.low %v2703, %v2704
    %v2712 = vcombine.low %v2705, %v2706
    %2715 = vst [vmem:[#allocation8] sm:$0xff] %v2711
    %2716 = vst [vmem:[#allocation8 + $0x8] sm:$0xff] %v2712
    // Predicated region
    $region26: #{tpu_custom_call.1} parent=1 // pred_check
      _
    $region27: #{tpu_custom_call.1} parent=1 // pred_check_branch
      %2718 = sbr.rel (0) target = $region29
    $region28: #{tpu_custom_call.1} parent=1 // pred_region
      %s2720 = ssub.s32 256, 256
      %2721 = vsyncadd [#allocation4], %s2720
      %s2723 = sshll.u32 [#allocation8], 4
      %s2724 = int_to_ptr.vmem [resolvable:$true] %s2723
      %2726 = dma.vmem_to_hbm [thread:$0]  %s2724, 256, %s3, [#allocation4]
    $region29: #{tpu_custom_call.1} parent=1 // pred_fallthru
      _
    // Predicated region
    $region30: #{tpu_custom_call.1} parent=1 // pred_check
      _
    $region31: #{tpu_custom_call.1} parent=1 // pred_check_branch
      %2728 = sbr.rel (0) target = $region33
    $region32: #{tpu_custom_call.1} parent=1 // pred_region
      %2729 = dma.done [#allocation4], 256
    $region33: #{tpu_custom_call.1} parent=1 // pred_fallthru
      _
    %2730 = vsyncpa [#allocation3], 1
    %2731 = vsyncpa [#allocation6], 1
    %2732 = vsyncpa [#allocation4], 1

</llo_original>
